<compile_context>
chip_gen: v7x
topology: tpu7x:2x2x1
jax: 0.10.0
libtpu: 0.0.40
codegen_flags: <defaults>
</compile_context>

<pallas_src>
import math

import jax
import jax.numpy as jnp
import numpy as np
from jax.experimental import pallas as pl
from jax.experimental.pallas import tpu as pltpu


def gaussian_1d(window_size: int, sigma: float) -> np.ndarray:
    g = np.array(
        [math.exp(-((x - window_size // 2) ** 2) / float(2 * sigma ** 2))
         for x in range(window_size)],
        dtype=np.float64,
    )
    return g / g.sum()


def banded_gauss_matrix(n: int, gauss: np.ndarray, dtype=np.float32) -> np.ndarray:
    """M[a, b] = g[b - a + pad] inside the band, else 0.

    Y = M @ X (or X @ M) reproduces the 1-D Gaussian cross-correlation with
    zero padding of pad = win//2 on both sides (clipped boundary taps).
    """
    win = int(gauss.shape[0])
    pad = win // 2
    m = np.zeros((n, n), dtype=np.float64)
    for a in range(n):
        for b in range(max(0, a - pad), min(n, a + pad + 1)):
            m[a, b] = gauss[b - a + pad]
    return m.astype(dtype)


def _vmem_limit_bytes() -> int:
    """Chip-aware VMEM limit: ~48 MiB on v7x (64 MiB/TC), ~96 MiB on v5e/v6e."""
    try:
        cap = int(pltpu.get_tpu_info().vmem_capacity_bytes)
    except Exception:
        cap = 64 * 1024 * 1024  # conservative (v7x-safe) fallback
    return min((cap * 3) // 4, 96 * 1024 * 1024)


def _choose_batch(nc: int, h: int, w: int, itemsize: int, budget: int) -> int:
    """Largest divisor of nc whose per-step working set fits the budget,
    keeping >= 2 grid blocks when possible (v7x has 2 TensorCores)."""
    per_slice = (
        24 * h * w * 4            # f32 intermediates (fields, stage, conv results, map)
        + 2 * 2 * h * w * itemsize  # double-buffered input blocks (x1, x2)
        + (h * h + w * w) * 4       # per-slice share of the banded matrices
    )
    b_mem = max(1, budget // per_slice)
    b_cap = int(min(b_mem, nc))
    if nc >= 2:
        b_cap = min(b_cap, max(1, nc // 2))   # keep >= 2 grid blocks for megacore
    for b in range(max(1, b_cap), 0, -1):
        if nc % b == 0:
            return b
    return 1


def _make_ssim_kernel(B: int, C1: float, C2: float):
    f32 = jnp.float32

    def kernel(x1_ref, x2_ref, ah_ref, av_ref, out_ref):
        x1 = x1_ref[...].astype(f32)          # (B, H, W)
        x2 = x2_ref[...].astype(f32)
        ah = ah_ref[...]                      # (B, W, W) banded Gaussian (lane pass)
        av = av_ref[...]                      # (B, H, H) banded Gaussian (sublane pass)

        def gconv(f):
            # Horizontal (W/lane) pass then vertical (H/sublane) pass, both MXU.
            h = jnp.einsum('bhw,bwj->bhj', f, ah, preferred_element_type=f32)
            return jnp.einsum('bir,brj->bij', av, h, preferred_element_type=f32)

        mu1 = gconv(x1)
        mu2 = gconv(x2)
        e11 = gconv(x1 * x1)
        e22 = gconv(x2 * x2)
        e12 = gconv(x1 * x2)

        mu1_sq = mu1 * mu1
        mu2_sq = mu2 * mu2
        mu1_mu2 = mu1 * mu2
        sigma1_sq = e11 - mu1_sq
        sigma2_sq = e22 - mu2_sq
        sigma12 = e12 - mu1_mu2

        num = (2.0 * mu1_mu2 + C1) * (2.0 * sigma12 + C2)
        den = (mu1_sq + mu2_sq + C1) * (sigma1_sq + sigma2_sq + C2)
        ssim_map = num / den                                    # (B, H, W)

        # Per-column (per-slice) sums; reduce over H only, final W-sum is glue.
        col = jnp.sum(ssim_map, axis=1)                         # (B, W)
        out_ref[...] = col[None, :, :]                          # (1, B, W)

    return kernel


def ssim_pallas(img1, img2, window_size: int = 11, size_average: bool = True):
    """SSIM matching the PyTorch module's forward (default size_average=True)."""
    assert img1.shape == img2.shape and img1.ndim == 4
    N, C, H, W = img1.shape
    C1 = 0.01 ** 2
    C2 = 0.03 ** 2

    gauss = gaussian_1d(window_size, 1.5)

    # DMA the native dtype (f32/bf16) and cast to f32 inside the kernel.
    if img1.dtype not in (jnp.dtype(jnp.float32), jnp.dtype(jnp.bfloat16)):
        img1 = img1.astype(jnp.float32)
        img2 = img2.astype(jnp.float32)

    NC = N * C
    x1 = img1.reshape(NC, H, W)
    x2 = img2.reshape(NC, H, W)

    vmem_limit = _vmem_limit_bytes()
    B = _choose_batch(NC, H, W, x1.dtype.itemsize, vmem_limit // 2)
    G = NC // B

    # Banded Gaussian matrices (zero padding baked into the clipped band),
    # pre-broadcast over the slice batch for the batched MXU einsums.
    ah = jnp.asarray(np.tile(banded_gauss_matrix(W, gauss)[None], (B, 1, 1)))
    av = jnp.asarray(np.tile(banded_gauss_matrix(H, gauss)[None], (B, 1, 1)))

    kernel = _make_ssim_kernel(B, C1, C2)

    col_sums = pl.pallas_call(
        kernel,
        out_shape=jax.ShapeDtypeStruct((G, B, W), jnp.float32),
        grid_spec=pltpu.PrefetchScalarGridSpec(
            num_scalar_prefetch=0,
            grid=(G,),
            in_specs=[
                pl.BlockSpec((B, H, W), lambda i: (i, 0, 0)),
                pl.BlockSpec((B, H, W), lambda i: (i, 0, 0)),
                pl.BlockSpec((B, W, W), lambda i: (0, 0, 0)),   # fetched once
                pl.BlockSpec((B, H, H), lambda i: (0, 0, 0)),   # fetched once
            ],
            out_specs=pl.BlockSpec((1, B, W), lambda i: (i, 0, 0)),
        ),
        compiler_params=pltpu.CompilerParams(
            dimension_semantics=("parallel",),
            vmem_limit_bytes=vmem_limit,
        ),
    )(x1, x2, ah, av)

    # (G, B, W) per-column sums -> per-slice sums -> SSIM means (plain JAX glue)
    per_slice = col_sums.sum(axis=-1).reshape(N, C)
    if size_average:
        return per_slice.sum() / (N * C * H * W)
    else:
        return per_slice.sum(axis=1) / (C * H * W)


def ssim_reference_np(img1, img2, window_size: int = 11, size_average: bool = True):
    """Exact float64 numpy reference (separable Gaussian, zero padding)."""
    x1 = np.asarray(img1, dtype=np.float64)
    x2 = np.asarray(img2, dtype=np.float64)
    N, C, H, W = x1.shape
    g = gaussian_1d(window_size, 1.5)
    av = banded_gauss_matrix(H, g, dtype=np.float64)   # (H, H)
    ah = banded_gauss_matrix(W, g, dtype=np.float64)   # (W, W)

    def conv(x):
        y = np.einsum('ir,ncrw->nciw', av, x)
        return np.einsum('nchw,wj->nchj', y, ah)

    mu1, mu2 = conv(x1), conv(x2)
    mu1_sq, mu2_sq, mu1_mu2 = mu1 ** 2, mu2 ** 2, mu1 * mu2
    s1 = conv(x1 * x1) - mu1_sq
    s2 = conv(x2 * x2) - mu2_sq
    s12 = conv(x1 * x2) - mu1_mu2
    C1, C2 = 0.01 ** 2, 0.03 ** 2
    m = (2 * mu1_mu2 + C1) * (2 * s12 + C2) / ((mu1_sq + mu2_sq + C1) * (s1 + s2 + C2))
    if size_average:
        return m.mean()
    return m.mean(axis=(1, 2, 3))


if __name__ == "__main__":
    key = jax.random.PRNGKey(0)
    k1, k2 = jax.random.split(key)
    N, C, H, W = 2, 4, 16, 16
    img1 = jax.random.uniform(k1, (N, C, H, W), dtype=jnp.float32)
    noise = jax.random.uniform(k2, (N, C, H, W), dtype=jnp.float32)
    img2 = 0.75 * img1 + 0.25 * noise   # correlated pair -> representative SSIM

    out = ssim_pallas(img1, img2, window_size=11, size_average=True)
    out = jax.block_until_ready(out)

    ref = ssim_reference_np(np.asarray(img1), np.asarray(img2), 11, True)
    np.testing.assert_allclose(np.asarray(out), ref, rtol=1e-3, atol=1e-5)

    print("KERNEL_OK")
</pallas_src>

<mosaic_0001>
module attributes {stable_mosaic.version = 11 : i64} {
  func.func @kernel(%arg0: i32, %arg1: memref<4x16x16xf32, #tpu.memory_space<vmem>>, %arg2: memref<4x16x16xf32, #tpu.memory_space<vmem>>, %arg3: memref<4x16x16xf32, #tpu.memory_space<vmem>>, %arg4: memref<4x16x16xf32, #tpu.memory_space<vmem>>, %arg5: memref<1x4x16xf32, #tpu.memory_space<vmem>>) attributes {dimension_semantics = [#tpu.dimension_semantics<parallel>], iteration_bounds = array<i64: 2>, scalar_prefetch = 0 : i64, scratch_operands = 0 : i64, tpu.core_type = #tpu.core_type<tc>, window_params = [{transform_indices = @transform_0, window_bounds = array<i64: 4, 16, 16>}, {transform_indices = @transform_1, window_bounds = array<i64: 4, 16, 16>}, {pipeline_mode = #tpu.pipeline_mode<synchronous>, transform_indices = @transform_2, window_bounds = array<i64: 4, 16, 16>}, {pipeline_mode = #tpu.pipeline_mode<synchronous>, transform_indices = @transform_3, window_bounds = array<i64: 4, 16, 16>}, {transform_indices = @transform_4, window_bounds = array<i64: 1, 4, 16>}]} {
    %c0 = arith.constant 0 : index
    %c0_0 = arith.constant 0 : index
    %c0_1 = arith.constant 0 : index
    %0 = vector.load %arg1[%c0, %c0_0, %c0_1] : memref<4x16x16xf32, #tpu.memory_space<vmem>>, vector<4x16x16xf32>
    %c0_2 = arith.constant 0 : index
    %c0_3 = arith.constant 0 : index
    %c0_4 = arith.constant 0 : index
    %1 = vector.load %arg2[%c0_2, %c0_3, %c0_4] : memref<4x16x16xf32, #tpu.memory_space<vmem>>, vector<4x16x16xf32>
    %c0_5 = arith.constant 0 : index
    %c0_6 = arith.constant 0 : index
    %c0_7 = arith.constant 0 : index
    %2 = vector.load %arg3[%c0_5, %c0_6, %c0_7] : memref<4x16x16xf32, #tpu.memory_space<vmem>>, vector<4x16x16xf32>
    %c0_8 = arith.constant 0 : index
    %c0_9 = arith.constant 0 : index
    %c0_10 = arith.constant 0 : index
    %3 = vector.load %arg4[%c0_8, %c0_9, %c0_10] : memref<4x16x16xf32, #tpu.memory_space<vmem>>, vector<4x16x16xf32>
    "tpu.trace_start"() <{level = 10 : i32, message = "bhw,bwj->bhj"}> : () -> ()
    %cst = arith.constant dense<0.000000e+00> : vector<4x16x16xf32>
    %4 = tpu.matmul %0, %2, %cst {dimension_numbers = #tpu.dot_dimension_numbers<[2], [1], [1], [2], [0, 0, 0, 1, 1, 2], [0], [0]>} : vector<4x16x16xf32>, vector<4x16x16xf32>, vector<4x16x16xf32> -> vector<4x16x16xf32>
    "tpu.trace_stop"() : () -> ()
    "tpu.trace_start"() <{level = 10 : i32, message = "bir,brj->bij"}> : () -> ()
    %cst_11 = arith.constant dense<0.000000e+00> : vector<4x16x16xf32>
    %5 = tpu.matmul %3, %4, %cst_11 {dimension_numbers = #tpu.dot_dimension_numbers<[2], [1], [1], [2], [0, 0, 0, 1, 1, 2], [0], [0]>} : vector<4x16x16xf32>, vector<4x16x16xf32>, vector<4x16x16xf32> -> vector<4x16x16xf32>
    "tpu.trace_stop"() : () -> ()
    "tpu.trace_start"() <{level = 10 : i32, message = "bhw,bwj->bhj"}> : () -> ()
    %cst_12 = arith.constant dense<0.000000e+00> : vector<4x16x16xf32>
    %6 = tpu.matmul %1, %2, %cst_12 {dimension_numbers = #tpu.dot_dimension_numbers<[2], [1], [1], [2], [0, 0, 0, 1, 1, 2], [0], [0]>} : vector<4x16x16xf32>, vector<4x16x16xf32>, vector<4x16x16xf32> -> vector<4x16x16xf32>
    "tpu.trace_stop"() : () -> ()
    "tpu.trace_start"() <{level = 10 : i32, message = "bir,brj->bij"}> : () -> ()
    %cst_13 = arith.constant dense<0.000000e+00> : vector<4x16x16xf32>
    %7 = tpu.matmul %3, %6, %cst_13 {dimension_numbers = #tpu.dot_dimension_numbers<[2], [1], [1], [2], [0, 0, 0, 1, 1, 2], [0], [0]>} : vector<4x16x16xf32>, vector<4x16x16xf32>, vector<4x16x16xf32> -> vector<4x16x16xf32>
    "tpu.trace_stop"() : () -> ()
    %8 = arith.mulf %0, %0 : vector<4x16x16xf32>
    "tpu.trace_start"() <{level = 10 : i32, message = "bhw,bwj->bhj"}> : () -> ()
    %cst_14 = arith.constant dense<0.000000e+00> : vector<4x16x16xf32>
    %9 = tpu.matmul %8, %2, %cst_14 {dimension_numbers = #tpu.dot_dimension_numbers<[2], [1], [1], [2], [0, 0, 0, 1, 1, 2], [0], [0]>} : vector<4x16x16xf32>, vector<4x16x16xf32>, vector<4x16x16xf32> -> vector<4x16x16xf32>
    "tpu.trace_stop"() : () -> ()
    "tpu.trace_start"() <{level = 10 : i32, message = "bir,brj->bij"}> : () -> ()
    %cst_15 = arith.constant dense<0.000000e+00> : vector<4x16x16xf32>
    %10 = tpu.matmul %3, %9, %cst_15 {dimension_numbers = #tpu.dot_dimension_numbers<[2], [1], [1], [2], [0, 0, 0, 1, 1, 2], [0], [0]>} : vector<4x16x16xf32>, vector<4x16x16xf32>, vector<4x16x16xf32> -> vector<4x16x16xf32>
    "tpu.trace_stop"() : () -> ()
    %11 = arith.mulf %1, %1 : vector<4x16x16xf32>
    "tpu.trace_start"() <{level = 10 : i32, message = "bhw,bwj->bhj"}> : () -> ()
    %cst_16 = arith.constant dense<0.000000e+00> : vector<4x16x16xf32>
    %12 = tpu.matmul %11, %2, %cst_16 {dimension_numbers = #tpu.dot_dimension_numbers<[2], [1], [1], [2], [0, 0, 0, 1, 1, 2], [0], [0]>} : vector<4x16x16xf32>, vector<4x16x16xf32>, vector<4x16x16xf32> -> vector<4x16x16xf32>
    "tpu.trace_stop"() : () -> ()
    "tpu.trace_start"() <{level = 10 : i32, message = "bir,brj->bij"}> : () -> ()
    %cst_17 = arith.constant dense<0.000000e+00> : vector<4x16x16xf32>
    %13 = tpu.matmul %3, %12, %cst_17 {dimension_numbers = #tpu.dot_dimension_numbers<[2], [1], [1], [2], [0, 0, 0, 1, 1, 2], [0], [0]>} : vector<4x16x16xf32>, vector<4x16x16xf32>, vector<4x16x16xf32> -> vector<4x16x16xf32>
    "tpu.trace_stop"() : () -> ()
    %14 = arith.mulf %0, %1 : vector<4x16x16xf32>
    "tpu.trace_start"() <{level = 10 : i32, message = "bhw,bwj->bhj"}> : () -> ()
    %cst_18 = arith.constant dense<0.000000e+00> : vector<4x16x16xf32>
    %15 = tpu.matmul %14, %2, %cst_18 {dimension_numbers = #tpu.dot_dimension_numbers<[2], [1], [1], [2], [0, 0, 0, 1, 1, 2], [0], [0]>} : vector<4x16x16xf32>, vector<4x16x16xf32>, vector<4x16x16xf32> -> vector<4x16x16xf32>
    "tpu.trace_stop"() : () -> ()
    "tpu.trace_start"() <{level = 10 : i32, message = "bir,brj->bij"}> : () -> ()
    %cst_19 = arith.constant dense<0.000000e+00> : vector<4x16x16xf32>
    %16 = tpu.matmul %3, %15, %cst_19 {dimension_numbers = #tpu.dot_dimension_numbers<[2], [1], [1], [2], [0, 0, 0, 1, 1, 2], [0], [0]>} : vector<4x16x16xf32>, vector<4x16x16xf32>, vector<4x16x16xf32> -> vector<4x16x16xf32>
    "tpu.trace_stop"() : () -> ()
    %17 = arith.mulf %5, %5 : vector<4x16x16xf32>
    %18 = arith.mulf %7, %7 : vector<4x16x16xf32>
    %19 = arith.mulf %5, %7 : vector<4x16x16xf32>
    %20 = arith.subf %10, %17 : vector<4x16x16xf32>
    %21 = arith.subf %13, %18 : vector<4x16x16xf32>
    %22 = arith.subf %16, %19 : vector<4x16x16xf32>
    %cst_20 = arith.constant 2.000000e+00 : f32
    %23 = vector.broadcast %cst_20 : f32 to vector<4x16x16xf32>
    %24 = arith.mulf %23, %19 : vector<4x16x16xf32>
    %cst_21 = arith.constant 9.99999974E-5 : f32
    %25 = vector.broadcast %cst_21 : f32 to vector<4x16x16xf32>
    %26 = arith.addf %24, %25 : vector<4x16x16xf32>
    %cst_22 = arith.constant 2.000000e+00 : f32
    %27 = vector.broadcast %cst_22 : f32 to vector<4x16x16xf32>
    %28 = arith.mulf %27, %22 : vector<4x16x16xf32>
    %cst_23 = arith.constant 8.99999984E-4 : f32
    %29 = vector.broadcast %cst_23 : f32 to vector<4x16x16xf32>
    %30 = arith.addf %28, %29 : vector<4x16x16xf32>
    %31 = arith.mulf %26, %30 : vector<4x16x16xf32>
    %32 = arith.addf %17, %18 : vector<4x16x16xf32>
    %cst_24 = arith.constant 9.99999974E-5 : f32
    %33 = vector.broadcast %cst_24 : f32 to vector<4x16x16xf32>
    %34 = arith.addf %32, %33 : vector<4x16x16xf32>
    %35 = arith.addf %20, %21 : vector<4x16x16xf32>
    %cst_25 = arith.constant 8.99999984E-4 : f32
    %36 = vector.broadcast %cst_25 : f32 to vector<4x16x16xf32>
    %37 = arith.addf %35, %36 : vector<4x16x16xf32>
    %38 = arith.mulf %34, %37 : vector<4x16x16xf32>
    %39 = arith.divf %31, %38 : vector<4x16x16xf32>
    %cst_26 = arith.constant dense<0.000000e+00> : vector<4x16xf32>
    %40 = vector.multi_reduction <add>, %39, %cst_26 [1] : vector<4x16x16xf32> to vector<4x16xf32>
    %41 = vector.shape_cast %40 : vector<4x16xf32> to vector<1x4x16xf32>
    %c0_27 = arith.constant 0 : index
    %c0_28 = arith.constant 0 : index
    %c0_29 = arith.constant 0 : index
    %42 = vector.load %arg5[%c0_27, %c0_28, %c0_29] : memref<1x4x16xf32, #tpu.memory_space<vmem>>, vector<1x4x16xf32>
    tpu.vector_store %arg5[%c0_27, %c0_28, %c0_29], %41 {strides = array<i32>} : memref<1x4x16xf32, #tpu.memory_space<vmem>>, vector<1x4x16xf32>,
    return
  }
  func.func @transform_0(%arg0: i32) -> (i32, i32, i32) {
    %c0_i32 = arith.constant 0 : i32
    %c0_i32_0 = arith.constant 0 : i32
    %c0_i32_1 = arith.constant 0 : i32
    return %arg0, %c0_i32, %c0_i32_0 : i32, i32, i32
  }
  func.func @transform_1(%arg0: i32) -> (i32, i32, i32) {
    %c0_i32 = arith.constant 0 : i32
    %c0_i32_0 = arith.constant 0 : i32
    %c0_i32_1 = arith.constant 0 : i32
    return %arg0, %c0_i32, %c0_i32_0 : i32, i32, i32
  }
  func.func @transform_2(%arg0: i32) -> (i32, i32, i32) {
    %c0_i32 = arith.constant 0 : i32
    %c0_i32_0 = arith.constant 0 : i32
    %c0_i32_1 = arith.constant 0 : i32
    %c0_i32_2 = arith.constant 0 : i32
    return %c0_i32, %c0_i32_0, %c0_i32_1 : i32, i32, i32
  }
  func.func @transform_3(%arg0: i32) -> (i32, i32, i32) {
    %c0_i32 = arith.constant 0 : i32
    %c0_i32_0 = arith.constant 0 : i32
    %c0_i32_1 = arith.constant 0 : i32
    %c0_i32_2 = arith.constant 0 : i32
    return %c0_i32, %c0_i32_0, %c0_i32_1 : i32, i32, i32
  }
  func.func @transform_4(%arg0: i32) -> (i32, i32, i32) {
    %c0_i32 = arith.constant 0 : i32
    %c0_i32_0 = arith.constant 0 : i32
    %c0_i32_1 = arith.constant 0 : i32
    return %arg0, %c0_i32, %c0_i32_0 : i32, i32, i32
  }
}

</mosaic_0001>

<llo_original>
// kernel: tpu_custom_call.1
$region0: #{tpu_custom_call.1}
  #allocation0 [shape = 'u32[]', space=smem, size = 0x4, offset = 0x4, fixed_abs, tag = 'smem constant byte address 0x4 - core index']
  #allocation1 [shape = 'u32[144,128]{1,0:T(1,128)}', space=vmem, size = 0x12000, scoped, tag = 'internal scratch']
  %s0 = inlined_call_operand.hbm [shape: f32[8,16,16], index: 0, kind: input, shape index: {}]
  %s1 = inlined_call_operand.hbm [shape: f32[8,16,16], index: 1, kind: input, shape index: {}]
  %s2 = inlined_call_operand.hbm [shape: f32[4,16,16], index: 2, kind: input, shape index: {}]
  %s3 = inlined_call_operand.hbm [shape: f32[4,16,16], index: 3, kind: input, shape index: {}]
  %s4 = inlined_call_operand.hbm [shape: f32[2,4,16], index: 4, kind: output, shape index: {}]
  %s5 = sld [smem:[#allocation0]]
  $region65: #{tpu_custom_call.1} parent=0
    _
  %s7 = ssub.s32 1, %s5
  %s8 = scalar_select 0, %s7, %s5
  $region1: #{tpu_custom_call.1} parent=0
    #allocation2 [shape = 'u8[65536]{0}', space=vmem, size = 0x10000, scoped, tag = 'input window, operand 0']
    #allocation3 [shape = 's32[2]{0}', space=sflag, size = 0x8, scoped, tag = 'scoped memory for tpu_custom_call.1']
    #allocation4 [shape = 's32[2]{0}', space=sflag, size = 0x8, scoped, tag = 'scoped memory for tpu_custom_call.1']
    #allocation5 [shape = 'u8[65536]{0}', space=vmem, size = 0x10000, scoped, tag = 'input window, operand 1']
    #allocation6 [shape = 's32[2]{0}', space=sflag, size = 0x8, scoped, tag = 'scoped memory for tpu_custom_call.1']
    #allocation7 [shape = 'u8[32768]{0}', space=vmem, size = 0x8000, scoped, tag = 'input window, operand 2, single buffered']
    #allocation8 [shape = 'u8[32768]{0}', space=vmem, size = 0x8000, scoped, tag = 'input window, operand 3, single buffered']
    #allocation9 [shape = 's32[1]{0}', space=sflag, size = 0x4, scoped, tag = 'scoped memory for tpu_custom_call.1']
    #allocation10 [shape = 'u8[4096]{0}', space=vmem, size = 0x1000, scoped, tag = 'output window, operand 0']
    %9 = vsyncpa [#allocation3], 0
    %s10 = scalar_lea.sflag [#allocation3], 1
    %11 = vsyncpa %s10, 0
    %12 = vsyncpa [#allocation6], 0
    %s13 = scalar_lea.sflag [#allocation6], 1
    %14 = vsyncpa %s13, 0
    %15 = vsyncpa [#allocation9], 0
    %16 = vsyncpa [#allocation4], 0
    %s17 = scalar_lea.sflag [#allocation4], 1
    %18 = vsyncpa %s17, 0
    loop: start=0, step=1, limit=4
    $region2: #{tpu_custom_call.1} parent=1 // loop_pre_header
      _
    $region3: #{tpu_custom_call.1} parent=1 // loop_header
      %s20 = sphi 0, %s24
      %p21 = scmp.ge.s32.totalorder %s20, 4
      %s30 = sphi 0, %s32
      %s33 = sphi 0, %s30
      %s34 = sphi 0, %s33
      %s50 = sphi 0, %s34
      %s56 = sphi 0, %s58
      %s59 = sphi 0, %s56
      %s60 = sphi 0, %s59
      %s76 = sphi 0, %s60
      %s80 = sphi 0, %s80
      %s82 = sphi 0, %s80
      %s83 = sphi 0, %s82
      %s97 = sphi 0, %s83
      %s101 = sphi 0, %s101
      %s103 = sphi 0, %s101
      %s104 = sphi 0, %s103
      %s118 = sphi 0, %s104
      %s124 = sphi 0, %s126
      %s127 = sphi 0, %s124
      %s128 = sphi 0, %s127
      %s144 = sphi 0, %s128
    $region4: #{tpu_custom_call.1} parent=1 // loop_header_branch
      %23 = sbr.rel (%p21) target = $region8
    $region5: #{tpu_custom_call.1} parent=1 // loop_body
      %s25 = ssub.s32 %s20, 1
      %s26 = ssub.s32 %s20, 2
      %s27 = sadd.s32 %s20, 1
      %s28 = ssub.s32 %s20, %s27
      %p29 = scmp.eq.s32.totalorder %s28, 0
      %s31 = sadd.s32 %s30, 1
      %s32 = scalar_select %p29, %s30, %s31
      %p35 = pneg %p29
      %p36 = scmp.eq.s32.totalorder %s20, 1
      %p37 = por %p35, %p36
      %p38 = scmp.ne.s32.totalorder %s30, %s33
      %p39 = scmp.eq.s32.totalorder %s20, 0
      %p40 = por %p38, %p39
      %p41 = scmp.ne.s32.totalorder %s30, %s33
      %p42 = scmp.eq.s32.totalorder %s25, 1
      %p43 = por %p41, %p42
      %p44 = scmp.ne.s32.totalorder %s33, %s34
      %p45 = scmp.eq.s32.totalorder %s25, 0
      %p46 = por %p44, %p45
      %p47 = scmp.ne.s32.totalorder %s33, %s34
      %p48 = scmp.eq.s32.totalorder %s26, 1
      %p49 = por %p47, %p48
      %p51 = scmp.ne.s32.totalorder %s34, %s50
      %p52 = scmp.eq.s32.totalorder %s26, 0
      %p53 = por %p51, %p52
      %s54 = ssub.s32 %s20, %s27
      %p55 = scmp.eq.s32.totalorder %s54, 0
      %s57 = sadd.s32 %s56, 1
      %s58 = scalar_select %p55, %s56, %s57
      %p61 = pneg %p55
      %p62 = scmp.eq.s32.totalorder %s20, 1
      %p63 = por %p61, %p62
      %p64 = scmp.ne.s32.totalorder %s56, %s59
      %p65 = scmp.eq.s32.totalorder %s20, 0
      %p66 = por %p64, %p65
      %p67 = scmp.ne.s32.totalorder %s56, %s59
      %p68 = scmp.eq.s32.totalorder %s25, 1
      %p69 = por %p67, %p68
      %p70 = scmp.ne.s32.totalorder %s59, %s60
      %p71 = scmp.eq.s32.totalorder %s25, 0
      %p72 = por %p70, %p71
      %p73 = scmp.ne.s32.totalorder %s59, %s60
      %p74 = scmp.eq.s32.totalorder %s26, 1
      %p75 = por %p73, %p74
      %p77 = scmp.ne.s32.totalorder %s60, %s76
      %p78 = scmp.eq.s32.totalorder %s26, 0
      %p79 = por %p77, %p78
      %s81 = sadd.s32 %s80, 1
      %p84 = scmp.eq.s32.totalorder %s20, 1
      %p85 = scmp.ne.s32.totalorder %s80, %s82
      %p86 = scmp.eq.s32.totalorder %s20, 0
      %p87 = por %p85, %p86
      %p88 = scmp.ne.s32.totalorder %s80, %s82
      %p89 = scmp.eq.s32.totalorder %s25, 1
      %p90 = por %p88, %p89
      %p91 = scmp.ne.s32.totalorder %s82, %s83
      %p92 = scmp.eq.s32.totalorder %s25, 0
      %p93 = por %p91, %p92
      %p94 = scmp.ne.s32.totalorder %s82, %s83
      %p95 = scmp.eq.s32.totalorder %s26, 1
      %p96 = por %p94, %p95
      %p98 = scmp.ne.s32.totalorder %s83, %s97
      %p99 = scmp.eq.s32.totalorder %s26, 0
      %p100 = por %p98, %p99
      %s102 = sadd.s32 %s101, 1
      %p105 = scmp.eq.s32.totalorder %s20, 1
      %p106 = scmp.ne.s32.totalorder %s101, %s103
      %p107 = scmp.eq.s32.totalorder %s20, 0
      %p108 = por %p106, %p107
      %p109 = scmp.ne.s32.totalorder %s101, %s103
      %p110 = scmp.eq.s32.totalorder %s25, 1
      %p111 = por %p109, %p110
      %p112 = scmp.ne.s32.totalorder %s103, %s104
      %p113 = scmp.eq.s32.totalorder %s25, 0
      %p114 = por %p112, %p113
      %p115 = scmp.ne.s32.totalorder %s103, %s104
      %p116 = scmp.eq.s32.totalorder %s26, 1
      %p117 = por %p115, %p116
      %p119 = scmp.ne.s32.totalorder %s104, %s118
      %p120 = scmp.eq.s32.totalorder %s26, 0
      %p121 = por %p119, %p120
      %s122 = ssub.s32 %s20, %s27
      %p123 = scmp.eq.s32.totalorder %s122, 0
      %s125 = sadd.s32 %s124, 1
      %s126 = scalar_select %p123, %s124, %s125
      %p129 = pneg %p123
      %p130 = scmp.eq.s32.totalorder %s20, 1
      %p131 = por %p129, %p130
      %p132 = scmp.ne.s32.totalorder %s124, %s127
      %p133 = scmp.eq.s32.totalorder %s20, 0
      %p134 = por %p132, %p133
      %p135 = scmp.ne.s32.totalorder %s124, %s127
      %p136 = scmp.eq.s32.totalorder %s25, 1
      %p137 = por %p135, %p136
      %p138 = scmp.ne.s32.totalorder %s127, %s128
      %p139 = scmp.eq.s32.totalorder %s25, 0
      %p140 = por %p138, %p139
      %p141 = scmp.ne.s32.totalorder %s127, %s128
      %p142 = scmp.eq.s32.totalorder %s26, 1
      %p143 = por %p141, %p142
      %p145 = scmp.ne.s32.totalorder %s128, %s144
      %p146 = scmp.eq.s32.totalorder %s26, 0
      %p147 = por %p145, %p146
      %p148 = scmp.le.s32.totalorder 1, %s20
      %p149 = scmp.lt.s32.totalorder %s20, 3
      %p150 = pnand %p148, %p149
      %p151 = pneg %p150
      // Predicated region
      $region9: #{tpu_custom_call.1} parent=5 // pred_check
        _
      $region10: #{tpu_custom_call.1} parent=5 // pred_check_branch
        %153 = sbr.rel (%p150) target = $region12
      $region11: #{tpu_custom_call.1} parent=5 // pred_region
        %s154 = ssub.s32 %s20, 1
        // Predicated region
        $region13: #{tpu_custom_call.1} parent=11 // pred_check
          %p155 = pneg %p93
        $region14: #{tpu_custom_call.1} parent=11 // pred_check_branch
          %157 = sbr.rel (%p155) target = $region16
        $region15: #{tpu_custom_call.1} parent=11 // pred_region
          %s159 = ssub.s32 1024, 1024
          %160 = vsyncadd [#allocation6], %s159
          %s161 = sshll.u32 [#allocation7], 4
          %s162 = int_to_ptr.vmem [resolvable:$true] %s161
          %167 = dma.hbm_to_vmem [thread:$0]  %s2, 1024, %s162, [#allocation6], 128, 128, 8
        $region16: #{tpu_custom_call.1} parent=11 // pred_fallthru
          _
        // Predicated region
        $region17: #{tpu_custom_call.1} parent=11 // pred_check
          %p168 = pneg %p114
        $region18: #{tpu_custom_call.1} parent=11 // pred_check_branch
          %170 = sbr.rel (%p168) target = $region20
        $region19: #{tpu_custom_call.1} parent=11 // pred_region
          %s172 = ssub.s32 1024, 1024
          %173 = vsyncadd [#allocation9], %s172
          %s174 = sshll.u32 [#allocation8], 4
          %s175 = int_to_ptr.vmem [resolvable:$true] %s174
          %180 = dma.hbm_to_vmem [thread:$0]  %s3, 1024, %s175, [#allocation9], 128, 128, 8
        $region20: #{tpu_custom_call.1} parent=11 // pred_fallthru
          _
      $region12: #{tpu_custom_call.1} parent=5 // pred_fallthru
        _
      %p181 = scmp.lt.s32.totalorder %s20, 2
      // Predicated region
      $region21: #{tpu_custom_call.1} parent=5 // pred_check
        %p182 = pneg %p181
      $region22: #{tpu_custom_call.1} parent=5 // pred_check_branch
        %184 = sbr.rel (%p182) target = $region24
      $region23: #{tpu_custom_call.1} parent=5 // pred_region
        // Predicated region
        $region25: #{tpu_custom_call.1} parent=23 // pred_check
          %p185 = pneg %p40
        $region26: #{tpu_custom_call.1} parent=23 // pred_check_branch
          %187 = sbr.rel (%p185) target = $region28
        $region27: #{tpu_custom_call.1} parent=23 // pred_region
          %s188 = sand.u32 %s30, 1
          %s189 = scalar_lea.sflag [#allocation3], %s188
          %s190 = sand.u32 %s30, 1
          %s191 = smul.addr %s190, 64
          %s192 = scalar_lea.vmem [#allocation2], %s191
          %s193 = smul.u32 4, %s20
          %s195 = ssub.s32 1024, 1024
          %196 = vsyncadd %s189, %s195
          %s197 = smul.addr %s193, 2
          %s198 = smul.addr %s197, 128
          %s199 = scalar_lea.hbm %s0, %s198
          %s200 = sshll.u32 %s192, 4
          %s201 = int_to_ptr.vmem [resolvable:$true] %s200
          %206 = dma.hbm_to_vmem [thread:$0]  %s199, 1024, %s201, %s189, 128, 128, 8
        $region28: #{tpu_custom_call.1} parent=23 // pred_fallthru
          _
        // Predicated region
        $region29: #{tpu_custom_call.1} parent=23 // pred_check
          %p207 = pneg %p66
        $region30: #{tpu_custom_call.1} parent=23 // pred_check_branch
          %209 = sbr.rel (%p207) target = $region32
        $region31: #{tpu_custom_call.1} parent=23 // pred_region
          %s210 = sand.u32 %s20, 1
          %s211 = scalar_lea.sflag [#allocation6], %s210
          %s212 = sand.u32 %s56, 1
          %s213 = smul.addr %s212, 64
          %s214 = scalar_lea.vmem [#allocation5], %s213
          %s215 = smul.u32 4, %s20
          %s217 = ssub.s32 1024, 1024
          %218 = vsyncadd %s211, %s217
          %s219 = smul.addr %s215, 2
          %s220 = smul.addr %s219, 128
          %s221 = scalar_lea.hbm %s1, %s220
          %s222 = sshll.u32 %s214, 4
          %s223 = int_to_ptr.vmem [resolvable:$true] %s222
          %228 = dma.hbm_to_vmem [thread:$0]  %s221, 1024, %s223, %s211, 128, 128, 8
        $region32: #{tpu_custom_call.1} parent=23 // pred_fallthru
          _
      $region24: #{tpu_custom_call.1} parent=5 // pred_fallthru
        _
      %p229 = scmp.le.s32.totalorder 1, %s20
      %p230 = scmp.lt.s32.totalorder %s20, 3
      %p231 = pnand %p229, %p230
      %p232 = pneg %p231
      // Predicated region
      $region33: #{tpu_custom_call.1} parent=5 // pred_check
        _
      $region34: #{tpu_custom_call.1} parent=5 // pred_check_branch
        %234 = sbr.rel (%p231) target = $region36
      $region35: #{tpu_custom_call.1} parent=5 // pred_region
        %s235 = ssub.s32 %s20, 1
        %s236 = sand.u32 %s33, 1
        %s237 = scalar_lea.sflag [#allocation3], %s236
        %s238 = sand.u32 %s33, 1
        %s239 = smul.addr %s238, 64
        %s240 = scalar_lea.vmem [#allocation2], %s239
        // Predicated region
        $region37: #{tpu_custom_call.1} parent=35 // pred_check
          %p241 = pneg %p46
        $region38: #{tpu_custom_call.1} parent=35 // pred_check_branch
          %243 = sbr.rel (%p241) target = $region40
        $region39: #{tpu_custom_call.1} parent=35 // pred_region
          %244 = dma.done %s237, 1024
        $region40: #{tpu_custom_call.1} parent=35 // pred_fallthru
          _
        %s245 = sand.u32 %s25, 1
        %s246 = scalar_lea.sflag [#allocation6], %s245
        %s247 = sand.u32 %s59, 1
        %s248 = smul.addr %s247, 64
        %s249 = scalar_lea.vmem [#allocation5], %s248
        // Predicated region
        $region41: #{tpu_custom_call.1} parent=35 // pred_check
          %p250 = pneg %p72
        $region42: #{tpu_custom_call.1} parent=35 // pred_check_branch
          %252 = sbr.rel (%p250) target = $region44
        $region43: #{tpu_custom_call.1} parent=35 // pred_region
          %253 = dma.done %s246, 1024
        $region44: #{tpu_custom_call.1} parent=35 // pred_fallthru
          _
        // Predicated region
        $region45: #{tpu_custom_call.1} parent=35 // pred_check
          %p254 = pneg %p93
        $region46: #{tpu_custom_call.1} parent=35 // pred_check_branch
          %256 = sbr.rel (%p254) target = $region48
        $region47: #{tpu_custom_call.1} parent=35 // pred_region
          %257 = dma.done [#allocation6], 1024
        $region48: #{tpu_custom_call.1} parent=35 // pred_fallthru
          _
        // Predicated region
        $region49: #{tpu_custom_call.1} parent=35 // pred_check
          %p258 = pneg %p114
        $region50: #{tpu_custom_call.1} parent=35 // pred_check_branch
          %260 = sbr.rel (%p258) target = $region52
        $region51: #{tpu_custom_call.1} parent=35 // pred_region
          %261 = dma.done [#allocation9], 1024
        $region52: #{tpu_custom_call.1} parent=35 // pred_fallthru
          _
        %s262 = sand.u32 %s33, 1
        %s263 = scalar_lea.sflag [#allocation3], %s262
        %s264 = sand.u32 %s33, 1
        %s265 = smul.addr %s264, 64
        %s266 = scalar_lea.vmem [#allocation2], %s265
        %p267 = pneg %p46
        %p268 = pneg %p43
        %s269 = sand.u32 %s25, 1
        %s270 = scalar_lea.sflag [#allocation6], %s269
        %s271 = sand.u32 %s59, 1
        %s272 = smul.addr %s271, 64
        %s273 = scalar_lea.vmem [#allocation5], %s272
        %p274 = pneg %p72
        %p275 = pneg %p69
        %p276 = pneg %p93
        %p277 = pneg %p90
        %p278 = pneg %p114
        %p279 = pneg %p111
        %p280 = pneg %p140
        %p281 = pneg %p137
        %s282 = sand.u32 %s127, 1
        %s283 = scalar_lea.sflag [#allocation4], %s282
        %s284 = sand.u32 %s127, 1
        %s285 = smul.addr %s284, 4
        %s286 = scalar_lea.vmem [#allocation10], %s285
        %s287 = smul.u32 4, %s25
        %s288 = smul.u32 4, %s25
        %v289 = vld [vmem:[%s240] sm:$0xff]
        %v290 = vld [vmem:[%s240 + $0x8] sm:$0xff]
        %v291 = vld [vmem:[%s240 + $0x10] sm:$0xff]
        %v292 = vld [vmem:[%s240 + $0x18] sm:$0xff]
        %v293 = vld [vmem:[%s240 + $0x20] sm:$0xff]
        %v294 = vld [vmem:[%s240 + $0x28] sm:$0xff]
        %v295 = vld [vmem:[%s240 + $0x30] sm:$0xff]
        %v296 = vld [vmem:[%s240 + $0x38] sm:$0xff]
        %v297 = vld [vmem:[%s249] sm:$0xff]
        %v298 = vld [vmem:[%s249 + $0x8] sm:$0xff]
        %v299 = vld [vmem:[%s249 + $0x10] sm:$0xff]
        %v300 = vld [vmem:[%s249 + $0x18] sm:$0xff]
        %v301 = vld [vmem:[%s249 + $0x20] sm:$0xff]
        %v302 = vld [vmem:[%s249 + $0x28] sm:$0xff]
        %v303 = vld [vmem:[%s249 + $0x30] sm:$0xff]
        %v304 = vld [vmem:[%s249 + $0x38] sm:$0xff]
        %v305 = vld [vmem:[#allocation7] sm:$0xff]
        %v306 = vld [vmem:[#allocation7 + $0x8] sm:$0xff]
        %v307 = vld [vmem:[#allocation7 + $0x10] sm:$0xff]
        %v308 = vld [vmem:[#allocation7 + $0x18] sm:$0xff]
        %v309 = vld [vmem:[#allocation7 + $0x20] sm:$0xff]
        %v310 = vld [vmem:[#allocation7 + $0x28] sm:$0xff]
        %v311 = vld [vmem:[#allocation7 + $0x30] sm:$0xff]
        %v312 = vld [vmem:[#allocation7 + $0x38] sm:$0xff]
        %v313 = vld [vmem:[#allocation8] sm:$0xff]
        %v314 = vld [vmem:[#allocation8 + $0x8] sm:$0xff]
        %v315 = vld [vmem:[#allocation8 + $0x10] sm:$0xff]
        %v316 = vld [vmem:[#allocation8 + $0x18] sm:$0xff]
        %v317 = vld [vmem:[#allocation8 + $0x20] sm:$0xff]
        %v318 = vld [vmem:[#allocation8 + $0x28] sm:$0xff]
        %v319 = vld [vmem:[#allocation8 + $0x30] sm:$0xff]
        %v320 = vld [vmem:[#allocation8 + $0x38] sm:$0xff]
        %vm321 = vcmask 130048
        %v323 = vsel %vm321, %v289, 0
        %v326 = vsel %vm321, %v290, 0
        %328 = vmatprep.subr.mxu0 0.0
        %329 = vmatpush1.msra.mxu0 %v305
        %330 = vmatprep.subr.mxu0 0.0
        %331 = vmatpush1.msra.mxu0 %v306
        %332 = vmatprep.subr.mxu0 0.0
        %333 = vmatpush1.msra.mxu0 0.0
        %334 = vmatprep.subr.mxu0 0.0
        %335 = vmatpush1.msra.mxu0 0.0
        %336 = vmatprep.subr.mxu0 0.0
        %337 = vmatpush1.msra.mxu0 0.0
        %338 = vmatprep.subr.mxu0 0.0
        %339 = vmatpush1.msra.mxu0 0.0
        %340 = vmatprep.subr.mxu0 0.0
        %341 = vmatpush1.msra.mxu0 0.0
        %342 = vmatprep.subr.mxu0 0.0
        %343 = vmatpush1.msra.mxu0 0.0
        %344 = vmatprep.subr.mxu0 0.0
        %345 = vmatpush1.msra.mxu0 0.0
        %346 = vmatprep.subr.mxu0 0.0
        %347 = vmatpush1.msra.mxu0 0.0
        %348 = vmatprep.subr.mxu0 0.0
        %349 = vmatpush1.msra.mxu0 0.0
        %350 = vmatprep.subr.mxu0 0.0
        %351 = vmatpush1.msra.mxu0 0.0
        %352 = vmatprep.subr.mxu0 0.0
        %353 = vmatpush1.msra.mxu0 0.0
        %354 = vmatprep.subr.mxu0 0.0
        %355 = vmatpush1.msra.mxu0 0.0
        %356 = vmatprep.subr.mxu0 0.0
        %357 = vmatpush1.msra.mxu0 0.0
        %358 = vmatprep.subr.mxu0 0.0
        %359 = vmatpush1.msra.mxu0 0.0
        %360 = vmatprep.subr.mxu0 0.0
        %361 = vmatpush1.msra.mxu0 0.0
        %362 = vmatprep.subr.mxu0 0.0
        %363 = vmatpush1.msra.mxu0 0.0
        %364 = vmatprep.subr.mxu0 0.0
        %365 = vmatpush1.msra.mxu0 0.0
        %366 = vmatprep.subr.mxu0 0.0
        %367 = vmatpush1.msra.mxu0 0.0
        %368 = vmatprep.subr.mxu0 0.0
        %369 = vmatpush1.msra.mxu0 0.0
        %370 = vmatprep.subr.mxu0 0.0
        %371 = vmatpush1.msra.mxu0 0.0
        %372 = vmatprep.subr.mxu0 0.0
        %373 = vmatpush1.msra.mxu0 0.0
        %374 = vmatprep.subr.mxu0 0.0
        %375 = vmatpush1.msra.mxu0 0.0
        %376 = vmatprep.subr.mxu0 0.0
        %377 = vmatpush1.msra.mxu0 0.0
        %378 = vmatprep.subr.mxu0 0.0
        %379 = vmatpush1.msra.mxu0 0.0
        %380 = vmatprep.subr.mxu0 0.0
        %381 = vmatpush1.msra.mxu0 0.0
        %382 = vmatprep.subr.mxu0 0.0
        %383 = vmatpush1.msra.mxu0 0.0
        %384 = vmatprep.subr.mxu0 0.0
        %385 = vmatpush1.msra.mxu0 0.0
        %386 = vmatprep.subr.mxu0 0.0
        %387 = vmatpush1.msra.mxu0 0.0
        %388 = vmatprep.subr.mxu0 0.0
        %389 = vmatpush1.msra.mxu0 0.0
        %390 = vmatprep.subr.mxu0 0.0
        %391 = vmatpush1.msra.mxu0 0.0
        %392 = vmatprep.mubr.f32.mxu0 0.0
        %393 = vmatmul.mubr.f32.gmra.mrb[0].mxu0 %v323
        %v394 = vpop.f32.mrb[0].mxu0
        %v395 = vadd.f32 0.0, %v394
        %v396 = vpop.f32.mrb[0].mxu0
        %397 = vmatprep.mubr.f32.mxu0 0.0
        %398 = vmatmul.mubr.f32.gmra.mrb[0].mxu0 %v326
        %v399 = vpop.f32.mrb[0].mxu0
        %v400 = vadd.f32 0.0, %v399
        %v401 = vpop.f32.mrb[0].mxu0
        %402 = vdwg.mxu0
        %v404 = vsel %vm321, %v291, 0
        %v407 = vsel %vm321, %v292, 0
        %409 = vmatprep.subr.mxu0 0.0
        %410 = vmatpush1.msra.mxu0 %v307
        %411 = vmatprep.subr.mxu0 0.0
        %412 = vmatpush1.msra.mxu0 %v308
        %413 = vmatprep.subr.mxu0 0.0
        %414 = vmatpush1.msra.mxu0 0.0
        %415 = vmatprep.subr.mxu0 0.0
        %416 = vmatpush1.msra.mxu0 0.0
        %417 = vmatprep.subr.mxu0 0.0
        %418 = vmatpush1.msra.mxu0 0.0
        %419 = vmatprep.subr.mxu0 0.0
        %420 = vmatpush1.msra.mxu0 0.0
        %421 = vmatprep.subr.mxu0 0.0
        %422 = vmatpush1.msra.mxu0 0.0
        %423 = vmatprep.subr.mxu0 0.0
        %424 = vmatpush1.msra.mxu0 0.0
        %425 = vmatprep.subr.mxu0 0.0
        %426 = vmatpush1.msra.mxu0 0.0
        %427 = vmatprep.subr.mxu0 0.0
        %428 = vmatpush1.msra.mxu0 0.0
        %429 = vmatprep.subr.mxu0 0.0
        %430 = vmatpush1.msra.mxu0 0.0
        %431 = vmatprep.subr.mxu0 0.0
        %432 = vmatpush1.msra.mxu0 0.0
        %433 = vmatprep.subr.mxu0 0.0
        %434 = vmatpush1.msra.mxu0 0.0
        %435 = vmatprep.subr.mxu0 0.0
        %436 = vmatpush1.msra.mxu0 0.0
        %437 = vmatprep.subr.mxu0 0.0
        %438 = vmatpush1.msra.mxu0 0.0
        %439 = vmatprep.subr.mxu0 0.0
        %440 = vmatpush1.msra.mxu0 0.0
        %441 = vmatprep.subr.mxu0 0.0
        %442 = vmatpush1.msra.mxu0 0.0
        %443 = vmatprep.subr.mxu0 0.0
        %444 = vmatpush1.msra.mxu0 0.0
        %445 = vmatprep.subr.mxu0 0.0
        %446 = vmatpush1.msra.mxu0 0.0
        %447 = vmatprep.subr.mxu0 0.0
        %448 = vmatpush1.msra.mxu0 0.0
        %449 = vmatprep.subr.mxu0 0.0
        %450 = vmatpush1.msra.mxu0 0.0
        %451 = vmatprep.subr.mxu0 0.0
        %452 = vmatpush1.msra.mxu0 0.0
        %453 = vmatprep.subr.mxu0 0.0
        %454 = vmatpush1.msra.mxu0 0.0
        %455 = vmatprep.subr.mxu0 0.0
        %456 = vmatpush1.msra.mxu0 0.0
        %457 = vmatprep.subr.mxu0 0.0
        %458 = vmatpush1.msra.mxu0 0.0
        %459 = vmatprep.subr.mxu0 0.0
        %460 = vmatpush1.msra.mxu0 0.0
        %461 = vmatprep.subr.mxu0 0.0
        %462 = vmatpush1.msra.mxu0 0.0
        %463 = vmatprep.subr.mxu0 0.0
        %464 = vmatpush1.msra.mxu0 0.0
        %465 = vmatprep.subr.mxu0 0.0
        %466 = vmatpush1.msra.mxu0 0.0
        %467 = vmatprep.subr.mxu0 0.0
        %468 = vmatpush1.msra.mxu0 0.0
        %469 = vmatprep.subr.mxu0 0.0
        %470 = vmatpush1.msra.mxu0 0.0
        %471 = vmatprep.subr.mxu0 0.0
        %472 = vmatpush1.msra.mxu0 0.0
        %473 = vmatprep.mubr.f32.mxu0 0.0
        %474 = vmatmul.mubr.f32.gmra.mrb[0].mxu0 %v404
        %v475 = vpop.f32.mrb[0].mxu0
        %v476 = vadd.f32 0.0, %v475
        %v477 = vpop.f32.mrb[0].mxu0
        %478 = vmatprep.mubr.f32.mxu0 0.0
        %479 = vmatmul.mubr.f32.gmra.mrb[0].mxu0 %v407
        %v480 = vpop.f32.mrb[0].mxu0
        %v481 = vadd.f32 0.0, %v480
        %v482 = vpop.f32.mrb[0].mxu0
        %483 = vdwg.mxu0
        %v485 = vsel %vm321, %v293, 0
        %v488 = vsel %vm321, %v294, 0
        %490 = vmatprep.subr.mxu0 0.0
        %491 = vmatpush1.msra.mxu0 %v309
        %492 = vmatprep.subr.mxu0 0.0
        %493 = vmatpush1.msra.mxu0 %v310
        %494 = vmatprep.subr.mxu0 0.0
        %495 = vmatpush1.msra.mxu0 0.0
        %496 = vmatprep.subr.mxu0 0.0
        %497 = vmatpush1.msra.mxu0 0.0
        %498 = vmatprep.subr.mxu0 0.0
        %499 = vmatpush1.msra.mxu0 0.0
        %500 = vmatprep.subr.mxu0 0.0
        %501 = vmatpush1.msra.mxu0 0.0
        %502 = vmatprep.subr.mxu0 0.0
        %503 = vmatpush1.msra.mxu0 0.0
        %504 = vmatprep.subr.mxu0 0.0
        %505 = vmatpush1.msra.mxu0 0.0
        %506 = vmatprep.subr.mxu0 0.0
        %507 = vmatpush1.msra.mxu0 0.0
        %508 = vmatprep.subr.mxu0 0.0
        %509 = vmatpush1.msra.mxu0 0.0
        %510 = vmatprep.subr.mxu0 0.0
        %511 = vmatpush1.msra.mxu0 0.0
        %512 = vmatprep.subr.mxu0 0.0
        %513 = vmatpush1.msra.mxu0 0.0
        %514 = vmatprep.subr.mxu0 0.0
        %515 = vmatpush1.msra.mxu0 0.0
        %516 = vmatprep.subr.mxu0 0.0
        %517 = vmatpush1.msra.mxu0 0.0
        %518 = vmatprep.subr.mxu0 0.0
        %519 = vmatpush1.msra.mxu0 0.0
        %520 = vmatprep.subr.mxu0 0.0
        %521 = vmatpush1.msra.mxu0 0.0
        %522 = vmatprep.subr.mxu0 0.0
        %523 = vmatpush1.msra.mxu0 0.0
        %524 = vmatprep.subr.mxu0 0.0
        %525 = vmatpush1.msra.mxu0 0.0
        %526 = vmatprep.subr.mxu0 0.0
        %527 = vmatpush1.msra.mxu0 0.0
        %528 = vmatprep.subr.mxu0 0.0
        %529 = vmatpush1.msra.mxu0 0.0
        %530 = vmatprep.subr.mxu0 0.0
        %531 = vmatpush1.msra.mxu0 0.0
        %532 = vmatprep.subr.mxu0 0.0
        %533 = vmatpush1.msra.mxu0 0.0
        %534 = vmatprep.subr.mxu0 0.0
        %535 = vmatpush1.msra.mxu0 0.0
        %536 = vmatprep.subr.mxu0 0.0
        %537 = vmatpush1.msra.mxu0 0.0
        %538 = vmatprep.subr.mxu0 0.0
        %539 = vmatpush1.msra.mxu0 0.0
        %540 = vmatprep.subr.mxu0 0.0
        %541 = vmatpush1.msra.mxu0 0.0
        %542 = vmatprep.subr.mxu0 0.0
        %543 = vmatpush1.msra.mxu0 0.0
        %544 = vmatprep.subr.mxu0 0.0
        %545 = vmatpush1.msra.mxu0 0.0
        %546 = vmatprep.subr.mxu0 0.0
        %547 = vmatpush1.msra.mxu0 0.0
        %548 = vmatprep.subr.mxu0 0.0
        %549 = vmatpush1.msra.mxu0 0.0
        %550 = vmatprep.subr.mxu0 0.0
        %551 = vmatpush1.msra.mxu0 0.0
        %552 = vmatprep.subr.mxu0 0.0
        %553 = vmatpush1.msra.mxu0 0.0
        %554 = vmatprep.mubr.f32.mxu0 0.0
        %555 = vmatmul.mubr.f32.gmra.mrb[0].mxu0 %v485
        %v556 = vpop.f32.mrb[0].mxu0
        %v557 = vadd.f32 0.0, %v556
        %v558 = vpop.f32.mrb[0].mxu0
        %559 = vmatprep.mubr.f32.mxu0 0.0
        %560 = vmatmul.mubr.f32.gmra.mrb[0].mxu0 %v488
        %v561 = vpop.f32.mrb[0].mxu0
        %v562 = vadd.f32 0.0, %v561
        %v563 = vpop.f32.mrb[0].mxu0
        %564 = vdwg.mxu0
        %v566 = vsel %vm321, %v295, 0
        %v569 = vsel %vm321, %v296, 0
        %571 = vmatprep.subr.mxu0 0.0
        %572 = vmatpush1.msra.mxu0 %v311
        %573 = vmatprep.subr.mxu0 0.0
        %574 = vmatpush1.msra.mxu0 %v312
        %575 = vmatprep.subr.mxu0 0.0
        %576 = vmatpush1.msra.mxu0 0.0
        %577 = vmatprep.subr.mxu0 0.0
        %578 = vmatpush1.msra.mxu0 0.0
        %579 = vmatprep.subr.mxu0 0.0
        %580 = vmatpush1.msra.mxu0 0.0
        %581 = vmatprep.subr.mxu0 0.0
        %582 = vmatpush1.msra.mxu0 0.0
        %583 = vmatprep.subr.mxu0 0.0
        %584 = vmatpush1.msra.mxu0 0.0
        %585 = vmatprep.subr.mxu0 0.0
        %586 = vmatpush1.msra.mxu0 0.0
        %587 = vmatprep.subr.mxu0 0.0
        %588 = vmatpush1.msra.mxu0 0.0
        %589 = vmatprep.subr.mxu0 0.0
        %590 = vmatpush1.msra.mxu0 0.0
        %591 = vmatprep.subr.mxu0 0.0
        %592 = vmatpush1.msra.mxu0 0.0
        %593 = vmatprep.subr.mxu0 0.0
        %594 = vmatpush1.msra.mxu0 0.0
        %595 = vmatprep.subr.mxu0 0.0
        %596 = vmatpush1.msra.mxu0 0.0
        %597 = vmatprep.subr.mxu0 0.0
        %598 = vmatpush1.msra.mxu0 0.0
        %599 = vmatprep.subr.mxu0 0.0
        %600 = vmatpush1.msra.mxu0 0.0
        %601 = vmatprep.subr.mxu0 0.0
        %602 = vmatpush1.msra.mxu0 0.0
        %603 = vmatprep.subr.mxu0 0.0
        %604 = vmatpush1.msra.mxu0 0.0
        %605 = vmatprep.subr.mxu0 0.0
        %606 = vmatpush1.msra.mxu0 0.0
        %607 = vmatprep.subr.mxu0 0.0
        %608 = vmatpush1.msra.mxu0 0.0
        %609 = vmatprep.subr.mxu0 0.0
        %610 = vmatpush1.msra.mxu0 0.0
        %611 = vmatprep.subr.mxu0 0.0
        %612 = vmatpush1.msra.mxu0 0.0
        %613 = vmatprep.subr.mxu0 0.0
        %614 = vmatpush1.msra.mxu0 0.0
        %615 = vmatprep.subr.mxu0 0.0
        %616 = vmatpush1.msra.mxu0 0.0
        %617 = vmatprep.subr.mxu0 0.0
        %618 = vmatpush1.msra.mxu0 0.0
        %619 = vmatprep.subr.mxu0 0.0
        %620 = vmatpush1.msra.mxu0 0.0
        %621 = vmatprep.subr.mxu0 0.0
        %622 = vmatpush1.msra.mxu0 0.0
        %623 = vmatprep.subr.mxu0 0.0
        %624 = vmatpush1.msra.mxu0 0.0
        %625 = vmatprep.subr.mxu0 0.0
        %626 = vmatpush1.msra.mxu0 0.0
        %627 = vmatprep.subr.mxu0 0.0
        %628 = vmatpush1.msra.mxu0 0.0
        %629 = vmatprep.subr.mxu0 0.0
        %630 = vmatpush1.msra.mxu0 0.0
        %631 = vmatprep.subr.mxu0 0.0
        %632 = vmatpush1.msra.mxu0 0.0
        %633 = vmatprep.subr.mxu0 0.0
        %634 = vmatpush1.msra.mxu0 0.0
        %635 = vmatprep.mubr.f32.mxu0 0.0
        %636 = vmatmul.mubr.f32.gmra.mrb[0].mxu0 %v566
        %v637 = vpop.f32.mrb[0].mxu0
        %v638 = vadd.f32 0.0, %v637
        %v639 = vpop.f32.mrb[0].mxu0
        %640 = vmatprep.mubr.f32.mxu0 0.0
        %641 = vmatmul.mubr.f32.gmra.mrb[0].mxu0 %v569
        %v642 = vpop.f32.mrb[0].mxu0
        %v643 = vadd.f32 0.0, %v642
        %v644 = vpop.f32.mrb[0].mxu0
        %645 = vdwg.mxu0
        %v647 = vsel %vm321, %v313, 0
        %v650 = vsel %vm321, %v314, 0
        %652 = vmatprep.subr.mxu0 0.0
        %653 = vmatpush1.msra.mxu0 %v395
        %654 = vmatprep.subr.mxu0 0.0
        %655 = vmatpush1.msra.mxu0 %v400
        %656 = vmatprep.subr.mxu0 0.0
        %657 = vmatpush1.msra.mxu0 0.0
        %658 = vmatprep.subr.mxu0 0.0
        %659 = vmatpush1.msra.mxu0 0.0
        %660 = vmatprep.subr.mxu0 0.0
        %661 = vmatpush1.msra.mxu0 0.0
        %662 = vmatprep.subr.mxu0 0.0
        %663 = vmatpush1.msra.mxu0 0.0
        %664 = vmatprep.subr.mxu0 0.0
        %665 = vmatpush1.msra.mxu0 0.0
        %666 = vmatprep.subr.mxu0 0.0
        %667 = vmatpush1.msra.mxu0 0.0
        %668 = vmatprep.subr.mxu0 0.0
        %669 = vmatpush1.msra.mxu0 0.0
        %670 = vmatprep.subr.mxu0 0.0
        %671 = vmatpush1.msra.mxu0 0.0
        %672 = vmatprep.subr.mxu0 0.0
        %673 = vmatpush1.msra.mxu0 0.0
        %674 = vmatprep.subr.mxu0 0.0
        %675 = vmatpush1.msra.mxu0 0.0
        %676 = vmatprep.subr.mxu0 0.0
        %677 = vmatpush1.msra.mxu0 0.0
        %678 = vmatprep.subr.mxu0 0.0
        %679 = vmatpush1.msra.mxu0 0.0
        %680 = vmatprep.subr.mxu0 0.0
        %681 = vmatpush1.msra.mxu0 0.0
        %682 = vmatprep.subr.mxu0 0.0
        %683 = vmatpush1.msra.mxu0 0.0
        %684 = vmatprep.subr.mxu0 0.0
        %685 = vmatpush1.msra.mxu0 0.0
        %686 = vmatprep.subr.mxu0 0.0
        %687 = vmatpush1.msra.mxu0 0.0
        %688 = vmatprep.subr.mxu0 0.0
        %689 = vmatpush1.msra.mxu0 0.0
        %690 = vmatprep.subr.mxu0 0.0
        %691 = vmatpush1.msra.mxu0 0.0
        %692 = vmatprep.subr.mxu0 0.0
        %693 = vmatpush1.msra.mxu0 0.0
        %694 = vmatprep.subr.mxu0 0.0
        %695 = vmatpush1.msra.mxu0 0.0
        %696 = vmatprep.subr.mxu0 0.0
        %697 = vmatpush1.msra.mxu0 0.0
        %698 = vmatprep.subr.mxu0 0.0
        %699 = vmatpush1.msra.mxu0 0.0
        %700 = vmatprep.subr.mxu0 0.0
        %701 = vmatpush1.msra.mxu0 0.0
        %702 = vmatprep.subr.mxu0 0.0
        %703 = vmatpush1.msra.mxu0 0.0
        %704 = vmatprep.subr.mxu0 0.0
        %705 = vmatpush1.msra.mxu0 0.0
        %706 = vmatprep.subr.mxu0 0.0
        %707 = vmatpush1.msra.mxu0 0.0
        %708 = vmatprep.subr.mxu0 0.0
        %709 = vmatpush1.msra.mxu0 0.0
        %710 = vmatprep.subr.mxu0 0.0
        %711 = vmatpush1.msra.mxu0 0.0
        %712 = vmatprep.subr.mxu0 0.0
        %713 = vmatpush1.msra.mxu0 0.0
        %714 = vmatprep.subr.mxu0 0.0
        %715 = vmatpush1.msra.mxu0 0.0
        %716 = vmatprep.mubr.f32.mxu0 0.0
        %717 = vmatmul.mubr.f32.gmra.mrb[0].mxu0 %v647
        %v718 = vpop.f32.mrb[0].mxu0
        %v719 = vadd.f32 0.0, %v718
        %v720 = vpop.f32.mrb[0].mxu0
        %721 = vmatprep.mubr.f32.mxu0 0.0
        %722 = vmatmul.mubr.f32.gmra.mrb[0].mxu0 %v650
        %v723 = vpop.f32.mrb[0].mxu0
        %v724 = vadd.f32 0.0, %v723
        %v725 = vpop.f32.mrb[0].mxu0
        %726 = vdwg.mxu0
        %v728 = vsel %vm321, %v315, 0
        %v731 = vsel %vm321, %v316, 0
        %733 = vmatprep.subr.mxu0 0.0
        %734 = vmatpush1.msra.mxu0 %v476
        %735 = vmatprep.subr.mxu0 0.0
        %736 = vmatpush1.msra.mxu0 %v481
        %737 = vmatprep.subr.mxu0 0.0
        %738 = vmatpush1.msra.mxu0 0.0
        %739 = vmatprep.subr.mxu0 0.0
        %740 = vmatpush1.msra.mxu0 0.0
        %741 = vmatprep.subr.mxu0 0.0
        %742 = vmatpush1.msra.mxu0 0.0
        %743 = vmatprep.subr.mxu0 0.0
        %744 = vmatpush1.msra.mxu0 0.0
        %745 = vmatprep.subr.mxu0 0.0
        %746 = vmatpush1.msra.mxu0 0.0
        %747 = vmatprep.subr.mxu0 0.0
        %748 = vmatpush1.msra.mxu0 0.0
        %749 = vmatprep.subr.mxu0 0.0
        %750 = vmatpush1.msra.mxu0 0.0
        %751 = vmatprep.subr.mxu0 0.0
        %752 = vmatpush1.msra.mxu0 0.0
        %753 = vmatprep.subr.mxu0 0.0
        %754 = vmatpush1.msra.mxu0 0.0
        %755 = vmatprep.subr.mxu0 0.0
        %756 = vmatpush1.msra.mxu0 0.0
        %757 = vmatprep.subr.mxu0 0.0
        %758 = vmatpush1.msra.mxu0 0.0
        %759 = vmatprep.subr.mxu0 0.0
        %760 = vmatpush1.msra.mxu0 0.0
        %761 = vmatprep.subr.mxu0 0.0
        %762 = vmatpush1.msra.mxu0 0.0
        %763 = vmatprep.subr.mxu0 0.0
        %764 = vmatpush1.msra.mxu0 0.0
        %765 = vmatprep.subr.mxu0 0.0
        %766 = vmatpush1.msra.mxu0 0.0
        %767 = vmatprep.subr.mxu0 0.0
        %768 = vmatpush1.msra.mxu0 0.0
        %769 = vmatprep.subr.mxu0 0.0
        %770 = vmatpush1.msra.mxu0 0.0
        %771 = vmatprep.subr.mxu0 0.0
        %772 = vmatpush1.msra.mxu0 0.0
        %773 = vmatprep.subr.mxu0 0.0
        %774 = vmatpush1.msra.mxu0 0.0
        %775 = vmatprep.subr.mxu0 0.0
        %776 = vmatpush1.msra.mxu0 0.0
        %777 = vmatprep.subr.mxu0 0.0
        %778 = vmatpush1.msra.mxu0 0.0
        %779 = vmatprep.subr.mxu0 0.0
        %780 = vmatpush1.msra.mxu0 0.0
        %781 = vmatprep.subr.mxu0 0.0
        %782 = vmatpush1.msra.mxu0 0.0
        %783 = vmatprep.subr.mxu0 0.0
        %784 = vmatpush1.msra.mxu0 0.0
        %785 = vmatprep.subr.mxu0 0.0
        %786 = vmatpush1.msra.mxu0 0.0
        %787 = vmatprep.subr.mxu0 0.0
        %788 = vmatpush1.msra.mxu0 0.0
        %789 = vmatprep.subr.mxu0 0.0
        %790 = vmatpush1.msra.mxu0 0.0
        %791 = vmatprep.subr.mxu0 0.0
        %792 = vmatpush1.msra.mxu0 0.0
        %793 = vmatprep.subr.mxu0 0.0
        %794 = vmatpush1.msra.mxu0 0.0
        %795 = vmatprep.subr.mxu0 0.0
        %796 = vmatpush1.msra.mxu0 0.0
        %797 = vmatprep.mubr.f32.mxu0 0.0
        %798 = vmatmul.mubr.f32.gmra.mrb[0].mxu0 %v728
        %v799 = vpop.f32.mrb[0].mxu0
        %v800 = vadd.f32 0.0, %v799
        %v801 = vpop.f32.mrb[0].mxu0
        %802 = vmatprep.mubr.f32.mxu0 0.0
        %803 = vmatmul.mubr.f32.gmra.mrb[0].mxu0 %v731
        %v804 = vpop.f32.mrb[0].mxu0
        %v805 = vadd.f32 0.0, %v804
        %v806 = vpop.f32.mrb[0].mxu0
        %807 = vdwg.mxu0
        %v809 = vsel %vm321, %v317, 0
        %v812 = vsel %vm321, %v318, 0
        %814 = vmatprep.subr.mxu0 0.0
        %815 = vmatpush1.msra.mxu0 %v557
        %816 = vmatprep.subr.mxu0 0.0
        %817 = vmatpush1.msra.mxu0 %v562
        %818 = vmatprep.subr.mxu0 0.0
        %819 = vmatpush1.msra.mxu0 0.0
        %820 = vmatprep.subr.mxu0 0.0
        %821 = vmatpush1.msra.mxu0 0.0
        %822 = vmatprep.subr.mxu0 0.0
        %823 = vmatpush1.msra.mxu0 0.0
        %824 = vmatprep.subr.mxu0 0.0
        %825 = vmatpush1.msra.mxu0 0.0
        %826 = vmatprep.subr.mxu0 0.0
        %827 = vmatpush1.msra.mxu0 0.0
        %828 = vmatprep.subr.mxu0 0.0
        %829 = vmatpush1.msra.mxu0 0.0
        %830 = vmatprep.subr.mxu0 0.0
        %831 = vmatpush1.msra.mxu0 0.0
        %832 = vmatprep.subr.mxu0 0.0
        %833 = vmatpush1.msra.mxu0 0.0
        %834 = vmatprep.subr.mxu0 0.0
        %835 = vmatpush1.msra.mxu0 0.0
        %836 = vmatprep.subr.mxu0 0.0
        %837 = vmatpush1.msra.mxu0 0.0
        %838 = vmatprep.subr.mxu0 0.0
        %839 = vmatpush1.msra.mxu0 0.0
        %840 = vmatprep.subr.mxu0 0.0
        %841 = vmatpush1.msra.mxu0 0.0
        %842 = vmatprep.subr.mxu0 0.0
        %843 = vmatpush1.msra.mxu0 0.0
        %844 = vmatprep.subr.mxu0 0.0
        %845 = vmatpush1.msra.mxu0 0.0
        %846 = vmatprep.subr.mxu0 0.0
        %847 = vmatpush1.msra.mxu0 0.0
        %848 = vmatprep.subr.mxu0 0.0
        %849 = vmatpush1.msra.mxu0 0.0
        %850 = vmatprep.subr.mxu0 0.0
        %851 = vmatpush1.msra.mxu0 0.0
        %852 = vmatprep.subr.mxu0 0.0
        %853 = vmatpush1.msra.mxu0 0.0
        %854 = vmatprep.subr.mxu0 0.0
        %855 = vmatpush1.msra.mxu0 0.0
        %856 = vmatprep.subr.mxu0 0.0
        %857 = vmatpush1.msra.mxu0 0.0
        %858 = vmatprep.subr.mxu0 0.0
        %859 = vmatpush1.msra.mxu0 0.0
        %860 = vmatprep.subr.mxu0 0.0
        %861 = vmatpush1.msra.mxu0 0.0
        %862 = vmatprep.subr.mxu0 0.0
        %863 = vmatpush1.msra.mxu0 0.0
        %864 = vmatprep.subr.mxu0 0.0
        %865 = vmatpush1.msra.mxu0 0.0
        %866 = vmatprep.subr.mxu0 0.0
        %867 = vmatpush1.msra.mxu0 0.0
        %868 = vmatprep.subr.mxu0 0.0
        %869 = vmatpush1.msra.mxu0 0.0
        %870 = vmatprep.subr.mxu0 0.0
        %871 = vmatpush1.msra.mxu0 0.0
        %872 = vmatprep.subr.mxu0 0.0
        %873 = vmatpush1.msra.mxu0 0.0
        %874 = vmatprep.subr.mxu0 0.0
        %875 = vmatpush1.msra.mxu0 0.0
        %876 = vmatprep.subr.mxu0 0.0
        %877 = vmatpush1.msra.mxu0 0.0
        %878 = vmatprep.mubr.f32.mxu0 0.0
        %879 = vmatmul.mubr.f32.gmra.mrb[0].mxu0 %v809
        %v880 = vpop.f32.mrb[0].mxu0
        %v881 = vadd.f32 0.0, %v880
        %v882 = vpop.f32.mrb[0].mxu0
        %883 = vmatprep.mubr.f32.mxu0 0.0
        %884 = vmatmul.mubr.f32.gmra.mrb[0].mxu0 %v812
        %v885 = vpop.f32.mrb[0].mxu0
        %v886 = vadd.f32 0.0, %v885
        %v887 = vpop.f32.mrb[0].mxu0
        %888 = vdwg.mxu0
        %v890 = vsel %vm321, %v319, 0
        %v893 = vsel %vm321, %v320, 0
        %895 = vmatprep.subr.mxu0 0.0
        %896 = vmatpush1.msra.mxu0 %v638
        %897 = vmatprep.subr.mxu0 0.0
        %898 = vmatpush1.msra.mxu0 %v643
        %899 = vmatprep.subr.mxu0 0.0
        %900 = vmatpush1.msra.mxu0 0.0
        %901 = vmatprep.subr.mxu0 0.0
        %902 = vmatpush1.msra.mxu0 0.0
        %903 = vmatprep.subr.mxu0 0.0
        %904 = vmatpush1.msra.mxu0 0.0
        %905 = vmatprep.subr.mxu0 0.0
        %906 = vmatpush1.msra.mxu0 0.0
        %907 = vmatprep.subr.mxu0 0.0
        %908 = vmatpush1.msra.mxu0 0.0
        %909 = vmatprep.subr.mxu0 0.0
        %910 = vmatpush1.msra.mxu0 0.0
        %911 = vmatprep.subr.mxu0 0.0
        %912 = vmatpush1.msra.mxu0 0.0
        %913 = vmatprep.subr.mxu0 0.0
        %914 = vmatpush1.msra.mxu0 0.0
        %915 = vmatprep.subr.mxu0 0.0
        %916 = vmatpush1.msra.mxu0 0.0
        %917 = vmatprep.subr.mxu0 0.0
        %918 = vmatpush1.msra.mxu0 0.0
        %919 = vmatprep.subr.mxu0 0.0
        %920 = vmatpush1.msra.mxu0 0.0
        %921 = vmatprep.subr.mxu0 0.0
        %922 = vmatpush1.msra.mxu0 0.0
        %923 = vmatprep.subr.mxu0 0.0
        %924 = vmatpush1.msra.mxu0 0.0
        %925 = vmatprep.subr.mxu0 0.0
        %926 = vmatpush1.msra.mxu0 0.0
        %927 = vmatprep.subr.mxu0 0.0
        %928 = vmatpush1.msra.mxu0 0.0
        %929 = vmatprep.subr.mxu0 0.0
        %930 = vmatpush1.msra.mxu0 0.0
        %931 = vmatprep.subr.mxu0 0.0
        %932 = vmatpush1.msra.mxu0 0.0
        %933 = vmatprep.subr.mxu0 0.0
        %934 = vmatpush1.msra.mxu0 0.0
        %935 = vmatprep.subr.mxu0 0.0
        %936 = vmatpush1.msra.mxu0 0.0
        %937 = vmatprep.subr.mxu0 0.0
        %938 = vmatpush1.msra.mxu0 0.0
        %939 = vmatprep.subr.mxu0 0.0
        %940 = vmatpush1.msra.mxu0 0.0
        %941 = vmatprep.subr.mxu0 0.0
        %942 = vmatpush1.msra.mxu0 0.0
        %943 = vmatprep.subr.mxu0 0.0
        %944 = vmatpush1.msra.mxu0 0.0
        %945 = vmatprep.subr.mxu0 0.0
        %946 = vmatpush1.msra.mxu0 0.0
        %947 = vmatprep.subr.mxu0 0.0
        %948 = vmatpush1.msra.mxu0 0.0
        %949 = vmatprep.subr.mxu0 0.0
        %950 = vmatpush1.msra.mxu0 0.0
        %951 = vmatprep.subr.mxu0 0.0
        %952 = vmatpush1.msra.mxu0 0.0
        %953 = vmatprep.subr.mxu0 0.0
        %954 = vmatpush1.msra.mxu0 0.0
        %955 = vmatprep.subr.mxu0 0.0
        %956 = vmatpush1.msra.mxu0 0.0
        %957 = vmatprep.subr.mxu0 0.0
        %958 = vmatpush1.msra.mxu0 0.0
        %959 = vmatprep.mubr.f32.mxu0 0.0
        %960 = vmatmul.mubr.f32.gmra.mrb[0].mxu0 %v890
        %v961 = vpop.f32.mrb[0].mxu0
        %v962 = vadd.f32 0.0, %v961
        %v963 = vpop.f32.mrb[0].mxu0
        %964 = vmatprep.mubr.f32.mxu0 0.0
        %965 = vmatmul.mubr.f32.gmra.mrb[0].mxu0 %v893
        %v966 = vpop.f32.mrb[0].mxu0
        %v967 = vadd.f32 0.0, %v966
        %v968 = vpop.f32.mrb[0].mxu0
        %969 = vdwg.mxu0
        %v971 = vsel %vm321, %v297, 0
        %v974 = vsel %vm321, %v298, 0
        %976 = vmatprep.subr.mxu0 0.0
        %977 = vmatpush1.msra.mxu0 %v305
        %978 = vmatprep.subr.mxu0 0.0
        %979 = vmatpush1.msra.mxu0 %v306
        %980 = vmatprep.subr.mxu0 0.0
        %981 = vmatpush1.msra.mxu0 0.0
        %982 = vmatprep.subr.mxu0 0.0
        %983 = vmatpush1.msra.mxu0 0.0
        %984 = vmatprep.subr.mxu0 0.0
        %985 = vmatpush1.msra.mxu0 0.0
        %986 = vmatprep.subr.mxu0 0.0
        %987 = vmatpush1.msra.mxu0 0.0
        %988 = vmatprep.subr.mxu0 0.0
        %989 = vmatpush1.msra.mxu0 0.0
        %990 = vmatprep.subr.mxu0 0.0
        %991 = vmatpush1.msra.mxu0 0.0
        %992 = vmatprep.subr.mxu0 0.0
        %993 = vmatpush1.msra.mxu0 0.0
        %994 = vmatprep.subr.mxu0 0.0
        %995 = vmatpush1.msra.mxu0 0.0
        %996 = vmatprep.subr.mxu0 0.0
        %997 = vmatpush1.msra.mxu0 0.0
        %998 = vmatprep.subr.mxu0 0.0
        %999 = vmatpush1.msra.mxu0 0.0
        %1000 = vmatprep.subr.mxu0 0.0
        %1001 = vmatpush1.msra.mxu0 0.0
        %1002 = vmatprep.subr.mxu0 0.0
        %1003 = vmatpush1.msra.mxu0 0.0
        %1004 = vmatprep.subr.mxu0 0.0
        %1005 = vmatpush1.msra.mxu0 0.0
        %1006 = vmatprep.subr.mxu0 0.0
        %1007 = vmatpush1.msra.mxu0 0.0
        %1008 = vmatprep.subr.mxu0 0.0
        %1009 = vmatpush1.msra.mxu0 0.0
        %1010 = vmatprep.subr.mxu0 0.0
        %1011 = vmatpush1.msra.mxu0 0.0
        %1012 = vmatprep.subr.mxu0 0.0
        %1013 = vmatpush1.msra.mxu0 0.0
        %1014 = vmatprep.subr.mxu0 0.0
        %1015 = vmatpush1.msra.mxu0 0.0
        %1016 = vmatprep.subr.mxu0 0.0
        %1017 = vmatpush1.msra.mxu0 0.0
        %1018 = vmatprep.subr.mxu0 0.0
        %1019 = vmatpush1.msra.mxu0 0.0
        %1020 = vmatprep.subr.mxu0 0.0
        %1021 = vmatpush1.msra.mxu0 0.0
        %1022 = vmatprep.subr.mxu0 0.0
        %1023 = vmatpush1.msra.mxu0 0.0
        %1024 = vmatprep.subr.mxu0 0.0
        %1025 = vmatpush1.msra.mxu0 0.0
        %1026 = vmatprep.subr.mxu0 0.0
        %1027 = vmatpush1.msra.mxu0 0.0
        %1028 = vmatprep.subr.mxu0 0.0
        %1029 = vmatpush1.msra.mxu0 0.0
        %1030 = vmatprep.subr.mxu0 0.0
        %1031 = vmatpush1.msra.mxu0 0.0
        %1032 = vmatprep.subr.mxu0 0.0
        %1033 = vmatpush1.msra.mxu0 0.0
        %1034 = vmatprep.subr.mxu0 0.0
        %1035 = vmatpush1.msra.mxu0 0.0
        %1036 = vmatprep.subr.mxu0 0.0
        %1037 = vmatpush1.msra.mxu0 0.0
        %1038 = vmatprep.subr.mxu0 0.0
        %1039 = vmatpush1.msra.mxu0 0.0
        %1040 = vmatprep.mubr.f32.mxu0 0.0
        %1041 = vmatmul.mubr.f32.gmra.mrb[0].mxu0 %v971
        %v1042 = vpop.f32.mrb[0].mxu0
        %v1043 = vadd.f32 0.0, %v1042
        %v1044 = vpop.f32.mrb[0].mxu0
        %1045 = vmatprep.mubr.f32.mxu0 0.0
        %1046 = vmatmul.mubr.f32.gmra.mrb[0].mxu0 %v974
        %v1047 = vpop.f32.mrb[0].mxu0
        %v1048 = vadd.f32 0.0, %v1047
        %v1049 = vpop.f32.mrb[0].mxu0
        %1050 = vdwg.mxu0
        %v1052 = vsel %vm321, %v299, 0
        %v1055 = vsel %vm321, %v300, 0
        %1057 = vmatprep.subr.mxu0 0.0
        %1058 = vmatpush1.msra.mxu0 %v307
        %1059 = vmatprep.subr.mxu0 0.0
        %1060 = vmatpush1.msra.mxu0 %v308
        %1061 = vmatprep.subr.mxu0 0.0
        %1062 = vmatpush1.msra.mxu0 0.0
        %1063 = vmatprep.subr.mxu0 0.0
        %1064 = vmatpush1.msra.mxu0 0.0
        %1065 = vmatprep.subr.mxu0 0.0
        %1066 = vmatpush1.msra.mxu0 0.0
        %1067 = vmatprep.subr.mxu0 0.0
        %1068 = vmatpush1.msra.mxu0 0.0
        %1069 = vmatprep.subr.mxu0 0.0
        %1070 = vmatpush1.msra.mxu0 0.0
        %1071 = vmatprep.subr.mxu0 0.0
        %1072 = vmatpush1.msra.mxu0 0.0
        %1073 = vmatprep.subr.mxu0 0.0
        %1074 = vmatpush1.msra.mxu0 0.0
        %1075 = vmatprep.subr.mxu0 0.0
        %1076 = vmatpush1.msra.mxu0 0.0
        %1077 = vmatprep.subr.mxu0 0.0
        %1078 = vmatpush1.msra.mxu0 0.0
        %1079 = vmatprep.subr.mxu0 0.0
        %1080 = vmatpush1.msra.mxu0 0.0
        %1081 = vmatprep.subr.mxu0 0.0
        %1082 = vmatpush1.msra.mxu0 0.0
        %1083 = vmatprep.subr.mxu0 0.0
        %1084 = vmatpush1.msra.mxu0 0.0
        %1085 = vmatprep.subr.mxu0 0.0
        %1086 = vmatpush1.msra.mxu0 0.0
        %1087 = vmatprep.subr.mxu0 0.0
        %1088 = vmatpush1.msra.mxu0 0.0
        %1089 = vmatprep.subr.mxu0 0.0
        %1090 = vmatpush1.msra.mxu0 0.0
        %1091 = vmatprep.subr.mxu0 0.0
        %1092 = vmatpush1.msra.mxu0 0.0
        %1093 = vmatprep.subr.mxu0 0.0
        %1094 = vmatpush1.msra.mxu0 0.0
        %1095 = vmatprep.subr.mxu0 0.0
        %1096 = vmatpush1.msra.mxu0 0.0
        %1097 = vmatprep.subr.mxu0 0.0
        %1098 = vmatpush1.msra.mxu0 0.0
        %1099 = vmatprep.subr.mxu0 0.0
        %1100 = vmatpush1.msra.mxu0 0.0
        %1101 = vmatprep.subr.mxu0 0.0
        %1102 = vmatpush1.msra.mxu0 0.0
        %1103 = vmatprep.subr.mxu0 0.0
        %1104 = vmatpush1.msra.mxu0 0.0
        %1105 = vmatprep.subr.mxu0 0.0
        %1106 = vmatpush1.msra.mxu0 0.0
        %1107 = vmatprep.subr.mxu0 0.0
        %1108 = vmatpush1.msra.mxu0 0.0
        %1109 = vmatprep.subr.mxu0 0.0
        %1110 = vmatpush1.msra.mxu0 0.0
        %1111 = vmatprep.subr.mxu0 0.0
        %1112 = vmatpush1.msra.mxu0 0.0
        %1113 = vmatprep.subr.mxu0 0.0
        %1114 = vmatpush1.msra.mxu0 0.0
        %1115 = vmatprep.subr.mxu0 0.0
        %1116 = vmatpush1.msra.mxu0 0.0
        %1117 = vmatprep.subr.mxu0 0.0
        %1118 = vmatpush1.msra.mxu0 0.0
        %1119 = vmatprep.subr.mxu0 0.0
        %1120 = vmatpush1.msra.mxu0 0.0
        %1121 = vmatprep.mubr.f32.mxu0 0.0
        %1122 = vmatmul.mubr.f32.gmra.mrb[0].mxu0 %v1052
        %v1123 = vpop.f32.mrb[0].mxu0
        %v1124 = vadd.f32 0.0, %v1123
        %v1125 = vpop.f32.mrb[0].mxu0
        %1126 = vmatprep.mubr.f32.mxu0 0.0
        %1127 = vmatmul.mubr.f32.gmra.mrb[0].mxu0 %v1055
        %v1128 = vpop.f32.mrb[0].mxu0
        %v1129 = vadd.f32 0.0, %v1128
        %v1130 = vpop.f32.mrb[0].mxu0
        %1131 = vdwg.mxu0
        %v1133 = vsel %vm321, %v301, 0
        %v1136 = vsel %vm321, %v302, 0
        %1138 = vmatprep.subr.mxu0 0.0
        %1139 = vmatpush1.msra.mxu0 %v309
        %1140 = vmatprep.subr.mxu0 0.0
        %1141 = vmatpush1.msra.mxu0 %v310
        %1142 = vmatprep.subr.mxu0 0.0
        %1143 = vmatpush1.msra.mxu0 0.0
        %1144 = vmatprep.subr.mxu0 0.0
        %1145 = vmatpush1.msra.mxu0 0.0
        %1146 = vmatprep.subr.mxu0 0.0
        %1147 = vmatpush1.msra.mxu0 0.0
        %1148 = vmatprep.subr.mxu0 0.0
        %1149 = vmatpush1.msra.mxu0 0.0
        %1150 = vmatprep.subr.mxu0 0.0
        %1151 = vmatpush1.msra.mxu0 0.0
        %1152 = vmatprep.subr.mxu0 0.0
        %1153 = vmatpush1.msra.mxu0 0.0
        %1154 = vmatprep.subr.mxu0 0.0
        %1155 = vmatpush1.msra.mxu0 0.0
        %1156 = vmatprep.subr.mxu0 0.0
        %1157 = vmatpush1.msra.mxu0 0.0
        %1158 = vmatprep.subr.mxu0 0.0
        %1159 = vmatpush1.msra.mxu0 0.0
        %1160 = vmatprep.subr.mxu0 0.0
        %1161 = vmatpush1.msra.mxu0 0.0
        %1162 = vmatprep.subr.mxu0 0.0
        %1163 = vmatpush1.msra.mxu0 0.0
        %1164 = vmatprep.subr.mxu0 0.0
        %1165 = vmatpush1.msra.mxu0 0.0
        %1166 = vmatprep.subr.mxu0 0.0
        %1167 = vmatpush1.msra.mxu0 0.0
        %1168 = vmatprep.subr.mxu0 0.0
        %1169 = vmatpush1.msra.mxu0 0.0
        %1170 = vmatprep.subr.mxu0 0.0
        %1171 = vmatpush1.msra.mxu0 0.0
        %1172 = vmatprep.subr.mxu0 0.0
        %1173 = vmatpush1.msra.mxu0 0.0
        %1174 = vmatprep.subr.mxu0 0.0
        %1175 = vmatpush1.msra.mxu0 0.0
        %1176 = vmatprep.subr.mxu0 0.0
        %1177 = vmatpush1.msra.mxu0 0.0
        %1178 = vmatprep.subr.mxu0 0.0
        %1179 = vmatpush1.msra.mxu0 0.0
        %1180 = vmatprep.subr.mxu0 0.0
        %1181 = vmatpush1.msra.mxu0 0.0
        %1182 = vmatprep.subr.mxu0 0.0
        %1183 = vmatpush1.msra.mxu0 0.0
        %1184 = vmatprep.subr.mxu0 0.0
        %1185 = vmatpush1.msra.mxu0 0.0
        %1186 = vmatprep.subr.mxu0 0.0
        %1187 = vmatpush1.msra.mxu0 0.0
        %1188 = vmatprep.subr.mxu0 0.0
        %1189 = vmatpush1.msra.mxu0 0.0
        %1190 = vmatprep.subr.mxu0 0.0
        %1191 = vmatpush1.msra.mxu0 0.0
        %1192 = vmatprep.subr.mxu0 0.0
        %1193 = vmatpush1.msra.mxu0 0.0
        %1194 = vmatprep.subr.mxu0 0.0
        %1195 = vmatpush1.msra.mxu0 0.0
        %1196 = vmatprep.subr.mxu0 0.0
        %1197 = vmatpush1.msra.mxu0 0.0
        %1198 = vmatprep.subr.mxu0 0.0
        %1199 = vmatpush1.msra.mxu0 0.0
        %1200 = vmatprep.subr.mxu0 0.0
        %1201 = vmatpush1.msra.mxu0 0.0
        %1202 = vmatprep.mubr.f32.mxu0 0.0
        %1203 = vmatmul.mubr.f32.gmra.mrb[0].mxu0 %v1133
        %v1204 = vpop.f32.mrb[0].mxu0
        %v1205 = vadd.f32 0.0, %v1204
        %v1206 = vpop.f32.mrb[0].mxu0
        %1207 = vmatprep.mubr.f32.mxu0 0.0
        %1208 = vmatmul.mubr.f32.gmra.mrb[0].mxu0 %v1136
        %v1209 = vpop.f32.mrb[0].mxu0
        %v1210 = vadd.f32 0.0, %v1209
        %v1211 = vpop.f32.mrb[0].mxu0
        %1212 = vdwg.mxu0
        %v1214 = vsel %vm321, %v303, 0
        %v1217 = vsel %vm321, %v304, 0
        %1219 = vmatprep.subr.mxu0 0.0
        %1220 = vmatpush1.msra.mxu0 %v311
        %1221 = vmatprep.subr.mxu0 0.0
        %1222 = vmatpush1.msra.mxu0 %v312
        %1223 = vmatprep.subr.mxu0 0.0
        %1224 = vmatpush1.msra.mxu0 0.0
        %1225 = vmatprep.subr.mxu0 0.0
        %1226 = vmatpush1.msra.mxu0 0.0
        %1227 = vmatprep.subr.mxu0 0.0
        %1228 = vmatpush1.msra.mxu0 0.0
        %1229 = vmatprep.subr.mxu0 0.0
        %1230 = vmatpush1.msra.mxu0 0.0
        %1231 = vmatprep.subr.mxu0 0.0
        %1232 = vmatpush1.msra.mxu0 0.0
        %1233 = vmatprep.subr.mxu0 0.0
        %1234 = vmatpush1.msra.mxu0 0.0
        %1235 = vmatprep.subr.mxu0 0.0
        %1236 = vmatpush1.msra.mxu0 0.0
        %1237 = vmatprep.subr.mxu0 0.0
        %1238 = vmatpush1.msra.mxu0 0.0
        %1239 = vmatprep.subr.mxu0 0.0
        %1240 = vmatpush1.msra.mxu0 0.0
        %1241 = vmatprep.subr.mxu0 0.0
        %1242 = vmatpush1.msra.mxu0 0.0
        %1243 = vmatprep.subr.mxu0 0.0
        %1244 = vmatpush1.msra.mxu0 0.0
        %1245 = vmatprep.subr.mxu0 0.0
        %1246 = vmatpush1.msra.mxu0 0.0
        %1247 = vmatprep.subr.mxu0 0.0
        %1248 = vmatpush1.msra.mxu0 0.0
        %1249 = vmatprep.subr.mxu0 0.0
        %1250 = vmatpush1.msra.mxu0 0.0
        %1251 = vmatprep.subr.mxu0 0.0
        %1252 = vmatpush1.msra.mxu0 0.0
        %1253 = vmatprep.subr.mxu0 0.0
        %1254 = vmatpush1.msra.mxu0 0.0
        %1255 = vmatprep.subr.mxu0 0.0
        %1256 = vmatpush1.msra.mxu0 0.0
        %1257 = vmatprep.subr.mxu0 0.0
        %1258 = vmatpush1.msra.mxu0 0.0
        %1259 = vmatprep.subr.mxu0 0.0
        %1260 = vmatpush1.msra.mxu0 0.0
        %1261 = vmatprep.subr.mxu0 0.0
        %1262 = vmatpush1.msra.mxu0 0.0
        %1263 = vmatprep.subr.mxu0 0.0
        %1264 = vmatpush1.msra.mxu0 0.0
        %1265 = vmatprep.subr.mxu0 0.0
        %1266 = vmatpush1.msra.mxu0 0.0
        %1267 = vmatprep.subr.mxu0 0.0
        %1268 = vmatpush1.msra.mxu0 0.0
        %1269 = vmatprep.subr.mxu0 0.0
        %1270 = vmatpush1.msra.mxu0 0.0
        %1271 = vmatprep.subr.mxu0 0.0
        %1272 = vmatpush1.msra.mxu0 0.0
        %1273 = vmatprep.subr.mxu0 0.0
        %1274 = vmatpush1.msra.mxu0 0.0
        %1275 = vmatprep.subr.mxu0 0.0
        %1276 = vmatpush1.msra.mxu0 0.0
        %1277 = vmatprep.subr.mxu0 0.0
        %1278 = vmatpush1.msra.mxu0 0.0
        %1279 = vmatprep.subr.mxu0 0.0
        %1280 = vmatpush1.msra.mxu0 0.0
        %1281 = vmatprep.subr.mxu0 0.0
        %1282 = vmatpush1.msra.mxu0 0.0
        %1283 = vmatprep.mubr.f32.mxu0 0.0
        %1284 = vmatmul.mubr.f32.gmra.mrb[0].mxu0 %v1214
        %v1285 = vpop.f32.mrb[0].mxu0
        %v1286 = vadd.f32 0.0, %v1285
        %v1287 = vpop.f32.mrb[0].mxu0
        %1288 = vmatprep.mubr.f32.mxu0 0.0
        %1289 = vmatmul.mubr.f32.gmra.mrb[0].mxu0 %v1217
        %v1290 = vpop.f32.mrb[0].mxu0
        %v1291 = vadd.f32 0.0, %v1290
        %v1292 = vpop.f32.mrb[0].mxu0
        %1293 = vdwg.mxu0
        %1294 = vmatprep.subr.mxu0 0.0
        %1295 = vmatpush1.msra.mxu0 %v1043
        %1296 = vmatprep.subr.mxu0 0.0
        %1297 = vmatpush1.msra.mxu0 %v1048
        %1298 = vmatprep.subr.mxu0 0.0
        %1299 = vmatpush1.msra.mxu0 0.0
        %1300 = vmatprep.subr.mxu0 0.0
        %1301 = vmatpush1.msra.mxu0 0.0
        %1302 = vmatprep.subr.mxu0 0.0
        %1303 = vmatpush1.msra.mxu0 0.0
        %1304 = vmatprep.subr.mxu0 0.0
        %1305 = vmatpush1.msra.mxu0 0.0
        %1306 = vmatprep.subr.mxu0 0.0
        %1307 = vmatpush1.msra.mxu0 0.0
        %1308 = vmatprep.subr.mxu0 0.0
        %1309 = vmatpush1.msra.mxu0 0.0
        %1310 = vmatprep.subr.mxu0 0.0
        %1311 = vmatpush1.msra.mxu0 0.0
        %1312 = vmatprep.subr.mxu0 0.0
        %1313 = vmatpush1.msra.mxu0 0.0
        %1314 = vmatprep.subr.mxu0 0.0
        %1315 = vmatpush1.msra.mxu0 0.0
        %1316 = vmatprep.subr.mxu0 0.0
        %1317 = vmatpush1.msra.mxu0 0.0
        %1318 = vmatprep.subr.mxu0 0.0
        %1319 = vmatpush1.msra.mxu0 0.0
        %1320 = vmatprep.subr.mxu0 0.0
        %1321 = vmatpush1.msra.mxu0 0.0
        %1322 = vmatprep.subr.mxu0 0.0
        %1323 = vmatpush1.msra.mxu0 0.0
        %1324 = vmatprep.subr.mxu0 0.0
        %1325 = vmatpush1.msra.mxu0 0.0
        %1326 = vmatprep.subr.mxu0 0.0
        %1327 = vmatpush1.msra.mxu0 0.0
        %1328 = vmatprep.subr.mxu0 0.0
        %1329 = vmatpush1.msra.mxu0 0.0
        %1330 = vmatprep.subr.mxu0 0.0
        %1331 = vmatpush1.msra.mxu0 0.0
        %1332 = vmatprep.subr.mxu0 0.0
        %1333 = vmatpush1.msra.mxu0 0.0
        %1334 = vmatprep.subr.mxu0 0.0
        %1335 = vmatpush1.msra.mxu0 0.0
        %1336 = vmatprep.subr.mxu0 0.0
        %1337 = vmatpush1.msra.mxu0 0.0
        %1338 = vmatprep.subr.mxu0 0.0
        %1339 = vmatpush1.msra.mxu0 0.0
        %1340 = vmatprep.subr.mxu0 0.0
        %1341 = vmatpush1.msra.mxu0 0.0
        %1342 = vmatprep.subr.mxu0 0.0
        %1343 = vmatpush1.msra.mxu0 0.0
        %1344 = vmatprep.subr.mxu0 0.0
        %1345 = vmatpush1.msra.mxu0 0.0
        %1346 = vmatprep.subr.mxu0 0.0
        %1347 = vmatpush1.msra.mxu0 0.0
        %1348 = vmatprep.subr.mxu0 0.0
        %1349 = vmatpush1.msra.mxu0 0.0
        %1350 = vmatprep.subr.mxu0 0.0
        %1351 = vmatpush1.msra.mxu0 0.0
        %1352 = vmatprep.subr.mxu0 0.0
        %1353 = vmatpush1.msra.mxu0 0.0
        %1354 = vmatprep.subr.mxu0 0.0
        %1355 = vmatpush1.msra.mxu0 0.0
        %1356 = vmatprep.subr.mxu0 0.0
        %1357 = vmatpush1.msra.mxu0 0.0
        %1358 = vmatprep.mubr.f32.mxu0 0.0
        %1359 = vmatmul.mubr.f32.gmra.mrb[0].mxu0 %v647
        %v1360 = vpop.f32.mrb[0].mxu0
        %v1361 = vadd.f32 0.0, %v1360
        %v1362 = vpop.f32.mrb[0].mxu0
        %1363 = vmatprep.mubr.f32.mxu0 0.0
        %1364 = vmatmul.mubr.f32.gmra.mrb[0].mxu0 %v650
        %v1365 = vpop.f32.mrb[0].mxu0
        %v1366 = vadd.f32 0.0, %v1365
        %v1367 = vpop.f32.mrb[0].mxu0
        %1368 = vdwg.mxu0
        %1369 = vmatprep.subr.mxu0 0.0
        %1370 = vmatpush1.msra.mxu0 %v1124
        %1371 = vmatprep.subr.mxu0 0.0
        %1372 = vmatpush1.msra.mxu0 %v1129
        %1373 = vmatprep.subr.mxu0 0.0
        %1374 = vmatpush1.msra.mxu0 0.0
        %1375 = vmatprep.subr.mxu0 0.0
        %1376 = vmatpush1.msra.mxu0 0.0
        %1377 = vmatprep.subr.mxu0 0.0
        %1378 = vmatpush1.msra.mxu0 0.0
        %1379 = vmatprep.subr.mxu0 0.0
        %1380 = vmatpush1.msra.mxu0 0.0
        %1381 = vmatprep.subr.mxu0 0.0
        %1382 = vmatpush1.msra.mxu0 0.0
        %1383 = vmatprep.subr.mxu0 0.0
        %1384 = vmatpush1.msra.mxu0 0.0
        %1385 = vmatprep.subr.mxu0 0.0
        %1386 = vmatpush1.msra.mxu0 0.0
        %1387 = vmatprep.subr.mxu0 0.0
        %1388 = vmatpush1.msra.mxu0 0.0
        %1389 = vmatprep.subr.mxu0 0.0
        %1390 = vmatpush1.msra.mxu0 0.0
        %1391 = vmatprep.subr.mxu0 0.0
        %1392 = vmatpush1.msra.mxu0 0.0
        %1393 = vmatprep.subr.mxu0 0.0
        %1394 = vmatpush1.msra.mxu0 0.0
        %1395 = vmatprep.subr.mxu0 0.0
        %1396 = vmatpush1.msra.mxu0 0.0
        %1397 = vmatprep.subr.mxu0 0.0
        %1398 = vmatpush1.msra.mxu0 0.0
        %1399 = vmatprep.subr.mxu0 0.0
        %1400 = vmatpush1.msra.mxu0 0.0
        %1401 = vmatprep.subr.mxu0 0.0
        %1402 = vmatpush1.msra.mxu0 0.0
        %1403 = vmatprep.subr.mxu0 0.0
        %1404 = vmatpush1.msra.mxu0 0.0
        %1405 = vmatprep.subr.mxu0 0.0
        %1406 = vmatpush1.msra.mxu0 0.0
        %1407 = vmatprep.subr.mxu0 0.0
        %1408 = vmatpush1.msra.mxu0 0.0
        %1409 = vmatprep.subr.mxu0 0.0
        %1410 = vmatpush1.msra.mxu0 0.0
        %1411 = vmatprep.subr.mxu0 0.0
        %1412 = vmatpush1.msra.mxu0 0.0
        %1413 = vmatprep.subr.mxu0 0.0
        %1414 = vmatpush1.msra.mxu0 0.0
        %1415 = vmatprep.subr.mxu0 0.0
        %1416 = vmatpush1.msra.mxu0 0.0
        %1417 = vmatprep.subr.mxu0 0.0
        %1418 = vmatpush1.msra.mxu0 0.0
        %1419 = vmatprep.subr.mxu0 0.0
        %1420 = vmatpush1.msra.mxu0 0.0
        %1421 = vmatprep.subr.mxu0 0.0
        %1422 = vmatpush1.msra.mxu0 0.0
        %1423 = vmatprep.subr.mxu0 0.0
        %1424 = vmatpush1.msra.mxu0 0.0
        %1425 = vmatprep.subr.mxu0 0.0
        %1426 = vmatpush1.msra.mxu0 0.0
        %1427 = vmatprep.subr.mxu0 0.0
        %1428 = vmatpush1.msra.mxu0 0.0
        %1429 = vmatprep.subr.mxu0 0.0
        %1430 = vmatpush1.msra.mxu0 0.0
        %1431 = vmatprep.subr.mxu0 0.0
        %1432 = vmatpush1.msra.mxu0 0.0
        %1433 = vmatprep.mubr.f32.mxu0 0.0
        %1434 = vmatmul.mubr.f32.gmra.mrb[0].mxu0 %v728
        %v1435 = vpop.f32.mrb[0].mxu0
        %v1436 = vadd.f32 0.0, %v1435
        %v1437 = vpop.f32.mrb[0].mxu0
        %1438 = vmatprep.mubr.f32.mxu0 0.0
        %1439 = vmatmul.mubr.f32.gmra.mrb[0].mxu0 %v731
        %v1440 = vpop.f32.mrb[0].mxu0
        %v1441 = vadd.f32 0.0, %v1440
        %v1442 = vpop.f32.mrb[0].mxu0
        %1443 = vdwg.mxu0
        %1444 = vmatprep.subr.mxu0 0.0
        %1445 = vmatpush1.msra.mxu0 %v1205
        %1446 = vmatprep.subr.mxu0 0.0
        %1447 = vmatpush1.msra.mxu0 %v1210
        %1448 = vmatprep.subr.mxu0 0.0
        %1449 = vmatpush1.msra.mxu0 0.0
        %1450 = vmatprep.subr.mxu0 0.0
        %1451 = vmatpush1.msra.mxu0 0.0
        %1452 = vmatprep.subr.mxu0 0.0
        %1453 = vmatpush1.msra.mxu0 0.0
        %1454 = vmatprep.subr.mxu0 0.0
        %1455 = vmatpush1.msra.mxu0 0.0
        %1456 = vmatprep.subr.mxu0 0.0
        %1457 = vmatpush1.msra.mxu0 0.0
        %1458 = vmatprep.subr.mxu0 0.0
        %1459 = vmatpush1.msra.mxu0 0.0
        %1460 = vmatprep.subr.mxu0 0.0
        %1461 = vmatpush1.msra.mxu0 0.0
        %1462 = vmatprep.subr.mxu0 0.0
        %1463 = vmatpush1.msra.mxu0 0.0
        %1464 = vmatprep.subr.mxu0 0.0
        %1465 = vmatpush1.msra.mxu0 0.0
        %1466 = vmatprep.subr.mxu0 0.0
        %1467 = vmatpush1.msra.mxu0 0.0
        %1468 = vmatprep.subr.mxu0 0.0
        %1469 = vmatpush1.msra.mxu0 0.0
        %1470 = vmatprep.subr.mxu0 0.0
        %1471 = vmatpush1.msra.mxu0 0.0
        %1472 = vmatprep.subr.mxu0 0.0
        %1473 = vmatpush1.msra.mxu0 0.0
        %1474 = vmatprep.subr.mxu0 0.0
        %1475 = vmatpush1.msra.mxu0 0.0
        %1476 = vmatprep.subr.mxu0 0.0
        %1477 = vmatpush1.msra.mxu0 0.0
        %1478 = vmatprep.subr.mxu0 0.0
        %1479 = vmatpush1.msra.mxu0 0.0
        %1480 = vmatprep.subr.mxu0 0.0
        %1481 = vmatpush1.msra.mxu0 0.0
        %1482 = vmatprep.subr.mxu0 0.0
        %1483 = vmatpush1.msra.mxu0 0.0
        %1484 = vmatprep.subr.mxu0 0.0
        %1485 = vmatpush1.msra.mxu0 0.0
        %1486 = vmatprep.subr.mxu0 0.0
        %1487 = vmatpush1.msra.mxu0 0.0
        %1488 = vmatprep.subr.mxu0 0.0
        %1489 = vmatpush1.msra.mxu0 0.0
        %1490 = vmatprep.subr.mxu0 0.0
        %1491 = vmatpush1.msra.mxu0 0.0
        %1492 = vmatprep.subr.mxu0 0.0
        %1493 = vmatpush1.msra.mxu0 0.0
        %1494 = vmatprep.subr.mxu0 0.0
        %1495 = vmatpush1.msra.mxu0 0.0
        %1496 = vmatprep.subr.mxu0 0.0
        %1497 = vmatpush1.msra.mxu0 0.0
        %1498 = vmatprep.subr.mxu0 0.0
        %1499 = vmatpush1.msra.mxu0 0.0
        %1500 = vmatprep.subr.mxu0 0.0
        %1501 = vmatpush1.msra.mxu0 0.0
        %1502 = vmatprep.subr.mxu0 0.0
        %1503 = vmatpush1.msra.mxu0 0.0
        %1504 = vmatprep.subr.mxu0 0.0
        %1505 = vmatpush1.msra.mxu0 0.0
        %1506 = vmatprep.subr.mxu0 0.0
        %1507 = vmatpush1.msra.mxu0 0.0
        %1508 = vmatprep.mubr.f32.mxu0 0.0
        %1509 = vmatmul.mubr.f32.gmra.mrb[0].mxu0 %v809
        %v1510 = vpop.f32.mrb[0].mxu0
        %v1511 = vadd.f32 0.0, %v1510
        %v1512 = vpop.f32.mrb[0].mxu0
        %1513 = vmatprep.mubr.f32.mxu0 0.0
        %1514 = vmatmul.mubr.f32.gmra.mrb[0].mxu0 %v812
        %v1515 = vpop.f32.mrb[0].mxu0
        %v1516 = vadd.f32 0.0, %v1515
        %v1517 = vpop.f32.mrb[0].mxu0
        %1518 = vdwg.mxu0
        %1519 = vmatprep.subr.mxu0 0.0
        %1520 = vmatpush1.msra.mxu0 %v1286
        %1521 = vmatprep.subr.mxu0 0.0
        %1522 = vmatpush1.msra.mxu0 %v1291
        %1523 = vmatprep.subr.mxu0 0.0
        %1524 = vmatpush1.msra.mxu0 0.0
        %1525 = vmatprep.subr.mxu0 0.0
        %1526 = vmatpush1.msra.mxu0 0.0
        %1527 = vmatprep.subr.mxu0 0.0
        %1528 = vmatpush1.msra.mxu0 0.0
        %1529 = vmatprep.subr.mxu0 0.0
        %1530 = vmatpush1.msra.mxu0 0.0
        %1531 = vmatprep.subr.mxu0 0.0
        %1532 = vmatpush1.msra.mxu0 0.0
        %1533 = vmatprep.subr.mxu0 0.0
        %1534 = vmatpush1.msra.mxu0 0.0
        %1535 = vmatprep.subr.mxu0 0.0
        %1536 = vmatpush1.msra.mxu0 0.0
        %1537 = vmatprep.subr.mxu0 0.0
        %1538 = vmatpush1.msra.mxu0 0.0
        %1539 = vmatprep.subr.mxu0 0.0
        %1540 = vmatpush1.msra.mxu0 0.0
        %1541 = vmatprep.subr.mxu0 0.0
        %1542 = vmatpush1.msra.mxu0 0.0
        %1543 = vmatprep.subr.mxu0 0.0
        %1544 = vmatpush1.msra.mxu0 0.0
        %1545 = vmatprep.subr.mxu0 0.0
        %1546 = vmatpush1.msra.mxu0 0.0
        %1547 = vmatprep.subr.mxu0 0.0
        %1548 = vmatpush1.msra.mxu0 0.0
        %1549 = vmatprep.subr.mxu0 0.0
        %1550 = vmatpush1.msra.mxu0 0.0
        %1551 = vmatprep.subr.mxu0 0.0
        %1552 = vmatpush1.msra.mxu0 0.0
        %1553 = vmatprep.subr.mxu0 0.0
        %1554 = vmatpush1.msra.mxu0 0.0
        %1555 = vmatprep.subr.mxu0 0.0
        %1556 = vmatpush1.msra.mxu0 0.0
        %1557 = vmatprep.subr.mxu0 0.0
        %1558 = vmatpush1.msra.mxu0 0.0
        %1559 = vmatprep.subr.mxu0 0.0
        %1560 = vmatpush1.msra.mxu0 0.0
        %1561 = vmatprep.subr.mxu0 0.0
        %1562 = vmatpush1.msra.mxu0 0.0
        %1563 = vmatprep.subr.mxu0 0.0
        %1564 = vmatpush1.msra.mxu0 0.0
        %1565 = vmatprep.subr.mxu0 0.0
        %1566 = vmatpush1.msra.mxu0 0.0
        %1567 = vmatprep.subr.mxu0 0.0
        %1568 = vmatpush1.msra.mxu0 0.0
        %1569 = vmatprep.subr.mxu0 0.0
        %1570 = vmatpush1.msra.mxu0 0.0
        %1571 = vmatprep.subr.mxu0 0.0
        %1572 = vmatpush1.msra.mxu0 0.0
        %1573 = vmatprep.subr.mxu0 0.0
        %1574 = vmatpush1.msra.mxu0 0.0
        %1575 = vmatprep.subr.mxu0 0.0
        %1576 = vmatpush1.msra.mxu0 0.0
        %1577 = vmatprep.subr.mxu0 0.0
        %1578 = vmatpush1.msra.mxu0 0.0
        %1579 = vmatprep.subr.mxu0 0.0
        %1580 = vmatpush1.msra.mxu0 0.0
        %1581 = vmatprep.subr.mxu0 0.0
        %1582 = vmatpush1.msra.mxu0 0.0
        %1583 = vmatprep.mubr.f32.mxu0 0.0
        %1584 = vmatmul.mubr.f32.gmra.mrb[0].mxu0 %v890
        %v1585 = vpop.f32.mrb[0].mxu0
        %v1586 = vadd.f32 0.0, %v1585
        %v1587 = vpop.f32.mrb[0].mxu0
        %1588 = vmatprep.mubr.f32.mxu0 0.0
        %1589 = vmatmul.mubr.f32.gmra.mrb[0].mxu0 %v893
        %v1590 = vpop.f32.mrb[0].mxu0
        %v1591 = vadd.f32 0.0, %v1590
        %v1592 = vpop.f32.mrb[0].mxu0
        %1593 = vdwg.mxu0
        %v1594 = vmul.f32 %v289, %v289
        %v1595 = vmul.f32 %v290, %v290
        %v1596 = vmul.f32 %v291, %v291
        %v1597 = vmul.f32 %v292, %v292
        %v1598 = vmul.f32 %v293, %v293
        %v1599 = vmul.f32 %v294, %v294
        %v1600 = vmul.f32 %v295, %v295
        %v1601 = vmul.f32 %v296, %v296
        %v1603 = vsel %vm321, %v1594, 0
        %v1606 = vsel %vm321, %v1595, 0
        %1608 = vmatprep.subr.mxu0 0.0
        %1609 = vmatpush1.msra.mxu0 %v305
        %1610 = vmatprep.subr.mxu0 0.0
        %1611 = vmatpush1.msra.mxu0 %v306
        %1612 = vmatprep.subr.mxu0 0.0
        %1613 = vmatpush1.msra.mxu0 0.0
        %1614 = vmatprep.subr.mxu0 0.0
        %1615 = vmatpush1.msra.mxu0 0.0
        %1616 = vmatprep.subr.mxu0 0.0
        %1617 = vmatpush1.msra.mxu0 0.0
        %1618 = vmatprep.subr.mxu0 0.0
        %1619 = vmatpush1.msra.mxu0 0.0
        %1620 = vmatprep.subr.mxu0 0.0
        %1621 = vmatpush1.msra.mxu0 0.0
        %1622 = vmatprep.subr.mxu0 0.0
        %1623 = vmatpush1.msra.mxu0 0.0
        %1624 = vmatprep.subr.mxu0 0.0
        %1625 = vmatpush1.msra.mxu0 0.0
        %1626 = vmatprep.subr.mxu0 0.0
        %1627 = vmatpush1.msra.mxu0 0.0
        %1628 = vmatprep.subr.mxu0 0.0
        %1629 = vmatpush1.msra.mxu0 0.0
        %1630 = vmatprep.subr.mxu0 0.0
        %1631 = vmatpush1.msra.mxu0 0.0
        %1632 = vmatprep.subr.mxu0 0.0
        %1633 = vmatpush1.msra.mxu0 0.0
        %1634 = vmatprep.subr.mxu0 0.0
        %1635 = vmatpush1.msra.mxu0 0.0
        %1636 = vmatprep.subr.mxu0 0.0
        %1637 = vmatpush1.msra.mxu0 0.0
        %1638 = vmatprep.subr.mxu0 0.0
        %1639 = vmatpush1.msra.mxu0 0.0
        %1640 = vmatprep.subr.mxu0 0.0
        %1641 = vmatpush1.msra.mxu0 0.0
        %1642 = vmatprep.subr.mxu0 0.0
        %1643 = vmatpush1.msra.mxu0 0.0
        %1644 = vmatprep.subr.mxu0 0.0
        %1645 = vmatpush1.msra.mxu0 0.0
        %1646 = vmatprep.subr.mxu0 0.0
        %1647 = vmatpush1.msra.mxu0 0.0
        %1648 = vmatprep.subr.mxu0 0.0
        %1649 = vmatpush1.msra.mxu0 0.0
        %1650 = vmatprep.subr.mxu0 0.0
        %1651 = vmatpush1.msra.mxu0 0.0
        %1652 = vmatprep.subr.mxu0 0.0
        %1653 = vmatpush1.msra.mxu0 0.0
        %1654 = vmatprep.subr.mxu0 0.0
        %1655 = vmatpush1.msra.mxu0 0.0
        %1656 = vmatprep.subr.mxu0 0.0
        %1657 = vmatpush1.msra.mxu0 0.0
        %1658 = vmatprep.subr.mxu0 0.0
        %1659 = vmatpush1.msra.mxu0 0.0
        %1660 = vmatprep.subr.mxu0 0.0
        %1661 = vmatpush1.msra.mxu0 0.0
        %1662 = vmatprep.subr.mxu0 0.0
        %1663 = vmatpush1.msra.mxu0 0.0
        %1664 = vmatprep.subr.mxu0 0.0
        %1665 = vmatpush1.msra.mxu0 0.0
        %1666 = vmatprep.subr.mxu0 0.0
        %1667 = vmatpush1.msra.mxu0 0.0
        %1668 = vmatprep.subr.mxu0 0.0
        %1669 = vmatpush1.msra.mxu0 0.0
        %1670 = vmatprep.subr.mxu0 0.0
        %1671 = vmatpush1.msra.mxu0 0.0
        %1672 = vmatprep.mubr.f32.mxu0 0.0
        %1673 = vmatmul.mubr.f32.gmra.mrb[0].mxu0 %v1603
        %v1674 = vpop.f32.mrb[0].mxu0
        %v1675 = vadd.f32 0.0, %v1674
        %v1676 = vpop.f32.mrb[0].mxu0
        %1677 = vmatprep.mubr.f32.mxu0 0.0
        %1678 = vmatmul.mubr.f32.gmra.mrb[0].mxu0 %v1606
        %v1679 = vpop.f32.mrb[0].mxu0
        %v1680 = vadd.f32 0.0, %v1679
        %v1681 = vpop.f32.mrb[0].mxu0
        %1682 = vdwg.mxu0
        %v1684 = vsel %vm321, %v1596, 0
        %v1687 = vsel %vm321, %v1597, 0
        %1689 = vmatprep.subr.mxu0 0.0
        %1690 = vmatpush1.msra.mxu0 %v307
        %1691 = vmatprep.subr.mxu0 0.0
        %1692 = vmatpush1.msra.mxu0 %v308
        %1693 = vmatprep.subr.mxu0 0.0
        %1694 = vmatpush1.msra.mxu0 0.0
        %1695 = vmatprep.subr.mxu0 0.0
        %1696 = vmatpush1.msra.mxu0 0.0
        %1697 = vmatprep.subr.mxu0 0.0
        %1698 = vmatpush1.msra.mxu0 0.0
        %1699 = vmatprep.subr.mxu0 0.0
        %1700 = vmatpush1.msra.mxu0 0.0
        %1701 = vmatprep.subr.mxu0 0.0
        %1702 = vmatpush1.msra.mxu0 0.0
        %1703 = vmatprep.subr.mxu0 0.0
        %1704 = vmatpush1.msra.mxu0 0.0
        %1705 = vmatprep.subr.mxu0 0.0
        %1706 = vmatpush1.msra.mxu0 0.0
        %1707 = vmatprep.subr.mxu0 0.0
        %1708 = vmatpush1.msra.mxu0 0.0
        %1709 = vmatprep.subr.mxu0 0.0
        %1710 = vmatpush1.msra.mxu0 0.0
        %1711 = vmatprep.subr.mxu0 0.0
        %1712 = vmatpush1.msra.mxu0 0.0
        %1713 = vmatprep.subr.mxu0 0.0
        %1714 = vmatpush1.msra.mxu0 0.0
        %1715 = vmatprep.subr.mxu0 0.0
        %1716 = vmatpush1.msra.mxu0 0.0
        %1717 = vmatprep.subr.mxu0 0.0
        %1718 = vmatpush1.msra.mxu0 0.0
        %1719 = vmatprep.subr.mxu0 0.0
        %1720 = vmatpush1.msra.mxu0 0.0
        %1721 = vmatprep.subr.mxu0 0.0
        %1722 = vmatpush1.msra.mxu0 0.0
        %1723 = vmatprep.subr.mxu0 0.0
        %1724 = vmatpush1.msra.mxu0 0.0
        %1725 = vmatprep.subr.mxu0 0.0
        %1726 = vmatpush1.msra.mxu0 0.0
        %1727 = vmatprep.subr.mxu0 0.0
        %1728 = vmatpush1.msra.mxu0 0.0
        %1729 = vmatprep.subr.mxu0 0.0
        %1730 = vmatpush1.msra.mxu0 0.0
        %1731 = vmatprep.subr.mxu0 0.0
        %1732 = vmatpush1.msra.mxu0 0.0
        %1733 = vmatprep.subr.mxu0 0.0
        %1734 = vmatpush1.msra.mxu0 0.0
        %1735 = vmatprep.subr.mxu0 0.0
        %1736 = vmatpush1.msra.mxu0 0.0
        %1737 = vmatprep.subr.mxu0 0.0
        %1738 = vmatpush1.msra.mxu0 0.0
        %1739 = vmatprep.subr.mxu0 0.0
        %1740 = vmatpush1.msra.mxu0 0.0
        %1741 = vmatprep.subr.mxu0 0.0
        %1742 = vmatpush1.msra.mxu0 0.0
        %1743 = vmatprep.subr.mxu0 0.0
        %1744 = vmatpush1.msra.mxu0 0.0
        %1745 = vmatprep.subr.mxu0 0.0
        %1746 = vmatpush1.msra.mxu0 0.0
        %1747 = vmatprep.subr.mxu0 0.0
        %1748 = vmatpush1.msra.mxu0 0.0
        %1749 = vmatprep.subr.mxu0 0.0
        %1750 = vmatpush1.msra.mxu0 0.0
        %1751 = vmatprep.subr.mxu0 0.0
        %1752 = vmatpush1.msra.mxu0 0.0
        %1753 = vmatprep.mubr.f32.mxu0 0.0
        %1754 = vmatmul.mubr.f32.gmra.mrb[0].mxu0 %v1684
        %v1755 = vpop.f32.mrb[0].mxu0
        %v1756 = vadd.f32 0.0, %v1755
        %v1757 = vpop.f32.mrb[0].mxu0
        %1758 = vmatprep.mubr.f32.mxu0 0.0
        %1759 = vmatmul.mubr.f32.gmra.mrb[0].mxu0 %v1687
        %v1760 = vpop.f32.mrb[0].mxu0
        %v1761 = vadd.f32 0.0, %v1760
        %v1762 = vpop.f32.mrb[0].mxu0
        %1763 = vdwg.mxu0
        %v1765 = vsel %vm321, %v1598, 0
        %v1768 = vsel %vm321, %v1599, 0
        %1770 = vmatprep.subr.mxu0 0.0
        %1771 = vmatpush1.msra.mxu0 %v309
        %1772 = vmatprep.subr.mxu0 0.0
        %1773 = vmatpush1.msra.mxu0 %v310
        %1774 = vmatprep.subr.mxu0 0.0
        %1775 = vmatpush1.msra.mxu0 0.0
        %1776 = vmatprep.subr.mxu0 0.0
        %1777 = vmatpush1.msra.mxu0 0.0
        %1778 = vmatprep.subr.mxu0 0.0
        %1779 = vmatpush1.msra.mxu0 0.0
        %1780 = vmatprep.subr.mxu0 0.0
        %1781 = vmatpush1.msra.mxu0 0.0
        %1782 = vmatprep.subr.mxu0 0.0
        %1783 = vmatpush1.msra.mxu0 0.0
        %1784 = vmatprep.subr.mxu0 0.0
        %1785 = vmatpush1.msra.mxu0 0.0
        %1786 = vmatprep.subr.mxu0 0.0
        %1787 = vmatpush1.msra.mxu0 0.0
        %1788 = vmatprep.subr.mxu0 0.0
        %1789 = vmatpush1.msra.mxu0 0.0
        %1790 = vmatprep.subr.mxu0 0.0
        %1791 = vmatpush1.msra.mxu0 0.0
        %1792 = vmatprep.subr.mxu0 0.0
        %1793 = vmatpush1.msra.mxu0 0.0
        %1794 = vmatprep.subr.mxu0 0.0
        %1795 = vmatpush1.msra.mxu0 0.0
        %1796 = vmatprep.subr.mxu0 0.0
        %1797 = vmatpush1.msra.mxu0 0.0
        %1798 = vmatprep.subr.mxu0 0.0
        %1799 = vmatpush1.msra.mxu0 0.0
        %1800 = vmatprep.subr.mxu0 0.0
        %1801 = vmatpush1.msra.mxu0 0.0
        %1802 = vmatprep.subr.mxu0 0.0
        %1803 = vmatpush1.msra.mxu0 0.0
        %1804 = vmatprep.subr.mxu0 0.0
        %1805 = vmatpush1.msra.mxu0 0.0
        %1806 = vmatprep.subr.mxu0 0.0
        %1807 = vmatpush1.msra.mxu0 0.0
        %1808 = vmatprep.subr.mxu0 0.0
        %1809 = vmatpush1.msra.mxu0 0.0
        %1810 = vmatprep.subr.mxu0 0.0
        %1811 = vmatpush1.msra.mxu0 0.0
        %1812 = vmatprep.subr.mxu0 0.0
        %1813 = vmatpush1.msra.mxu0 0.0
        %1814 = vmatprep.subr.mxu0 0.0
        %1815 = vmatpush1.msra.mxu0 0.0
        %1816 = vmatprep.subr.mxu0 0.0
        %1817 = vmatpush1.msra.mxu0 0.0
        %1818 = vmatprep.subr.mxu0 0.0
        %1819 = vmatpush1.msra.mxu0 0.0
        %1820 = vmatprep.subr.mxu0 0.0
        %1821 = vmatpush1.msra.mxu0 0.0
        %1822 = vmatprep.subr.mxu0 0.0
        %1823 = vmatpush1.msra.mxu0 0.0
        %1824 = vmatprep.subr.mxu0 0.0
        %1825 = vmatpush1.msra.mxu0 0.0
        %1826 = vmatprep.subr.mxu0 0.0
        %1827 = vmatpush1.msra.mxu0 0.0
        %1828 = vmatprep.subr.mxu0 0.0
        %1829 = vmatpush1.msra.mxu0 0.0
        %1830 = vmatprep.subr.mxu0 0.0
        %1831 = vmatpush1.msra.mxu0 0.0
        %1832 = vmatprep.subr.mxu0 0.0
        %1833 = vmatpush1.msra.mxu0 0.0
        %1834 = vmatprep.mubr.f32.mxu0 0.0
        %1835 = vmatmul.mubr.f32.gmra.mrb[0].mxu0 %v1765
        %v1836 = vpop.f32.mrb[0].mxu0
        %v1837 = vadd.f32 0.0, %v1836
        %v1838 = vpop.f32.mrb[0].mxu0
        %1839 = vmatprep.mubr.f32.mxu0 0.0
        %1840 = vmatmul.mubr.f32.gmra.mrb[0].mxu0 %v1768
        %v1841 = vpop.f32.mrb[0].mxu0
        %v1842 = vadd.f32 0.0, %v1841
        %v1843 = vpop.f32.mrb[0].mxu0
        %1844 = vdwg.mxu0
        %v1846 = vsel %vm321, %v1600, 0
        %v1849 = vsel %vm321, %v1601, 0
        %1851 = vmatprep.subr.mxu0 0.0
        %1852 = vmatpush1.msra.mxu0 %v311
        %1853 = vmatprep.subr.mxu0 0.0
        %1854 = vmatpush1.msra.mxu0 %v312
        %1855 = vmatprep.subr.mxu0 0.0
        %1856 = vmatpush1.msra.mxu0 0.0
        %1857 = vmatprep.subr.mxu0 0.0
        %1858 = vmatpush1.msra.mxu0 0.0
        %1859 = vmatprep.subr.mxu0 0.0
        %1860 = vmatpush1.msra.mxu0 0.0
        %1861 = vmatprep.subr.mxu0 0.0
        %1862 = vmatpush1.msra.mxu0 0.0
        %1863 = vmatprep.subr.mxu0 0.0
        %1864 = vmatpush1.msra.mxu0 0.0
        %1865 = vmatprep.subr.mxu0 0.0
        %1866 = vmatpush1.msra.mxu0 0.0
        %1867 = vmatprep.subr.mxu0 0.0
        %1868 = vmatpush1.msra.mxu0 0.0
        %1869 = vmatprep.subr.mxu0 0.0
        %1870 = vmatpush1.msra.mxu0 0.0
        %1871 = vmatprep.subr.mxu0 0.0
        %1872 = vmatpush1.msra.mxu0 0.0
        %1873 = vmatprep.subr.mxu0 0.0
        %1874 = vmatpush1.msra.mxu0 0.0
        %1875 = vmatprep.subr.mxu0 0.0
        %1876 = vmatpush1.msra.mxu0 0.0
        %1877 = vmatprep.subr.mxu0 0.0
        %1878 = vmatpush1.msra.mxu0 0.0
        %1879 = vmatprep.subr.mxu0 0.0
        %1880 = vmatpush1.msra.mxu0 0.0
        %1881 = vmatprep.subr.mxu0 0.0
        %1882 = vmatpush1.msra.mxu0 0.0
        %1883 = vmatprep.subr.mxu0 0.0
        %1884 = vmatpush1.msra.mxu0 0.0
        %1885 = vmatprep.subr.mxu0 0.0
        %1886 = vmatpush1.msra.mxu0 0.0
        %1887 = vmatprep.subr.mxu0 0.0
        %1888 = vmatpush1.msra.mxu0 0.0
        %1889 = vmatprep.subr.mxu0 0.0
        %1890 = vmatpush1.msra.mxu0 0.0
        %1891 = vmatprep.subr.mxu0 0.0
        %1892 = vmatpush1.msra.mxu0 0.0
        %1893 = vmatprep.subr.mxu0 0.0
        %1894 = vmatpush1.msra.mxu0 0.0
        %1895 = vmatprep.subr.mxu0 0.0
        %1896 = vmatpush1.msra.mxu0 0.0
        %1897 = vmatprep.subr.mxu0 0.0
        %1898 = vmatpush1.msra.mxu0 0.0
        %1899 = vmatprep.subr.mxu0 0.0
        %1900 = vmatpush1.msra.mxu0 0.0
        %1901 = vmatprep.subr.mxu0 0.0
        %1902 = vmatpush1.msra.mxu0 0.0
        %1903 = vmatprep.subr.mxu0 0.0
        %1904 = vmatpush1.msra.mxu0 0.0
        %1905 = vmatprep.subr.mxu0 0.0
        %1906 = vmatpush1.msra.mxu0 0.0
        %1907 = vmatprep.subr.mxu0 0.0
        %1908 = vmatpush1.msra.mxu0 0.0
        %1909 = vmatprep.subr.mxu0 0.0
        %1910 = vmatpush1.msra.mxu0 0.0
        %1911 = vmatprep.subr.mxu0 0.0
        %1912 = vmatpush1.msra.mxu0 0.0
        %1913 = vmatprep.subr.mxu0 0.0
        %1914 = vmatpush1.msra.mxu0 0.0
        %1915 = vmatprep.mubr.f32.mxu0 0.0
        %1916 = vmatmul.mubr.f32.gmra.mrb[0].mxu0 %v1846
        %v1917 = vpop.f32.mrb[0].mxu0
        %v1918 = vadd.f32 0.0, %v1917
        %v1919 = vpop.f32.mrb[0].mxu0
        %1920 = vmatprep.mubr.f32.mxu0 0.0
        %1921 = vmatmul.mubr.f32.gmra.mrb[0].mxu0 %v1849
        %v1922 = vpop.f32.mrb[0].mxu0
        %v1923 = vadd.f32 0.0, %v1922
        %v1924 = vpop.f32.mrb[0].mxu0
        %1925 = vdwg.mxu0
        %1926 = vmatprep.subr.mxu0 0.0
        %1927 = vmatpush1.msra.mxu0 %v1675
        %1928 = vmatprep.subr.mxu0 0.0
        %1929 = vmatpush1.msra.mxu0 %v1680
        %1930 = vmatprep.subr.mxu0 0.0
        %1931 = vmatpush1.msra.mxu0 0.0
        %1932 = vmatprep.subr.mxu0 0.0
        %1933 = vmatpush1.msra.mxu0 0.0
        %1934 = vmatprep.subr.mxu0 0.0
        %1935 = vmatpush1.msra.mxu0 0.0
        %1936 = vmatprep.subr.mxu0 0.0
        %1937 = vmatpush1.msra.mxu0 0.0
        %1938 = vmatprep.subr.mxu0 0.0
        %1939 = vmatpush1.msra.mxu0 0.0
        %1940 = vmatprep.subr.mxu0 0.0
        %1941 = vmatpush1.msra.mxu0 0.0
        %1942 = vmatprep.subr.mxu0 0.0
        %1943 = vmatpush1.msra.mxu0 0.0
        %1944 = vmatprep.subr.mxu0 0.0
        %1945 = vmatpush1.msra.mxu0 0.0
        %1946 = vmatprep.subr.mxu0 0.0
        %1947 = vmatpush1.msra.mxu0 0.0
        %1948 = vmatprep.subr.mxu0 0.0
        %1949 = vmatpush1.msra.mxu0 0.0
        %1950 = vmatprep.subr.mxu0 0.0
        %1951 = vmatpush1.msra.mxu0 0.0
        %1952 = vmatprep.subr.mxu0 0.0
        %1953 = vmatpush1.msra.mxu0 0.0
        %1954 = vmatprep.subr.mxu0 0.0
        %1955 = vmatpush1.msra.mxu0 0.0
        %1956 = vmatprep.subr.mxu0 0.0
        %1957 = vmatpush1.msra.mxu0 0.0
        %1958 = vmatprep.subr.mxu0 0.0
        %1959 = vmatpush1.msra.mxu0 0.0
        %1960 = vmatprep.subr.mxu0 0.0
        %1961 = vmatpush1.msra.mxu0 0.0
        %1962 = vmatprep.subr.mxu0 0.0
        %1963 = vmatpush1.msra.mxu0 0.0
        %1964 = vmatprep.subr.mxu0 0.0
        %1965 = vmatpush1.msra.mxu0 0.0
        %1966 = vmatprep.subr.mxu0 0.0
        %1967 = vmatpush1.msra.mxu0 0.0
        %1968 = vmatprep.subr.mxu0 0.0
        %1969 = vmatpush1.msra.mxu0 0.0
        %1970 = vmatprep.subr.mxu0 0.0
        %1971 = vmatpush1.msra.mxu0 0.0
        %1972 = vmatprep.subr.mxu0 0.0
        %1973 = vmatpush1.msra.mxu0 0.0
        %1974 = vmatprep.subr.mxu0 0.0
        %1975 = vmatpush1.msra.mxu0 0.0
        %1976 = vmatprep.subr.mxu0 0.0
        %1977 = vmatpush1.msra.mxu0 0.0
        %1978 = vmatprep.subr.mxu0 0.0
        %1979 = vmatpush1.msra.mxu0 0.0
        %1980 = vmatprep.subr.mxu0 0.0
        %1981 = vmatpush1.msra.mxu0 0.0
        %1982 = vmatprep.subr.mxu0 0.0
        %1983 = vmatpush1.msra.mxu0 0.0
        %1984 = vmatprep.subr.mxu0 0.0
        %1985 = vmatpush1.msra.mxu0 0.0
        %1986 = vmatprep.subr.mxu0 0.0
        %1987 = vmatpush1.msra.mxu0 0.0
        %1988 = vmatprep.subr.mxu0 0.0
        %1989 = vmatpush1.msra.mxu0 0.0
        %1990 = vmatprep.mubr.f32.mxu0 0.0
        %1991 = vmatmul.mubr.f32.gmra.mrb[0].mxu0 %v647
        %v1992 = vpop.f32.mrb[0].mxu0
        %v1993 = vadd.f32 0.0, %v1992
        %v1994 = vpop.f32.mrb[0].mxu0
        %1995 = vmatprep.mubr.f32.mxu0 0.0
        %1996 = vmatmul.mubr.f32.gmra.mrb[0].mxu0 %v650
        %v1997 = vpop.f32.mrb[0].mxu0
        %v1998 = vadd.f32 0.0, %v1997
        %v1999 = vpop.f32.mrb[0].mxu0
        %2000 = vdwg.mxu0
        %2001 = vmatprep.subr.mxu0 0.0
        %2002 = vmatpush1.msra.mxu0 %v1756
        %2003 = vmatprep.subr.mxu0 0.0
        %2004 = vmatpush1.msra.mxu0 %v1761
        %2005 = vmatprep.subr.mxu0 0.0
        %2006 = vmatpush1.msra.mxu0 0.0
        %2007 = vmatprep.subr.mxu0 0.0
        %2008 = vmatpush1.msra.mxu0 0.0
        %2009 = vmatprep.subr.mxu0 0.0
        %2010 = vmatpush1.msra.mxu0 0.0
        %2011 = vmatprep.subr.mxu0 0.0
        %2012 = vmatpush1.msra.mxu0 0.0
        %2013 = vmatprep.subr.mxu0 0.0
        %2014 = vmatpush1.msra.mxu0 0.0
        %2015 = vmatprep.subr.mxu0 0.0
        %2016 = vmatpush1.msra.mxu0 0.0
        %2017 = vmatprep.subr.mxu0 0.0
        %2018 = vmatpush1.msra.mxu0 0.0
        %2019 = vmatprep.subr.mxu0 0.0
        %2020 = vmatpush1.msra.mxu0 0.0
        %2021 = vmatprep.subr.mxu0 0.0
        %2022 = vmatpush1.msra.mxu0 0.0
        %2023 = vmatprep.subr.mxu0 0.0
        %2024 = vmatpush1.msra.mxu0 0.0
        %2025 = vmatprep.subr.mxu0 0.0
        %2026 = vmatpush1.msra.mxu0 0.0
        %2027 = vmatprep.subr.mxu0 0.0
        %2028 = vmatpush1.msra.mxu0 0.0
        %2029 = vmatprep.subr.mxu0 0.0
        %2030 = vmatpush1.msra.mxu0 0.0
        %2031 = vmatprep.subr.mxu0 0.0
        %2032 = vmatpush1.msra.mxu0 0.0
        %2033 = vmatprep.subr.mxu0 0.0
        %2034 = vmatpush1.msra.mxu0 0.0
        %2035 = vmatprep.subr.mxu0 0.0
        %2036 = vmatpush1.msra.mxu0 0.0
        %2037 = vmatprep.subr.mxu0 0.0
        %2038 = vmatpush1.msra.mxu0 0.0
        %2039 = vmatprep.subr.mxu0 0.0
        %2040 = vmatpush1.msra.mxu0 0.0
        %2041 = vmatprep.subr.mxu0 0.0
        %2042 = vmatpush1.msra.mxu0 0.0
        %2043 = vmatprep.subr.mxu0 0.0
        %2044 = vmatpush1.msra.mxu0 0.0
        %2045 = vmatprep.subr.mxu0 0.0
        %2046 = vmatpush1.msra.mxu0 0.0
        %2047 = vmatprep.subr.mxu0 0.0
        %2048 = vmatpush1.msra.mxu0 0.0
        %2049 = vmatprep.subr.mxu0 0.0
        %2050 = vmatpush1.msra.mxu0 0.0
        %2051 = vmatprep.subr.mxu0 0.0
        %2052 = vmatpush1.msra.mxu0 0.0
        %2053 = vmatprep.subr.mxu0 0.0
        %2054 = vmatpush1.msra.mxu0 0.0
        %2055 = vmatprep.subr.mxu0 0.0
        %2056 = vmatpush1.msra.mxu0 0.0
        %2057 = vmatprep.subr.mxu0 0.0
        %2058 = vmatpush1.msra.mxu0 0.0
        %2059 = vmatprep.subr.mxu0 0.0
        %2060 = vmatpush1.msra.mxu0 0.0
        %2061 = vmatprep.subr.mxu0 0.0
        %2062 = vmatpush1.msra.mxu0 0.0
        %2063 = vmatprep.subr.mxu0 0.0
        %2064 = vmatpush1.msra.mxu0 0.0
        %2065 = vmatprep.mubr.f32.mxu0 0.0
        %2066 = vmatmul.mubr.f32.gmra.mrb[0].mxu0 %v728
        %v2067 = vpop.f32.mrb[0].mxu0
        %v2068 = vadd.f32 0.0, %v2067
        %v2069 = vpop.f32.mrb[0].mxu0
        %2070 = vmatprep.mubr.f32.mxu0 0.0
        %2071 = vmatmul.mubr.f32.gmra.mrb[0].mxu0 %v731
        %v2072 = vpop.f32.mrb[0].mxu0
        %v2073 = vadd.f32 0.0, %v2072
        %v2074 = vpop.f32.mrb[0].mxu0
        %2075 = vdwg.mxu0
        %2076 = vmatprep.subr.mxu0 0.0
        %2077 = vmatpush1.msra.mxu0 %v1837
        %2078 = vmatprep.subr.mxu0 0.0
        %2079 = vmatpush1.msra.mxu0 %v1842
        %2080 = vmatprep.subr.mxu0 0.0
        %2081 = vmatpush1.msra.mxu0 0.0
        %2082 = vmatprep.subr.mxu0 0.0
        %2083 = vmatpush1.msra.mxu0 0.0
        %2084 = vmatprep.subr.mxu0 0.0
        %2085 = vmatpush1.msra.mxu0 0.0
        %2086 = vmatprep.subr.mxu0 0.0
        %2087 = vmatpush1.msra.mxu0 0.0
        %2088 = vmatprep.subr.mxu0 0.0
        %2089 = vmatpush1.msra.mxu0 0.0
        %2090 = vmatprep.subr.mxu0 0.0
        %2091 = vmatpush1.msra.mxu0 0.0
        %2092 = vmatprep.subr.mxu0 0.0
        %2093 = vmatpush1.msra.mxu0 0.0
        %2094 = vmatprep.subr.mxu0 0.0
        %2095 = vmatpush1.msra.mxu0 0.0
        %2096 = vmatprep.subr.mxu0 0.0
        %2097 = vmatpush1.msra.mxu0 0.0
        %2098 = vmatprep.subr.mxu0 0.0
        %2099 = vmatpush1.msra.mxu0 0.0
        %2100 = vmatprep.subr.mxu0 0.0
        %2101 = vmatpush1.msra.mxu0 0.0
        %2102 = vmatprep.subr.mxu0 0.0
        %2103 = vmatpush1.msra.mxu0 0.0
        %2104 = vmatprep.subr.mxu0 0.0
        %2105 = vmatpush1.msra.mxu0 0.0
        %2106 = vmatprep.subr.mxu0 0.0
        %2107 = vmatpush1.msra.mxu0 0.0
        %2108 = vmatprep.subr.mxu0 0.0
        %2109 = vmatpush1.msra.mxu0 0.0
        %2110 = vmatprep.subr.mxu0 0.0
        %2111 = vmatpush1.msra.mxu0 0.0
        %2112 = vmatprep.subr.mxu0 0.0
        %2113 = vmatpush1.msra.mxu0 0.0
        %2114 = vmatprep.subr.mxu0 0.0
        %2115 = vmatpush1.msra.mxu0 0.0
        %2116 = vmatprep.subr.mxu0 0.0
        %2117 = vmatpush1.msra.mxu0 0.0
        %2118 = vmatprep.subr.mxu0 0.0
        %2119 = vmatpush1.msra.mxu0 0.0
        %2120 = vmatprep.subr.mxu0 0.0
        %2121 = vmatpush1.msra.mxu0 0.0
        %2122 = vmatprep.subr.mxu0 0.0
        %2123 = vmatpush1.msra.mxu0 0.0
        %2124 = vmatprep.subr.mxu0 0.0
        %2125 = vmatpush1.msra.mxu0 0.0
        %2126 = vmatprep.subr.mxu0 0.0
        %2127 = vmatpush1.msra.mxu0 0.0
        %2128 = vmatprep.subr.mxu0 0.0
        %2129 = vmatpush1.msra.mxu0 0.0
        %2130 = vmatprep.subr.mxu0 0.0
        %2131 = vmatpush1.msra.mxu0 0.0
        %2132 = vmatprep.subr.mxu0 0.0
        %2133 = vmatpush1.msra.mxu0 0.0
        %2134 = vmatprep.subr.mxu0 0.0
        %2135 = vmatpush1.msra.mxu0 0.0
        %2136 = vmatprep.subr.mxu0 0.0
        %2137 = vmatpush1.msra.mxu0 0.0
        %2138 = vmatprep.subr.mxu0 0.0
        %2139 = vmatpush1.msra.mxu0 0.0
        %2140 = vmatprep.mubr.f32.mxu0 0.0
        %2141 = vmatmul.mubr.f32.gmra.mrb[0].mxu0 %v809
        %v2142 = vpop.f32.mrb[0].mxu0
        %v2143 = vadd.f32 0.0, %v2142
        %v2144 = vpop.f32.mrb[0].mxu0
        %2145 = vmatprep.mubr.f32.mxu0 0.0
        %2146 = vmatmul.mubr.f32.gmra.mrb[0].mxu0 %v812
        %v2147 = vpop.f32.mrb[0].mxu0
        %v2148 = vadd.f32 0.0, %v2147
        %v2149 = vpop.f32.mrb[0].mxu0
        %2150 = vdwg.mxu0
        %2151 = vmatprep.subr.mxu0 0.0
        %2152 = vmatpush1.msra.mxu0 %v1918
        %2153 = vmatprep.subr.mxu0 0.0
        %2154 = vmatpush1.msra.mxu0 %v1923
        %2155 = vmatprep.subr.mxu0 0.0
        %2156 = vmatpush1.msra.mxu0 0.0
        %2157 = vmatprep.subr.mxu0 0.0
        %2158 = vmatpush1.msra.mxu0 0.0
        %2159 = vmatprep.subr.mxu0 0.0
        %2160 = vmatpush1.msra.mxu0 0.0
        %2161 = vmatprep.subr.mxu0 0.0
        %2162 = vmatpush1.msra.mxu0 0.0
        %2163 = vmatprep.subr.mxu0 0.0
        %2164 = vmatpush1.msra.mxu0 0.0
        %2165 = vmatprep.subr.mxu0 0.0
        %2166 = vmatpush1.msra.mxu0 0.0
        %2167 = vmatprep.subr.mxu0 0.0
        %2168 = vmatpush1.msra.mxu0 0.0
        %2169 = vmatprep.subr.mxu0 0.0
        %2170 = vmatpush1.msra.mxu0 0.0
        %2171 = vmatprep.subr.mxu0 0.0
        %2172 = vmatpush1.msra.mxu0 0.0
        %2173 = vmatprep.subr.mxu0 0.0
        %2174 = vmatpush1.msra.mxu0 0.0
        %2175 = vmatprep.subr.mxu0 0.0
        %2176 = vmatpush1.msra.mxu0 0.0
        %2177 = vmatprep.subr.mxu0 0.0
        %2178 = vmatpush1.msra.mxu0 0.0
        %2179 = vmatprep.subr.mxu0 0.0
        %2180 = vmatpush1.msra.mxu0 0.0
        %2181 = vmatprep.subr.mxu0 0.0
        %2182 = vmatpush1.msra.mxu0 0.0
        %2183 = vmatprep.subr.mxu0 0.0
        %2184 = vmatpush1.msra.mxu0 0.0
        %2185 = vmatprep.subr.mxu0 0.0
        %2186 = vmatpush1.msra.mxu0 0.0
        %2187 = vmatprep.subr.mxu0 0.0
        %2188 = vmatpush1.msra.mxu0 0.0
        %2189 = vmatprep.subr.mxu0 0.0
        %2190 = vmatpush1.msra.mxu0 0.0
        %2191 = vmatprep.subr.mxu0 0.0
        %2192 = vmatpush1.msra.mxu0 0.0
        %2193 = vmatprep.subr.mxu0 0.0
        %2194 = vmatpush1.msra.mxu0 0.0
        %2195 = vmatprep.subr.mxu0 0.0
        %2196 = vmatpush1.msra.mxu0 0.0
        %2197 = vmatprep.subr.mxu0 0.0
        %2198 = vmatpush1.msra.mxu0 0.0
        %2199 = vmatprep.subr.mxu0 0.0
        %2200 = vmatpush1.msra.mxu0 0.0
        %2201 = vmatprep.subr.mxu0 0.0
        %2202 = vmatpush1.msra.mxu0 0.0
        %2203 = vmatprep.subr.mxu0 0.0
        %2204 = vmatpush1.msra.mxu0 0.0
        %2205 = vmatprep.subr.mxu0 0.0
        %2206 = vmatpush1.msra.mxu0 0.0
        %2207 = vmatprep.subr.mxu0 0.0
        %2208 = vmatpush1.msra.mxu0 0.0
        %2209 = vmatprep.subr.mxu0 0.0
        %2210 = vmatpush1.msra.mxu0 0.0
        %2211 = vmatprep.subr.mxu0 0.0
        %2212 = vmatpush1.msra.mxu0 0.0
        %2213 = vmatprep.subr.mxu0 0.0
        %2214 = vmatpush1.msra.mxu0 0.0
        %2215 = vmatprep.mubr.f32.mxu0 0.0
        %2216 = vmatmul.mubr.f32.gmra.mrb[0].mxu0 %v890
        %v2217 = vpop.f32.mrb[0].mxu0
        %v2218 = vadd.f32 0.0, %v2217
        %v2219 = vpop.f32.mrb[0].mxu0
        %2220 = vmatprep.mubr.f32.mxu0 0.0
        %2221 = vmatmul.mubr.f32.gmra.mrb[0].mxu0 %v893
        %v2222 = vpop.f32.mrb[0].mxu0
        %v2223 = vadd.f32 0.0, %v2222
        %v2224 = vpop.f32.mrb[0].mxu0
        %2225 = vdwg.mxu0
        %v2226 = vmul.f32 %v297, %v297
        %v2227 = vmul.f32 %v298, %v298
        %v2228 = vmul.f32 %v299, %v299
        %v2229 = vmul.f32 %v300, %v300
        %v2230 = vmul.f32 %v301, %v301
        %v2231 = vmul.f32 %v302, %v302
        %v2232 = vmul.f32 %v303, %v303
        %v2233 = vmul.f32 %v304, %v304
        %v2235 = vsel %vm321, %v2226, 0
        %v2238 = vsel %vm321, %v2227, 0
        %2240 = vmatprep.subr.mxu0 0.0
        %2241 = vmatpush1.msra.mxu0 %v305
        %2242 = vmatprep.subr.mxu0 0.0
        %2243 = vmatpush1.msra.mxu0 %v306
        %2244 = vmatprep.subr.mxu0 0.0
        %2245 = vmatpush1.msra.mxu0 0.0
        %2246 = vmatprep.subr.mxu0 0.0
        %2247 = vmatpush1.msra.mxu0 0.0
        %2248 = vmatprep.subr.mxu0 0.0
        %2249 = vmatpush1.msra.mxu0 0.0
        %2250 = vmatprep.subr.mxu0 0.0
        %2251 = vmatpush1.msra.mxu0 0.0
        %2252 = vmatprep.subr.mxu0 0.0
        %2253 = vmatpush1.msra.mxu0 0.0
        %2254 = vmatprep.subr.mxu0 0.0
        %2255 = vmatpush1.msra.mxu0 0.0
        %2256 = vmatprep.subr.mxu0 0.0
        %2257 = vmatpush1.msra.mxu0 0.0
        %2258 = vmatprep.subr.mxu0 0.0
        %2259 = vmatpush1.msra.mxu0 0.0
        %2260 = vmatprep.subr.mxu0 0.0
        %2261 = vmatpush1.msra.mxu0 0.0
        %2262 = vmatprep.subr.mxu0 0.0
        %2263 = vmatpush1.msra.mxu0 0.0
        %2264 = vmatprep.subr.mxu0 0.0
        %2265 = vmatpush1.msra.mxu0 0.0
        %2266 = vmatprep.subr.mxu0 0.0
        %2267 = vmatpush1.msra.mxu0 0.0
        %2268 = vmatprep.subr.mxu0 0.0
        %2269 = vmatpush1.msra.mxu0 0.0
        %2270 = vmatprep.subr.mxu0 0.0
        %2271 = vmatpush1.msra.mxu0 0.0
        %2272 = vmatprep.subr.mxu0 0.0
        %2273 = vmatpush1.msra.mxu0 0.0
        %2274 = vmatprep.subr.mxu0 0.0
        %2275 = vmatpush1.msra.mxu0 0.0
        %2276 = vmatprep.subr.mxu0 0.0
        %2277 = vmatpush1.msra.mxu0 0.0
        %2278 = vmatprep.subr.mxu0 0.0
        %2279 = vmatpush1.msra.mxu0 0.0
        %2280 = vmatprep.subr.mxu0 0.0
        %2281 = vmatpush1.msra.mxu0 0.0
        %2282 = vmatprep.subr.mxu0 0.0
        %2283 = vmatpush1.msra.mxu0 0.0
        %2284 = vmatprep.subr.mxu0 0.0
        %2285 = vmatpush1.msra.mxu0 0.0
        %2286 = vmatprep.subr.mxu0 0.0
        %2287 = vmatpush1.msra.mxu0 0.0
        %2288 = vmatprep.subr.mxu0 0.0
        %2289 = vmatpush1.msra.mxu0 0.0
        %2290 = vmatprep.subr.mxu0 0.0
        %2291 = vmatpush1.msra.mxu0 0.0
        %2292 = vmatprep.subr.mxu0 0.0
        %2293 = vmatpush1.msra.mxu0 0.0
        %2294 = vmatprep.subr.mxu0 0.0
        %2295 = vmatpush1.msra.mxu0 0.0
        %2296 = vmatprep.subr.mxu0 0.0
        %2297 = vmatpush1.msra.mxu0 0.0
        %2298 = vmatprep.subr.mxu0 0.0
        %2299 = vmatpush1.msra.mxu0 0.0
        %2300 = vmatprep.subr.mxu0 0.0
        %2301 = vmatpush1.msra.mxu0 0.0
        %2302 = vmatprep.subr.mxu0 0.0
        %2303 = vmatpush1.msra.mxu0 0.0
        %2304 = vmatprep.mubr.f32.mxu0 0.0
        %2305 = vmatmul.mubr.f32.gmra.mrb[0].mxu0 %v2235
        %v2306 = vpop.f32.mrb[0].mxu0
        %v2307 = vadd.f32 0.0, %v2306
        %v2308 = vpop.f32.mrb[0].mxu0
        %2309 = vmatprep.mubr.f32.mxu0 0.0
        %2310 = vmatmul.mubr.f32.gmra.mrb[0].mxu0 %v2238
        %v2311 = vpop.f32.mrb[0].mxu0
        %v2312 = vadd.f32 0.0, %v2311
        %v2313 = vpop.f32.mrb[0].mxu0
        %2314 = vdwg.mxu0
        %v2316 = vsel %vm321, %v2228, 0
        %v2319 = vsel %vm321, %v2229, 0
        %2321 = vmatprep.subr.mxu0 0.0
        %2322 = vmatpush1.msra.mxu0 %v307
        %2323 = vmatprep.subr.mxu0 0.0
        %2324 = vmatpush1.msra.mxu0 %v308
        %2325 = vmatprep.subr.mxu0 0.0
        %2326 = vmatpush1.msra.mxu0 0.0
        %2327 = vmatprep.subr.mxu0 0.0
        %2328 = vmatpush1.msra.mxu0 0.0
        %2329 = vmatprep.subr.mxu0 0.0
        %2330 = vmatpush1.msra.mxu0 0.0
        %2331 = vmatprep.subr.mxu0 0.0
        %2332 = vmatpush1.msra.mxu0 0.0
        %2333 = vmatprep.subr.mxu0 0.0
        %2334 = vmatpush1.msra.mxu0 0.0
        %2335 = vmatprep.subr.mxu0 0.0
        %2336 = vmatpush1.msra.mxu0 0.0
        %2337 = vmatprep.subr.mxu0 0.0
        %2338 = vmatpush1.msra.mxu0 0.0
        %2339 = vmatprep.subr.mxu0 0.0
        %2340 = vmatpush1.msra.mxu0 0.0
        %2341 = vmatprep.subr.mxu0 0.0
        %2342 = vmatpush1.msra.mxu0 0.0
        %2343 = vmatprep.subr.mxu0 0.0
        %2344 = vmatpush1.msra.mxu0 0.0
        %2345 = vmatprep.subr.mxu0 0.0
        %2346 = vmatpush1.msra.mxu0 0.0
        %2347 = vmatprep.subr.mxu0 0.0
        %2348 = vmatpush1.msra.mxu0 0.0
        %2349 = vmatprep.subr.mxu0 0.0
        %2350 = vmatpush1.msra.mxu0 0.0
        %2351 = vmatprep.subr.mxu0 0.0
        %2352 = vmatpush1.msra.mxu0 0.0
        %2353 = vmatprep.subr.mxu0 0.0
        %2354 = vmatpush1.msra.mxu0 0.0
        %2355 = vmatprep.subr.mxu0 0.0
        %2356 = vmatpush1.msra.mxu0 0.0
        %2357 = vmatprep.subr.mxu0 0.0
        %2358 = vmatpush1.msra.mxu0 0.0
        %2359 = vmatprep.subr.mxu0 0.0
        %2360 = vmatpush1.msra.mxu0 0.0
        %2361 = vmatprep.subr.mxu0 0.0
        %2362 = vmatpush1.msra.mxu0 0.0
        %2363 = vmatprep.subr.mxu0 0.0
        %2364 = vmatpush1.msra.mxu0 0.0
        %2365 = vmatprep.subr.mxu0 0.0
        %2366 = vmatpush1.msra.mxu0 0.0
        %2367 = vmatprep.subr.mxu0 0.0
        %2368 = vmatpush1.msra.mxu0 0.0
        %2369 = vmatprep.subr.mxu0 0.0
        %2370 = vmatpush1.msra.mxu0 0.0
        %2371 = vmatprep.subr.mxu0 0.0
        %2372 = vmatpush1.msra.mxu0 0.0
        %2373 = vmatprep.subr.mxu0 0.0
        %2374 = vmatpush1.msra.mxu0 0.0
        %2375 = vmatprep.subr.mxu0 0.0
        %2376 = vmatpush1.msra.mxu0 0.0
        %2377 = vmatprep.subr.mxu0 0.0
        %2378 = vmatpush1.msra.mxu0 0.0
        %2379 = vmatprep.subr.mxu0 0.0
        %2380 = vmatpush1.msra.mxu0 0.0
        %2381 = vmatprep.subr.mxu0 0.0
        %2382 = vmatpush1.msra.mxu0 0.0
        %2383 = vmatprep.subr.mxu0 0.0
        %2384 = vmatpush1.msra.mxu0 0.0
        %2385 = vmatprep.mubr.f32.mxu0 0.0
        %2386 = vmatmul.mubr.f32.gmra.mrb[0].mxu0 %v2316
        %v2387 = vpop.f32.mrb[0].mxu0
        %v2388 = vadd.f32 0.0, %v2387
        %v2389 = vpop.f32.mrb[0].mxu0
        %2390 = vmatprep.mubr.f32.mxu0 0.0
        %2391 = vmatmul.mubr.f32.gmra.mrb[0].mxu0 %v2319
        %v2392 = vpop.f32.mrb[0].mxu0
        %v2393 = vadd.f32 0.0, %v2392
        %v2394 = vpop.f32.mrb[0].mxu0
        %2395 = vdwg.mxu0
        %v2397 = vsel %vm321, %v2230, 0
        %v2400 = vsel %vm321, %v2231, 0
        %2402 = vmatprep.subr.mxu0 0.0
        %2403 = vmatpush1.msra.mxu0 %v309
        %2404 = vmatprep.subr.mxu0 0.0
        %2405 = vmatpush1.msra.mxu0 %v310
        %2406 = vmatprep.subr.mxu0 0.0
        %2407 = vmatpush1.msra.mxu0 0.0
        %2408 = vmatprep.subr.mxu0 0.0
        %2409 = vmatpush1.msra.mxu0 0.0
        %2410 = vmatprep.subr.mxu0 0.0
        %2411 = vmatpush1.msra.mxu0 0.0
        %2412 = vmatprep.subr.mxu0 0.0
        %2413 = vmatpush1.msra.mxu0 0.0
        %2414 = vmatprep.subr.mxu0 0.0
        %2415 = vmatpush1.msra.mxu0 0.0
        %2416 = vmatprep.subr.mxu0 0.0
        %2417 = vmatpush1.msra.mxu0 0.0
        %2418 = vmatprep.subr.mxu0 0.0
        %2419 = vmatpush1.msra.mxu0 0.0
        %2420 = vmatprep.subr.mxu0 0.0
        %2421 = vmatpush1.msra.mxu0 0.0
        %2422 = vmatprep.subr.mxu0 0.0
        %2423 = vmatpush1.msra.mxu0 0.0
        %2424 = vmatprep.subr.mxu0 0.0
        %2425 = vmatpush1.msra.mxu0 0.0
        %2426 = vmatprep.subr.mxu0 0.0
        %2427 = vmatpush1.msra.mxu0 0.0
        %2428 = vmatprep.subr.mxu0 0.0
        %2429 = vmatpush1.msra.mxu0 0.0
        %2430 = vmatprep.subr.mxu0 0.0
        %2431 = vmatpush1.msra.mxu0 0.0
        %2432 = vmatprep.subr.mxu0 0.0
        %2433 = vmatpush1.msra.mxu0 0.0
        %2434 = vmatprep.subr.mxu0 0.0
        %2435 = vmatpush1.msra.mxu0 0.0
        %2436 = vmatprep.subr.mxu0 0.0
        %2437 = vmatpush1.msra.mxu0 0.0
        %2438 = vmatprep.subr.mxu0 0.0
        %2439 = vmatpush1.msra.mxu0 0.0
        %2440 = vmatprep.subr.mxu0 0.0
        %2441 = vmatpush1.msra.mxu0 0.0
        %2442 = vmatprep.subr.mxu0 0.0
        %2443 = vmatpush1.msra.mxu0 0.0
        %2444 = vmatprep.subr.mxu0 0.0
        %2445 = vmatpush1.msra.mxu0 0.0
        %2446 = vmatprep.subr.mxu0 0.0
        %2447 = vmatpush1.msra.mxu0 0.0
        %2448 = vmatprep.subr.mxu0 0.0
        %2449 = vmatpush1.msra.mxu0 0.0
        %2450 = vmatprep.subr.mxu0 0.0
        %2451 = vmatpush1.msra.mxu0 0.0
        %2452 = vmatprep.subr.mxu0 0.0
        %2453 = vmatpush1.msra.mxu0 0.0
        %2454 = vmatprep.subr.mxu0 0.0
        %2455 = vmatpush1.msra.mxu0 0.0
        %2456 = vmatprep.subr.mxu0 0.0
        %2457 = vmatpush1.msra.mxu0 0.0
        %2458 = vmatprep.subr.mxu0 0.0
        %2459 = vmatpush1.msra.mxu0 0.0
        %2460 = vmatprep.subr.mxu0 0.0
        %2461 = vmatpush1.msra.mxu0 0.0
        %2462 = vmatprep.subr.mxu0 0.0
        %2463 = vmatpush1.msra.mxu0 0.0
        %2464 = vmatprep.subr.mxu0 0.0
        %2465 = vmatpush1.msra.mxu0 0.0
        %2466 = vmatprep.mubr.f32.mxu0 0.0
        %2467 = vmatmul.mubr.f32.gmra.mrb[0].mxu0 %v2397
        %v2468 = vpop.f32.mrb[0].mxu0
        %v2469 = vadd.f32 0.0, %v2468
        %v2470 = vpop.f32.mrb[0].mxu0
        %2471 = vmatprep.mubr.f32.mxu0 0.0
        %2472 = vmatmul.mubr.f32.gmra.mrb[0].mxu0 %v2400
        %v2473 = vpop.f32.mrb[0].mxu0
        %v2474 = vadd.f32 0.0, %v2473
        %v2475 = vpop.f32.mrb[0].mxu0
        %2476 = vdwg.mxu0
        %v2478 = vsel %vm321, %v2232, 0
        %v2481 = vsel %vm321, %v2233, 0
        %2483 = vmatprep.subr.mxu0 0.0
        %2484 = vmatpush1.msra.mxu0 %v311
        %2485 = vmatprep.subr.mxu0 0.0
        %2486 = vmatpush1.msra.mxu0 %v312
        %2487 = vmatprep.subr.mxu0 0.0
        %2488 = vmatpush1.msra.mxu0 0.0
        %2489 = vmatprep.subr.mxu0 0.0
        %2490 = vmatpush1.msra.mxu0 0.0
        %2491 = vmatprep.subr.mxu0 0.0
        %2492 = vmatpush1.msra.mxu0 0.0
        %2493 = vmatprep.subr.mxu0 0.0
        %2494 = vmatpush1.msra.mxu0 0.0
        %2495 = vmatprep.subr.mxu0 0.0
        %2496 = vmatpush1.msra.mxu0 0.0
        %2497 = vmatprep.subr.mxu0 0.0
        %2498 = vmatpush1.msra.mxu0 0.0
        %2499 = vmatprep.subr.mxu0 0.0
        %2500 = vmatpush1.msra.mxu0 0.0
        %2501 = vmatprep.subr.mxu0 0.0
        %2502 = vmatpush1.msra.mxu0 0.0
        %2503 = vmatprep.subr.mxu0 0.0
        %2504 = vmatpush1.msra.mxu0 0.0
        %2505 = vmatprep.subr.mxu0 0.0
        %2506 = vmatpush1.msra.mxu0 0.0
        %2507 = vmatprep.subr.mxu0 0.0
        %2508 = vmatpush1.msra.mxu0 0.0
        %2509 = vmatprep.subr.mxu0 0.0
        %2510 = vmatpush1.msra.mxu0 0.0
        %2511 = vmatprep.subr.mxu0 0.0
        %2512 = vmatpush1.msra.mxu0 0.0
        %2513 = vmatprep.subr.mxu0 0.0
        %2514 = vmatpush1.msra.mxu0 0.0
        %2515 = vmatprep.subr.mxu0 0.0
        %2516 = vmatpush1.msra.mxu0 0.0
        %2517 = vmatprep.subr.mxu0 0.0
        %2518 = vmatpush1.msra.mxu0 0.0
        %2519 = vmatprep.subr.mxu0 0.0
        %2520 = vmatpush1.msra.mxu0 0.0
        %2521 = vmatprep.subr.mxu0 0.0
        %2522 = vmatpush1.msra.mxu0 0.0
        %2523 = vmatprep.subr.mxu0 0.0
        %2524 = vmatpush1.msra.mxu0 0.0
        %2525 = vmatprep.subr.mxu0 0.0
        %2526 = vmatpush1.msra.mxu0 0.0
        %2527 = vmatprep.subr.mxu0 0.0
        %2528 = vmatpush1.msra.mxu0 0.0
        %2529 = vmatprep.subr.mxu0 0.0
        %2530 = vmatpush1.msra.mxu0 0.0
        %2531 = vmatprep.subr.mxu0 0.0
        %2532 = vmatpush1.msra.mxu0 0.0
        %2533 = vmatprep.subr.mxu0 0.0
        %2534 = vmatpush1.msra.mxu0 0.0
        %2535 = vmatprep.subr.mxu0 0.0
        %2536 = vmatpush1.msra.mxu0 0.0
        %2537 = vmatprep.subr.mxu0 0.0
        %2538 = vmatpush1.msra.mxu0 0.0
        %2539 = vmatprep.subr.mxu0 0.0
        %2540 = vmatpush1.msra.mxu0 0.0
        %2541 = vmatprep.subr.mxu0 0.0
        %2542 = vmatpush1.msra.mxu0 0.0
        %2543 = vmatprep.subr.mxu0 0.0
        %2544 = vmatpush1.msra.mxu0 0.0
        %2545 = vmatprep.subr.mxu0 0.0
        %2546 = vmatpush1.msra.mxu0 0.0
        %2547 = vmatprep.mubr.f32.mxu0 0.0
        %2548 = vmatmul.mubr.f32.gmra.mrb[0].mxu0 %v2478
        %v2549 = vpop.f32.mrb[0].mxu0
        %v2550 = vadd.f32 0.0, %v2549
        %v2551 = vpop.f32.mrb[0].mxu0
        %2552 = vmatprep.mubr.f32.mxu0 0.0
        %2553 = vmatmul.mubr.f32.gmra.mrb[0].mxu0 %v2481
        %v2554 = vpop.f32.mrb[0].mxu0
        %v2555 = vadd.f32 0.0, %v2554
        %v2556 = vpop.f32.mrb[0].mxu0
        %2557 = vdwg.mxu0
        %2558 = vmatprep.subr.mxu0 0.0
        %2559 = vmatpush1.msra.mxu0 %v2307
        %2560 = vmatprep.subr.mxu0 0.0
        %2561 = vmatpush1.msra.mxu0 %v2312
        %2562 = vmatprep.subr.mxu0 0.0
        %2563 = vmatpush1.msra.mxu0 0.0
        %2564 = vmatprep.subr.mxu0 0.0
        %2565 = vmatpush1.msra.mxu0 0.0
        %2566 = vmatprep.subr.mxu0 0.0
        %2567 = vmatpush1.msra.mxu0 0.0
        %2568 = vmatprep.subr.mxu0 0.0
        %2569 = vmatpush1.msra.mxu0 0.0
        %2570 = vmatprep.subr.mxu0 0.0
        %2571 = vmatpush1.msra.mxu0 0.0
        %2572 = vmatprep.subr.mxu0 0.0
        %2573 = vmatpush1.msra.mxu0 0.0
        %2574 = vmatprep.subr.mxu0 0.0
        %2575 = vmatpush1.msra.mxu0 0.0
        %2576 = vmatprep.subr.mxu0 0.0
        %2577 = vmatpush1.msra.mxu0 0.0
        %2578 = vmatprep.subr.mxu0 0.0
        %2579 = vmatpush1.msra.mxu0 0.0
        %2580 = vmatprep.subr.mxu0 0.0
        %2581 = vmatpush1.msra.mxu0 0.0
        %2582 = vmatprep.subr.mxu0 0.0
        %2583 = vmatpush1.msra.mxu0 0.0
        %2584 = vmatprep.subr.mxu0 0.0
        %2585 = vmatpush1.msra.mxu0 0.0
        %2586 = vmatprep.subr.mxu0 0.0
        %2587 = vmatpush1.msra.mxu0 0.0
        %2588 = vmatprep.subr.mxu0 0.0
        %2589 = vmatpush1.msra.mxu0 0.0
        %2590 = vmatprep.subr.mxu0 0.0
        %2591 = vmatpush1.msra.mxu0 0.0
        %2592 = vmatprep.subr.mxu0 0.0
        %2593 = vmatpush1.msra.mxu0 0.0
        %2594 = vmatprep.subr.mxu0 0.0
        %2595 = vmatpush1.msra.mxu0 0.0
        %2596 = vmatprep.subr.mxu0 0.0
        %2597 = vmatpush1.msra.mxu0 0.0
        %2598 = vmatprep.subr.mxu0 0.0
        %2599 = vmatpush1.msra.mxu0 0.0
        %2600 = vmatprep.subr.mxu0 0.0
        %2601 = vmatpush1.msra.mxu0 0.0
        %2602 = vmatprep.subr.mxu0 0.0
        %2603 = vmatpush1.msra.mxu0 0.0
        %2604 = vmatprep.subr.mxu0 0.0
        %2605 = vmatpush1.msra.mxu0 0.0
        %2606 = vmatprep.subr.mxu0 0.0
        %2607 = vmatpush1.msra.mxu0 0.0
        %2608 = vmatprep.subr.mxu0 0.0
        %2609 = vmatpush1.msra.mxu0 0.0
        %2610 = vmatprep.subr.mxu0 0.0
        %2611 = vmatpush1.msra.mxu0 0.0
        %2612 = vmatprep.subr.mxu0 0.0
        %2613 = vmatpush1.msra.mxu0 0.0
        %2614 = vmatprep.subr.mxu0 0.0
        %2615 = vmatpush1.msra.mxu0 0.0
        %2616 = vmatprep.subr.mxu0 0.0
        %2617 = vmatpush1.msra.mxu0 0.0
        %2618 = vmatprep.subr.mxu0 0.0
        %2619 = vmatpush1.msra.mxu0 0.0
        %2620 = vmatprep.subr.mxu0 0.0
        %2621 = vmatpush1.msra.mxu0 0.0
        %2622 = vmatprep.mubr.f32.mxu0 0.0
        %2623 = vmatmul.mubr.f32.gmra.mrb[0].mxu0 %v647
        %v2624 = vpop.f32.mrb[0].mxu0
        %v2625 = vadd.f32 0.0, %v2624
        %v2626 = vpop.f32.mrb[0].mxu0
        %2627 = vmatprep.mubr.f32.mxu0 0.0
        %2628 = vmatmul.mubr.f32.gmra.mrb[0].mxu0 %v650
        %v2629 = vpop.f32.mrb[0].mxu0
        %v2630 = vadd.f32 0.0, %v2629
        %v2631 = vpop.f32.mrb[0].mxu0
        %2632 = vdwg.mxu0
        %2633 = vmatprep.subr.mxu0 0.0
        %2634 = vmatpush1.msra.mxu0 %v2388
        %2635 = vmatprep.subr.mxu0 0.0
        %2636 = vmatpush1.msra.mxu0 %v2393
        %2637 = vmatprep.subr.mxu0 0.0
        %2638 = vmatpush1.msra.mxu0 0.0
        %2639 = vmatprep.subr.mxu0 0.0
        %2640 = vmatpush1.msra.mxu0 0.0
        %2641 = vmatprep.subr.mxu0 0.0
        %2642 = vmatpush1.msra.mxu0 0.0
        %2643 = vmatprep.subr.mxu0 0.0
        %2644 = vmatpush1.msra.mxu0 0.0
        %2645 = vmatprep.subr.mxu0 0.0
        %2646 = vmatpush1.msra.mxu0 0.0
        %2647 = vmatprep.subr.mxu0 0.0
        %2648 = vmatpush1.msra.mxu0 0.0
        %2649 = vmatprep.subr.mxu0 0.0
        %2650 = vmatpush1.msra.mxu0 0.0
        %2651 = vmatprep.subr.mxu0 0.0
        %2652 = vmatpush1.msra.mxu0 0.0
        %2653 = vmatprep.subr.mxu0 0.0
        %2654 = vmatpush1.msra.mxu0 0.0
        %2655 = vmatprep.subr.mxu0 0.0
        %2656 = vmatpush1.msra.mxu0 0.0
        %2657 = vmatprep.subr.mxu0 0.0
        %2658 = vmatpush1.msra.mxu0 0.0
        %2659 = vmatprep.subr.mxu0 0.0
        %2660 = vmatpush1.msra.mxu0 0.0
        %2661 = vmatprep.subr.mxu0 0.0
        %2662 = vmatpush1.msra.mxu0 0.0
        %2663 = vmatprep.subr.mxu0 0.0
        %2664 = vmatpush1.msra.mxu0 0.0
        %2665 = vmatprep.subr.mxu0 0.0
        %2666 = vmatpush1.msra.mxu0 0.0
        %2667 = vmatprep.subr.mxu0 0.0
        %2668 = vmatpush1.msra.mxu0 0.0
        %2669 = vmatprep.subr.mxu0 0.0
        %2670 = vmatpush1.msra.mxu0 0.0
        %2671 = vmatprep.subr.mxu0 0.0
        %2672 = vmatpush1.msra.mxu0 0.0
        %2673 = vmatprep.subr.mxu0 0.0
        %2674 = vmatpush1.msra.mxu0 0.0
        %2675 = vmatprep.subr.mxu0 0.0
        %2676 = vmatpush1.msra.mxu0 0.0
        %2677 = vmatprep.subr.mxu0 0.0
        %2678 = vmatpush1.msra.mxu0 0.0
        %2679 = vmatprep.subr.mxu0 0.0
        %2680 = vmatpush1.msra.mxu0 0.0
        %2681 = vmatprep.subr.mxu0 0.0
        %2682 = vmatpush1.msra.mxu0 0.0
        %2683 = vmatprep.subr.mxu0 0.0
        %2684 = vmatpush1.msra.mxu0 0.0
        %2685 = vmatprep.subr.mxu0 0.0
        %2686 = vmatpush1.msra.mxu0 0.0
        %2687 = vmatprep.subr.mxu0 0.0
        %2688 = vmatpush1.msra.mxu0 0.0
        %2689 = vmatprep.subr.mxu0 0.0
        %2690 = vmatpush1.msra.mxu0 0.0
        %2691 = vmatprep.subr.mxu0 0.0
        %2692 = vmatpush1.msra.mxu0 0.0
        %2693 = vmatprep.subr.mxu0 0.0
        %2694 = vmatpush1.msra.mxu0 0.0
        %2695 = vmatprep.subr.mxu0 0.0
        %2696 = vmatpush1.msra.mxu0 0.0
        %2697 = vmatprep.mubr.f32.mxu0 0.0
        %2698 = vmatmul.mubr.f32.gmra.mrb[0].mxu0 %v728
        %v2699 = vpop.f32.mrb[0].mxu0
        %v2700 = vadd.f32 0.0, %v2699
        %v2701 = vpop.f32.mrb[0].mxu0
        %2702 = vmatprep.mubr.f32.mxu0 0.0
        %2703 = vmatmul.mubr.f32.gmra.mrb[0].mxu0 %v731
        %v2704 = vpop.f32.mrb[0].mxu0
        %v2705 = vadd.f32 0.0, %v2704
        %v2706 = vpop.f32.mrb[0].mxu0
        %2707 = vdwg.mxu0
        %2708 = vmatprep.subr.mxu0 0.0
        %2709 = vmatpush1.msra.mxu0 %v2469
        %2710 = vmatprep.subr.mxu0 0.0
        %2711 = vmatpush1.msra.mxu0 %v2474
        %2712 = vmatprep.subr.mxu0 0.0
        %2713 = vmatpush1.msra.mxu0 0.0
        %2714 = vmatprep.subr.mxu0 0.0
        %2715 = vmatpush1.msra.mxu0 0.0
        %2716 = vmatprep.subr.mxu0 0.0
        %2717 = vmatpush1.msra.mxu0 0.0
        %2718 = vmatprep.subr.mxu0 0.0
        %2719 = vmatpush1.msra.mxu0 0.0
        %2720 = vmatprep.subr.mxu0 0.0
        %2721 = vmatpush1.msra.mxu0 0.0
        %2722 = vmatprep.subr.mxu0 0.0
        %2723 = vmatpush1.msra.mxu0 0.0
        %2724 = vmatprep.subr.mxu0 0.0
        %2725 = vmatpush1.msra.mxu0 0.0
        %2726 = vmatprep.subr.mxu0 0.0
        %2727 = vmatpush1.msra.mxu0 0.0
        %2728 = vmatprep.subr.mxu0 0.0
        %2729 = vmatpush1.msra.mxu0 0.0
        %2730 = vmatprep.subr.mxu0 0.0
        %2731 = vmatpush1.msra.mxu0 0.0
        %2732 = vmatprep.subr.mxu0 0.0
        %2733 = vmatpush1.msra.mxu0 0.0
        %2734 = vmatprep.subr.mxu0 0.0
        %2735 = vmatpush1.msra.mxu0 0.0
        %2736 = vmatprep.subr.mxu0 0.0
        %2737 = vmatpush1.msra.mxu0 0.0
        %2738 = vmatprep.subr.mxu0 0.0
        %2739 = vmatpush1.msra.mxu0 0.0
        %2740 = vmatprep.subr.mxu0 0.0
        %2741 = vmatpush1.msra.mxu0 0.0
        %2742 = vmatprep.subr.mxu0 0.0
        %2743 = vmatpush1.msra.mxu0 0.0
        %2744 = vmatprep.subr.mxu0 0.0
        %2745 = vmatpush1.msra.mxu0 0.0
        %2746 = vmatprep.subr.mxu0 0.0
        %2747 = vmatpush1.msra.mxu0 0.0
        %2748 = vmatprep.subr.mxu0 0.0
        %2749 = vmatpush1.msra.mxu0 0.0
        %2750 = vmatprep.subr.mxu0 0.0
        %2751 = vmatpush1.msra.mxu0 0.0
        %2752 = vmatprep.subr.mxu0 0.0
        %2753 = vmatpush1.msra.mxu0 0.0
        %2754 = vmatprep.subr.mxu0 0.0
        %2755 = vmatpush1.msra.mxu0 0.0
        %2756 = vmatprep.subr.mxu0 0.0
        %2757 = vmatpush1.msra.mxu0 0.0
        %2758 = vmatprep.subr.mxu0 0.0
        %2759 = vmatpush1.msra.mxu0 0.0
        %2760 = vmatprep.subr.mxu0 0.0
        %2761 = vmatpush1.msra.mxu0 0.0
        %2762 = vmatprep.subr.mxu0 0.0
        %2763 = vmatpush1.msra.mxu0 0.0
        %2764 = vmatprep.subr.mxu0 0.0
        %2765 = vmatpush1.msra.mxu0 0.0
        %2766 = vmatprep.subr.mxu0 0.0
        %2767 = vmatpush1.msra.mxu0 0.0
        %2768 = vmatprep.subr.mxu0 0.0
        %2769 = vmatpush1.msra.mxu0 0.0
        %2770 = vmatprep.subr.mxu0 0.0
        %2771 = vmatpush1.msra.mxu0 0.0
        %2772 = vmatprep.mubr.f32.mxu0 0.0
        %2773 = vmatmul.mubr.f32.gmra.mrb[0].mxu0 %v809
        %v2774 = vpop.f32.mrb[0].mxu0
        %v2775 = vadd.f32 0.0, %v2774
        %v2776 = vpop.f32.mrb[0].mxu0
        %2777 = vmatprep.mubr.f32.mxu0 0.0
        %2778 = vmatmul.mubr.f32.gmra.mrb[0].mxu0 %v812
        %v2779 = vpop.f32.mrb[0].mxu0
        %v2780 = vadd.f32 0.0, %v2779
        %v2781 = vpop.f32.mrb[0].mxu0
        %2782 = vdwg.mxu0
        %2783 = vmatprep.subr.mxu0 0.0
        %2784 = vmatpush1.msra.mxu0 %v2550
        %2785 = vmatprep.subr.mxu0 0.0
        %2786 = vmatpush1.msra.mxu0 %v2555
        %2787 = vmatprep.subr.mxu0 0.0
        %2788 = vmatpush1.msra.mxu0 0.0
        %2789 = vmatprep.subr.mxu0 0.0
        %2790 = vmatpush1.msra.mxu0 0.0
        %2791 = vmatprep.subr.mxu0 0.0
        %2792 = vmatpush1.msra.mxu0 0.0
        %2793 = vmatprep.subr.mxu0 0.0
        %2794 = vmatpush1.msra.mxu0 0.0
        %2795 = vmatprep.subr.mxu0 0.0
        %2796 = vmatpush1.msra.mxu0 0.0
        %2797 = vmatprep.subr.mxu0 0.0
        %2798 = vmatpush1.msra.mxu0 0.0
        %2799 = vmatprep.subr.mxu0 0.0
        %2800 = vmatpush1.msra.mxu0 0.0
        %2801 = vmatprep.subr.mxu0 0.0
        %2802 = vmatpush1.msra.mxu0 0.0
        %2803 = vmatprep.subr.mxu0 0.0
        %2804 = vmatpush1.msra.mxu0 0.0
        %2805 = vmatprep.subr.mxu0 0.0
        %2806 = vmatpush1.msra.mxu0 0.0
        %2807 = vmatprep.subr.mxu0 0.0
        %2808 = vmatpush1.msra.mxu0 0.0
        %2809 = vmatprep.subr.mxu0 0.0
        %2810 = vmatpush1.msra.mxu0 0.0
        %2811 = vmatprep.subr.mxu0 0.0
        %2812 = vmatpush1.msra.mxu0 0.0
        %2813 = vmatprep.subr.mxu0 0.0
        %2814 = vmatpush1.msra.mxu0 0.0
        %2815 = vmatprep.subr.mxu0 0.0
        %2816 = vmatpush1.msra.mxu0 0.0
        %2817 = vmatprep.subr.mxu0 0.0
        %2818 = vmatpush1.msra.mxu0 0.0
        %2819 = vmatprep.subr.mxu0 0.0
        %2820 = vmatpush1.msra.mxu0 0.0
        %2821 = vmatprep.subr.mxu0 0.0
        %2822 = vmatpush1.msra.mxu0 0.0
        %2823 = vmatprep.subr.mxu0 0.0
        %2824 = vmatpush1.msra.mxu0 0.0
        %2825 = vmatprep.subr.mxu0 0.0
        %2826 = vmatpush1.msra.mxu0 0.0
        %2827 = vmatprep.subr.mxu0 0.0
        %2828 = vmatpush1.msra.mxu0 0.0
        %2829 = vmatprep.subr.mxu0 0.0
        %2830 = vmatpush1.msra.mxu0 0.0
        %2831 = vmatprep.subr.mxu0 0.0
        %2832 = vmatpush1.msra.mxu0 0.0
        %2833 = vmatprep.subr.mxu0 0.0
        %2834 = vmatpush1.msra.mxu0 0.0
        %2835 = vmatprep.subr.mxu0 0.0
        %2836 = vmatpush1.msra.mxu0 0.0
        %2837 = vmatprep.subr.mxu0 0.0
        %2838 = vmatpush1.msra.mxu0 0.0
        %2839 = vmatprep.subr.mxu0 0.0
        %2840 = vmatpush1.msra.mxu0 0.0
        %2841 = vmatprep.subr.mxu0 0.0
        %2842 = vmatpush1.msra.mxu0 0.0
        %2843 = vmatprep.subr.mxu0 0.0
        %2844 = vmatpush1.msra.mxu0 0.0
        %2845 = vmatprep.subr.mxu0 0.0
        %2846 = vmatpush1.msra.mxu0 0.0
        %2847 = vmatprep.mubr.f32.mxu0 0.0
        %2848 = vmatmul.mubr.f32.gmra.mrb[0].mxu0 %v890
        %v2849 = vpop.f32.mrb[0].mxu0
        %v2850 = vadd.f32 0.0, %v2849
        %v2851 = vpop.f32.mrb[0].mxu0
        %2852 = vmatprep.mubr.f32.mxu0 0.0
        %2853 = vmatmul.mubr.f32.gmra.mrb[0].mxu0 %v893
        %v2854 = vpop.f32.mrb[0].mxu0
        %v2855 = vadd.f32 0.0, %v2854
        %v2856 = vpop.f32.mrb[0].mxu0
        %2857 = vdwg.mxu0
        %v2858 = vmul.f32 %v289, %v297
        %v2859 = vmul.f32 %v290, %v298
        %v2860 = vmul.f32 %v291, %v299
        %v2861 = vmul.f32 %v292, %v300
        %v2862 = vmul.f32 %v293, %v301
        %v2863 = vmul.f32 %v294, %v302
        %v2864 = vmul.f32 %v295, %v303
        %v2865 = vmul.f32 %v296, %v304
        %v2867 = vsel %vm321, %v2858, 0
        %v2870 = vsel %vm321, %v2859, 0
        %2872 = vmatprep.subr.mxu0 0.0
        %2873 = vmatpush1.msra.mxu0 %v305
        %2874 = vmatprep.subr.mxu0 0.0
        %2875 = vmatpush1.msra.mxu0 %v306
        %2876 = vmatprep.subr.mxu0 0.0
        %2877 = vmatpush1.msra.mxu0 0.0
        %2878 = vmatprep.subr.mxu0 0.0
        %2879 = vmatpush1.msra.mxu0 0.0
        %2880 = vmatprep.subr.mxu0 0.0
        %2881 = vmatpush1.msra.mxu0 0.0
        %2882 = vmatprep.subr.mxu0 0.0
        %2883 = vmatpush1.msra.mxu0 0.0
        %2884 = vmatprep.subr.mxu0 0.0
        %2885 = vmatpush1.msra.mxu0 0.0
        %2886 = vmatprep.subr.mxu0 0.0
        %2887 = vmatpush1.msra.mxu0 0.0
        %2888 = vmatprep.subr.mxu0 0.0
        %2889 = vmatpush1.msra.mxu0 0.0
        %2890 = vmatprep.subr.mxu0 0.0
        %2891 = vmatpush1.msra.mxu0 0.0
        %2892 = vmatprep.subr.mxu0 0.0
        %2893 = vmatpush1.msra.mxu0 0.0
        %2894 = vmatprep.subr.mxu0 0.0
        %2895 = vmatpush1.msra.mxu0 0.0
        %2896 = vmatprep.subr.mxu0 0.0
        %2897 = vmatpush1.msra.mxu0 0.0
        %2898 = vmatprep.subr.mxu0 0.0
        %2899 = vmatpush1.msra.mxu0 0.0
        %2900 = vmatprep.subr.mxu0 0.0
        %2901 = vmatpush1.msra.mxu0 0.0
        %2902 = vmatprep.subr.mxu0 0.0
        %2903 = vmatpush1.msra.mxu0 0.0
        %2904 = vmatprep.subr.mxu0 0.0
        %2905 = vmatpush1.msra.mxu0 0.0
        %2906 = vmatprep.subr.mxu0 0.0
        %2907 = vmatpush1.msra.mxu0 0.0
        %2908 = vmatprep.subr.mxu0 0.0
        %2909 = vmatpush1.msra.mxu0 0.0
        %2910 = vmatprep.subr.mxu0 0.0
        %2911 = vmatpush1.msra.mxu0 0.0
        %2912 = vmatprep.subr.mxu0 0.0
        %2913 = vmatpush1.msra.mxu0 0.0
        %2914 = vmatprep.subr.mxu0 0.0
        %2915 = vmatpush1.msra.mxu0 0.0
        %2916 = vmatprep.subr.mxu0 0.0
        %2917 = vmatpush1.msra.mxu0 0.0
        %2918 = vmatprep.subr.mxu0 0.0
        %2919 = vmatpush1.msra.mxu0 0.0
        %2920 = vmatprep.subr.mxu0 0.0
        %2921 = vmatpush1.msra.mxu0 0.0
        %2922 = vmatprep.subr.mxu0 0.0
        %2923 = vmatpush1.msra.mxu0 0.0
        %2924 = vmatprep.subr.mxu0 0.0
        %2925 = vmatpush1.msra.mxu0 0.0
        %2926 = vmatprep.subr.mxu0 0.0
        %2927 = vmatpush1.msra.mxu0 0.0
        %2928 = vmatprep.subr.mxu0 0.0
        %2929 = vmatpush1.msra.mxu0 0.0
        %2930 = vmatprep.subr.mxu0 0.0
        %2931 = vmatpush1.msra.mxu0 0.0
        %2932 = vmatprep.subr.mxu0 0.0
        %2933 = vmatpush1.msra.mxu0 0.0
        %2934 = vmatprep.subr.mxu0 0.0
        %2935 = vmatpush1.msra.mxu0 0.0
        %2936 = vmatprep.mubr.f32.mxu0 0.0
        %2937 = vmatmul.mubr.f32.gmra.mrb[0].mxu0 %v2867
        %v2938 = vpop.f32.mrb[0].mxu0
        %v2939 = vadd.f32 0.0, %v2938
        %v2940 = vpop.f32.mrb[0].mxu0
        %2941 = vmatprep.mubr.f32.mxu0 0.0
        %2942 = vmatmul.mubr.f32.gmra.mrb[0].mxu0 %v2870
        %v2943 = vpop.f32.mrb[0].mxu0
        %v2944 = vadd.f32 0.0, %v2943
        %v2945 = vpop.f32.mrb[0].mxu0
        %2946 = vdwg.mxu0
        %v2948 = vsel %vm321, %v2860, 0
        %v2951 = vsel %vm321, %v2861, 0
        %2953 = vmatprep.subr.mxu0 0.0
        %2954 = vmatpush1.msra.mxu0 %v307
        %2955 = vmatprep.subr.mxu0 0.0
        %2956 = vmatpush1.msra.mxu0 %v308
        %2957 = vmatprep.subr.mxu0 0.0
        %2958 = vmatpush1.msra.mxu0 0.0
        %2959 = vmatprep.subr.mxu0 0.0
        %2960 = vmatpush1.msra.mxu0 0.0
        %2961 = vmatprep.subr.mxu0 0.0
        %2962 = vmatpush1.msra.mxu0 0.0
        %2963 = vmatprep.subr.mxu0 0.0
        %2964 = vmatpush1.msra.mxu0 0.0
        %2965 = vmatprep.subr.mxu0 0.0
        %2966 = vmatpush1.msra.mxu0 0.0
        %2967 = vmatprep.subr.mxu0 0.0
        %2968 = vmatpush1.msra.mxu0 0.0
        %2969 = vmatprep.subr.mxu0 0.0
        %2970 = vmatpush1.msra.mxu0 0.0
        %2971 = vmatprep.subr.mxu0 0.0
        %2972 = vmatpush1.msra.mxu0 0.0
        %2973 = vmatprep.subr.mxu0 0.0
        %2974 = vmatpush1.msra.mxu0 0.0
        %2975 = vmatprep.subr.mxu0 0.0
        %2976 = vmatpush1.msra.mxu0 0.0
        %2977 = vmatprep.subr.mxu0 0.0
        %2978 = vmatpush1.msra.mxu0 0.0
        %2979 = vmatprep.subr.mxu0 0.0
        %2980 = vmatpush1.msra.mxu0 0.0
        %2981 = vmatprep.subr.mxu0 0.0
        %2982 = vmatpush1.msra.mxu0 0.0
        %2983 = vmatprep.subr.mxu0 0.0
        %2984 = vmatpush1.msra.mxu0 0.0
        %2985 = vmatprep.subr.mxu0 0.0
        %2986 = vmatpush1.msra.mxu0 0.0
        %2987 = vmatprep.subr.mxu0 0.0
        %2988 = vmatpush1.msra.mxu0 0.0
        %2989 = vmatprep.subr.mxu0 0.0
        %2990 = vmatpush1.msra.mxu0 0.0
        %2991 = vmatprep.subr.mxu0 0.0
        %2992 = vmatpush1.msra.mxu0 0.0
        %2993 = vmatprep.subr.mxu0 0.0
        %2994 = vmatpush1.msra.mxu0 0.0
        %2995 = vmatprep.subr.mxu0 0.0
        %2996 = vmatpush1.msra.mxu0 0.0
        %2997 = vmatprep.subr.mxu0 0.0
        %2998 = vmatpush1.msra.mxu0 0.0
        %2999 = vmatprep.subr.mxu0 0.0
        %3000 = vmatpush1.msra.mxu0 0.0
        %3001 = vmatprep.subr.mxu0 0.0
        %3002 = vmatpush1.msra.mxu0 0.0
        %3003 = vmatprep.subr.mxu0 0.0
        %3004 = vmatpush1.msra.mxu0 0.0
        %3005 = vmatprep.subr.mxu0 0.0
        %3006 = vmatpush1.msra.mxu0 0.0
        %3007 = vmatprep.subr.mxu0 0.0
        %3008 = vmatpush1.msra.mxu0 0.0
        %3009 = vmatprep.subr.mxu0 0.0
        %3010 = vmatpush1.msra.mxu0 0.0
        %3011 = vmatprep.subr.mxu0 0.0
        %3012 = vmatpush1.msra.mxu0 0.0
        %3013 = vmatprep.subr.mxu0 0.0
        %3014 = vmatpush1.msra.mxu0 0.0
        %3015 = vmatprep.subr.mxu0 0.0
        %3016 = vmatpush1.msra.mxu0 0.0
        %3017 = vmatprep.mubr.f32.mxu0 0.0
        %3018 = vmatmul.mubr.f32.gmra.mrb[0].mxu0 %v2948
        %v3019 = vpop.f32.mrb[0].mxu0
        %v3020 = vadd.f32 0.0, %v3019
        %v3021 = vpop.f32.mrb[0].mxu0
        %3022 = vmatprep.mubr.f32.mxu0 0.0
        %3023 = vmatmul.mubr.f32.gmra.mrb[0].mxu0 %v2951
        %v3024 = vpop.f32.mrb[0].mxu0
        %v3025 = vadd.f32 0.0, %v3024
        %v3026 = vpop.f32.mrb[0].mxu0
        %3027 = vdwg.mxu0
        %v3029 = vsel %vm321, %v2862, 0
        %v3032 = vsel %vm321, %v2863, 0
        %3034 = vmatprep.subr.mxu0 0.0
        %3035 = vmatpush1.msra.mxu0 %v309
        %3036 = vmatprep.subr.mxu0 0.0
        %3037 = vmatpush1.msra.mxu0 %v310
        %3038 = vmatprep.subr.mxu0 0.0
        %3039 = vmatpush1.msra.mxu0 0.0
        %3040 = vmatprep.subr.mxu0 0.0
        %3041 = vmatpush1.msra.mxu0 0.0
        %3042 = vmatprep.subr.mxu0 0.0
        %3043 = vmatpush1.msra.mxu0 0.0
        %3044 = vmatprep.subr.mxu0 0.0
        %3045 = vmatpush1.msra.mxu0 0.0
        %3046 = vmatprep.subr.mxu0 0.0
        %3047 = vmatpush1.msra.mxu0 0.0
        %3048 = vmatprep.subr.mxu0 0.0
        %3049 = vmatpush1.msra.mxu0 0.0
        %3050 = vmatprep.subr.mxu0 0.0
        %3051 = vmatpush1.msra.mxu0 0.0
        %3052 = vmatprep.subr.mxu0 0.0
        %3053 = vmatpush1.msra.mxu0 0.0
        %3054 = vmatprep.subr.mxu0 0.0
        %3055 = vmatpush1.msra.mxu0 0.0
        %3056 = vmatprep.subr.mxu0 0.0
        %3057 = vmatpush1.msra.mxu0 0.0
        %3058 = vmatprep.subr.mxu0 0.0
        %3059 = vmatpush1.msra.mxu0 0.0
        %3060 = vmatprep.subr.mxu0 0.0
        %3061 = vmatpush1.msra.mxu0 0.0
        %3062 = vmatprep.subr.mxu0 0.0
        %3063 = vmatpush1.msra.mxu0 0.0
        %3064 = vmatprep.subr.mxu0 0.0
        %3065 = vmatpush1.msra.mxu0 0.0
        %3066 = vmatprep.subr.mxu0 0.0
        %3067 = vmatpush1.msra.mxu0 0.0
        %3068 = vmatprep.subr.mxu0 0.0
        %3069 = vmatpush1.msra.mxu0 0.0
        %3070 = vmatprep.subr.mxu0 0.0
        %3071 = vmatpush1.msra.mxu0 0.0
        %3072 = vmatprep.subr.mxu0 0.0
        %3073 = vmatpush1.msra.mxu0 0.0
        %3074 = vmatprep.subr.mxu0 0.0
        %3075 = vmatpush1.msra.mxu0 0.0
        %3076 = vmatprep.subr.mxu0 0.0
        %3077 = vmatpush1.msra.mxu0 0.0
        %3078 = vmatprep.subr.mxu0 0.0
        %3079 = vmatpush1.msra.mxu0 0.0
        %3080 = vmatprep.subr.mxu0 0.0
        %3081 = vmatpush1.msra.mxu0 0.0
        %3082 = vmatprep.subr.mxu0 0.0
        %3083 = vmatpush1.msra.mxu0 0.0
        %3084 = vmatprep.subr.mxu0 0.0
        %3085 = vmatpush1.msra.mxu0 0.0
        %3086 = vmatprep.subr.mxu0 0.0
        %3087 = vmatpush1.msra.mxu0 0.0
        %3088 = vmatprep.subr.mxu0 0.0
        %3089 = vmatpush1.msra.mxu0 0.0
        %3090 = vmatprep.subr.mxu0 0.0
        %3091 = vmatpush1.msra.mxu0 0.0
        %3092 = vmatprep.subr.mxu0 0.0
        %3093 = vmatpush1.msra.mxu0 0.0
        %3094 = vmatprep.subr.mxu0 0.0
        %3095 = vmatpush1.msra.mxu0 0.0
        %3096 = vmatprep.subr.mxu0 0.0
        %3097 = vmatpush1.msra.mxu0 0.0
        %3098 = vmatprep.mubr.f32.mxu0 0.0
        %3099 = vmatmul.mubr.f32.gmra.mrb[0].mxu0 %v3029
        %v3100 = vpop.f32.mrb[0].mxu0
        %v3101 = vadd.f32 0.0, %v3100
        %v3102 = vpop.f32.mrb[0].mxu0
        %3103 = vmatprep.mubr.f32.mxu0 0.0
        %3104 = vmatmul.mubr.f32.gmra.mrb[0].mxu0 %v3032
        %v3105 = vpop.f32.mrb[0].mxu0
        %v3106 = vadd.f32 0.0, %v3105
        %v3107 = vpop.f32.mrb[0].mxu0
        %3108 = vdwg.mxu0
        %v3110 = vsel %vm321, %v2864, 0
        %v3113 = vsel %vm321, %v2865, 0
        %3115 = vmatprep.subr.mxu0 0.0
        %3116 = vmatpush1.msra.mxu0 %v311
        %3117 = vmatprep.subr.mxu0 0.0
        %3118 = vmatpush1.msra.mxu0 %v312
        %3119 = vmatprep.subr.mxu0 0.0
        %3120 = vmatpush1.msra.mxu0 0.0
        %3121 = vmatprep.subr.mxu0 0.0
        %3122 = vmatpush1.msra.mxu0 0.0
        %3123 = vmatprep.subr.mxu0 0.0
        %3124 = vmatpush1.msra.mxu0 0.0
        %3125 = vmatprep.subr.mxu0 0.0
        %3126 = vmatpush1.msra.mxu0 0.0
        %3127 = vmatprep.subr.mxu0 0.0
        %3128 = vmatpush1.msra.mxu0 0.0
        %3129 = vmatprep.subr.mxu0 0.0
        %3130 = vmatpush1.msra.mxu0 0.0
        %3131 = vmatprep.subr.mxu0 0.0
        %3132 = vmatpush1.msra.mxu0 0.0
        %3133 = vmatprep.subr.mxu0 0.0
        %3134 = vmatpush1.msra.mxu0 0.0
        %3135 = vmatprep.subr.mxu0 0.0
        %3136 = vmatpush1.msra.mxu0 0.0
        %3137 = vmatprep.subr.mxu0 0.0
        %3138 = vmatpush1.msra.mxu0 0.0
        %3139 = vmatprep.subr.mxu0 0.0
        %3140 = vmatpush1.msra.mxu0 0.0
        %3141 = vmatprep.subr.mxu0 0.0
        %3142 = vmatpush1.msra.mxu0 0.0
        %3143 = vmatprep.subr.mxu0 0.0
        %3144 = vmatpush1.msra.mxu0 0.0
        %3145 = vmatprep.subr.mxu0 0.0
        %3146 = vmatpush1.msra.mxu0 0.0
        %3147 = vmatprep.subr.mxu0 0.0
        %3148 = vmatpush1.msra.mxu0 0.0
        %3149 = vmatprep.subr.mxu0 0.0
        %3150 = vmatpush1.msra.mxu0 0.0
        %3151 = vmatprep.subr.mxu0 0.0
        %3152 = vmatpush1.msra.mxu0 0.0
        %3153 = vmatprep.subr.mxu0 0.0
        %3154 = vmatpush1.msra.mxu0 0.0
        %3155 = vmatprep.subr.mxu0 0.0
        %3156 = vmatpush1.msra.mxu0 0.0
        %3157 = vmatprep.subr.mxu0 0.0
        %3158 = vmatpush1.msra.mxu0 0.0
        %3159 = vmatprep.subr.mxu0 0.0
        %3160 = vmatpush1.msra.mxu0 0.0
        %3161 = vmatprep.subr.mxu0 0.0
        %3162 = vmatpush1.msra.mxu0 0.0
        %3163 = vmatprep.subr.mxu0 0.0
        %3164 = vmatpush1.msra.mxu0 0.0
        %3165 = vmatprep.subr.mxu0 0.0
        %3166 = vmatpush1.msra.mxu0 0.0
        %3167 = vmatprep.subr.mxu0 0.0
        %3168 = vmatpush1.msra.mxu0 0.0
        %3169 = vmatprep.subr.mxu0 0.0
        %3170 = vmatpush1.msra.mxu0 0.0
        %3171 = vmatprep.subr.mxu0 0.0
        %3172 = vmatpush1.msra.mxu0 0.0
        %3173 = vmatprep.subr.mxu0 0.0
        %3174 = vmatpush1.msra.mxu0 0.0
        %3175 = vmatprep.subr.mxu0 0.0
        %3176 = vmatpush1.msra.mxu0 0.0
        %3177 = vmatprep.subr.mxu0 0.0
        %3178 = vmatpush1.msra.mxu0 0.0
        %3179 = vmatprep.mubr.f32.mxu0 0.0
        %3180 = vmatmul.mubr.f32.gmra.mrb[0].mxu0 %v3110
        %v3181 = vpop.f32.mrb[0].mxu0
        %v3182 = vadd.f32 0.0, %v3181
        %v3183 = vpop.f32.mrb[0].mxu0
        %3184 = vmatprep.mubr.f32.mxu0 0.0
        %3185 = vmatmul.mubr.f32.gmra.mrb[0].mxu0 %v3113
        %v3186 = vpop.f32.mrb[0].mxu0
        %v3187 = vadd.f32 0.0, %v3186
        %v3188 = vpop.f32.mrb[0].mxu0
        %3189 = vdwg.mxu0
        %3190 = vmatprep.subr.mxu0 0.0
        %3191 = vmatpush1.msra.mxu0 %v2939
        %3192 = vmatprep.subr.mxu0 0.0
        %3193 = vmatpush1.msra.mxu0 %v2944
        %3194 = vmatprep.subr.mxu0 0.0
        %3195 = vmatpush1.msra.mxu0 0.0
        %3196 = vmatprep.subr.mxu0 0.0
        %3197 = vmatpush1.msra.mxu0 0.0
        %3198 = vmatprep.subr.mxu0 0.0
        %3199 = vmatpush1.msra.mxu0 0.0
        %3200 = vmatprep.subr.mxu0 0.0
        %3201 = vmatpush1.msra.mxu0 0.0
        %3202 = vmatprep.subr.mxu0 0.0
        %3203 = vmatpush1.msra.mxu0 0.0
        %3204 = vmatprep.subr.mxu0 0.0
        %3205 = vmatpush1.msra.mxu0 0.0
        %3206 = vmatprep.subr.mxu0 0.0
        %3207 = vmatpush1.msra.mxu0 0.0
        %3208 = vmatprep.subr.mxu0 0.0
        %3209 = vmatpush1.msra.mxu0 0.0
        %3210 = vmatprep.subr.mxu0 0.0
        %3211 = vmatpush1.msra.mxu0 0.0
        %3212 = vmatprep.subr.mxu0 0.0
        %3213 = vmatpush1.msra.mxu0 0.0
        %3214 = vmatprep.subr.mxu0 0.0
        %3215 = vmatpush1.msra.mxu0 0.0
        %3216 = vmatprep.subr.mxu0 0.0
        %3217 = vmatpush1.msra.mxu0 0.0
        %3218 = vmatprep.subr.mxu0 0.0
        %3219 = vmatpush1.msra.mxu0 0.0
        %3220 = vmatprep.subr.mxu0 0.0
        %3221 = vmatpush1.msra.mxu0 0.0
        %3222 = vmatprep.subr.mxu0 0.0
        %3223 = vmatpush1.msra.mxu0 0.0
        %3224 = vmatprep.subr.mxu0 0.0
        %3225 = vmatpush1.msra.mxu0 0.0
        %3226 = vmatprep.subr.mxu0 0.0
        %3227 = vmatpush1.msra.mxu0 0.0
        %3228 = vmatprep.subr.mxu0 0.0
        %3229 = vmatpush1.msra.mxu0 0.0
        %3230 = vmatprep.subr.mxu0 0.0
        %3231 = vmatpush1.msra.mxu0 0.0
        %3232 = vmatprep.subr.mxu0 0.0
        %3233 = vmatpush1.msra.mxu0 0.0
        %3234 = vmatprep.subr.mxu0 0.0
        %3235 = vmatpush1.msra.mxu0 0.0
        %3236 = vmatprep.subr.mxu0 0.0
        %3237 = vmatpush1.msra.mxu0 0.0
        %3238 = vmatprep.subr.mxu0 0.0
        %3239 = vmatpush1.msra.mxu0 0.0
        %3240 = vmatprep.subr.mxu0 0.0
        %3241 = vmatpush1.msra.mxu0 0.0
        %3242 = vmatprep.subr.mxu0 0.0
        %3243 = vmatpush1.msra.mxu0 0.0
        %3244 = vmatprep.subr.mxu0 0.0
        %3245 = vmatpush1.msra.mxu0 0.0
        %3246 = vmatprep.subr.mxu0 0.0
        %3247 = vmatpush1.msra.mxu0 0.0
        %3248 = vmatprep.subr.mxu0 0.0
        %3249 = vmatpush1.msra.mxu0 0.0
        %3250 = vmatprep.subr.mxu0 0.0
        %3251 = vmatpush1.msra.mxu0 0.0
        %3252 = vmatprep.subr.mxu0 0.0
        %3253 = vmatpush1.msra.mxu0 0.0
        %3254 = vmatprep.mubr.f32.mxu0 0.0
        %3255 = vmatmul.mubr.f32.gmra.mrb[0].mxu0 %v647
        %v3256 = vpop.f32.mrb[0].mxu0
        %v3257 = vadd.f32 0.0, %v3256
        %v3258 = vpop.f32.mrb[0].mxu0
        %3259 = vmatprep.mubr.f32.mxu0 0.0
        %3260 = vmatmul.mubr.f32.gmra.mrb[0].mxu0 %v650
        %v3261 = vpop.f32.mrb[0].mxu0
        %v3262 = vadd.f32 0.0, %v3261
        %v3263 = vpop.f32.mrb[0].mxu0
        %3264 = vdwg.mxu0
        %3265 = vmatprep.subr.mxu0 0.0
        %3266 = vmatpush1.msra.mxu0 %v3020
        %3267 = vmatprep.subr.mxu0 0.0
        %3268 = vmatpush1.msra.mxu0 %v3025
        %3269 = vmatprep.subr.mxu0 0.0
        %3270 = vmatpush1.msra.mxu0 0.0
        %3271 = vmatprep.subr.mxu0 0.0
        %3272 = vmatpush1.msra.mxu0 0.0
        %3273 = vmatprep.subr.mxu0 0.0
        %3274 = vmatpush1.msra.mxu0 0.0
        %3275 = vmatprep.subr.mxu0 0.0
        %3276 = vmatpush1.msra.mxu0 0.0
        %3277 = vmatprep.subr.mxu0 0.0
        %3278 = vmatpush1.msra.mxu0 0.0
        %3279 = vmatprep.subr.mxu0 0.0
        %3280 = vmatpush1.msra.mxu0 0.0
        %3281 = vmatprep.subr.mxu0 0.0
        %3282 = vmatpush1.msra.mxu0 0.0
        %3283 = vmatprep.subr.mxu0 0.0
        %3284 = vmatpush1.msra.mxu0 0.0
        %3285 = vmatprep.subr.mxu0 0.0
        %3286 = vmatpush1.msra.mxu0 0.0
        %3287 = vmatprep.subr.mxu0 0.0
        %3288 = vmatpush1.msra.mxu0 0.0
        %3289 = vmatprep.subr.mxu0 0.0
        %3290 = vmatpush1.msra.mxu0 0.0
        %3291 = vmatprep.subr.mxu0 0.0
        %3292 = vmatpush1.msra.mxu0 0.0
        %3293 = vmatprep.subr.mxu0 0.0
        %3294 = vmatpush1.msra.mxu0 0.0
        %3295 = vmatprep.subr.mxu0 0.0
        %3296 = vmatpush1.msra.mxu0 0.0
        %3297 = vmatprep.subr.mxu0 0.0
        %3298 = vmatpush1.msra.mxu0 0.0
        %3299 = vmatprep.subr.mxu0 0.0
        %3300 = vmatpush1.msra.mxu0 0.0
        %3301 = vmatprep.subr.mxu0 0.0
        %3302 = vmatpush1.msra.mxu0 0.0
        %3303 = vmatprep.subr.mxu0 0.0
        %3304 = vmatpush1.msra.mxu0 0.0
        %3305 = vmatprep.subr.mxu0 0.0
        %3306 = vmatpush1.msra.mxu0 0.0
        %3307 = vmatprep.subr.mxu0 0.0
        %3308 = vmatpush1.msra.mxu0 0.0
        %3309 = vmatprep.subr.mxu0 0.0
        %3310 = vmatpush1.msra.mxu0 0.0
        %3311 = vmatprep.subr.mxu0 0.0
        %3312 = vmatpush1.msra.mxu0 0.0
        %3313 = vmatprep.subr.mxu0 0.0
        %3314 = vmatpush1.msra.mxu0 0.0
        %3315 = vmatprep.subr.mxu0 0.0
        %3316 = vmatpush1.msra.mxu0 0.0
        %3317 = vmatprep.subr.mxu0 0.0
        %3318 = vmatpush1.msra.mxu0 0.0
        %3319 = vmatprep.subr.mxu0 0.0
        %3320 = vmatpush1.msra.mxu0 0.0
        %3321 = vmatprep.subr.mxu0 0.0
        %3322 = vmatpush1.msra.mxu0 0.0
        %3323 = vmatprep.subr.mxu0 0.0
        %3324 = vmatpush1.msra.mxu0 0.0
        %3325 = vmatprep.subr.mxu0 0.0
        %3326 = vmatpush1.msra.mxu0 0.0
        %3327 = vmatprep.subr.mxu0 0.0
        %3328 = vmatpush1.msra.mxu0 0.0
        %3329 = vmatprep.mubr.f32.mxu0 0.0
        %3330 = vmatmul.mubr.f32.gmra.mrb[0].mxu0 %v728
        %v3331 = vpop.f32.mrb[0].mxu0
        %v3332 = vadd.f32 0.0, %v3331
        %v3333 = vpop.f32.mrb[0].mxu0
        %3334 = vmatprep.mubr.f32.mxu0 0.0
        %3335 = vmatmul.mubr.f32.gmra.mrb[0].mxu0 %v731
        %v3336 = vpop.f32.mrb[0].mxu0
        %v3337 = vadd.f32 0.0, %v3336
        %v3338 = vpop.f32.mrb[0].mxu0
        %3339 = vdwg.mxu0
        %3340 = vmatprep.subr.mxu0 0.0
        %3341 = vmatpush1.msra.mxu0 %v3101
        %3342 = vmatprep.subr.mxu0 0.0
        %3343 = vmatpush1.msra.mxu0 %v3106
        %3344 = vmatprep.subr.mxu0 0.0
        %3345 = vmatpush1.msra.mxu0 0.0
        %3346 = vmatprep.subr.mxu0 0.0
        %3347 = vmatpush1.msra.mxu0 0.0
        %3348 = vmatprep.subr.mxu0 0.0
        %3349 = vmatpush1.msra.mxu0 0.0
        %3350 = vmatprep.subr.mxu0 0.0
        %3351 = vmatpush1.msra.mxu0 0.0
        %3352 = vmatprep.subr.mxu0 0.0
        %3353 = vmatpush1.msra.mxu0 0.0
        %3354 = vmatprep.subr.mxu0 0.0
        %3355 = vmatpush1.msra.mxu0 0.0
        %3356 = vmatprep.subr.mxu0 0.0
        %3357 = vmatpush1.msra.mxu0 0.0
        %3358 = vmatprep.subr.mxu0 0.0
        %3359 = vmatpush1.msra.mxu0 0.0
        %3360 = vmatprep.subr.mxu0 0.0
        %3361 = vmatpush1.msra.mxu0 0.0
        %3362 = vmatprep.subr.mxu0 0.0
        %3363 = vmatpush1.msra.mxu0 0.0
        %3364 = vmatprep.subr.mxu0 0.0
        %3365 = vmatpush1.msra.mxu0 0.0
        %3366 = vmatprep.subr.mxu0 0.0
        %3367 = vmatpush1.msra.mxu0 0.0
        %3368 = vmatprep.subr.mxu0 0.0
        %3369 = vmatpush1.msra.mxu0 0.0
        %3370 = vmatprep.subr.mxu0 0.0
        %3371 = vmatpush1.msra.mxu0 0.0
        %3372 = vmatprep.subr.mxu0 0.0
        %3373 = vmatpush1.msra.mxu0 0.0
        %3374 = vmatprep.subr.mxu0 0.0
        %3375 = vmatpush1.msra.mxu0 0.0
        %3376 = vmatprep.subr.mxu0 0.0
        %3377 = vmatpush1.msra.mxu0 0.0
        %3378 = vmatprep.subr.mxu0 0.0
        %3379 = vmatpush1.msra.mxu0 0.0
        %3380 = vmatprep.subr.mxu0 0.0
        %3381 = vmatpush1.msra.mxu0 0.0
        %3382 = vmatprep.subr.mxu0 0.0
        %3383 = vmatpush1.msra.mxu0 0.0
        %3384 = vmatprep.subr.mxu0 0.0
        %3385 = vmatpush1.msra.mxu0 0.0
        %3386 = vmatprep.subr.mxu0 0.0
        %3387 = vmatpush1.msra.mxu0 0.0
        %3388 = vmatprep.subr.mxu0 0.0
        %3389 = vmatpush1.msra.mxu0 0.0
        %3390 = vmatprep.subr.mxu0 0.0
        %3391 = vmatpush1.msra.mxu0 0.0
        %3392 = vmatprep.subr.mxu0 0.0
        %3393 = vmatpush1.msra.mxu0 0.0
        %3394 = vmatprep.subr.mxu0 0.0
        %3395 = vmatpush1.msra.mxu0 0.0
        %3396 = vmatprep.subr.mxu0 0.0
        %3397 = vmatpush1.msra.mxu0 0.0
        %3398 = vmatprep.subr.mxu0 0.0
        %3399 = vmatpush1.msra.mxu0 0.0
        %3400 = vmatprep.subr.mxu0 0.0
        %3401 = vmatpush1.msra.mxu0 0.0
        %3402 = vmatprep.subr.mxu0 0.0
        %3403 = vmatpush1.msra.mxu0 0.0
        %3404 = vmatprep.mubr.f32.mxu0 0.0
        %3405 = vmatmul.mubr.f32.gmra.mrb[0].mxu0 %v809
        %v3406 = vpop.f32.mrb[0].mxu0
        %v3407 = vadd.f32 0.0, %v3406
        %v3408 = vpop.f32.mrb[0].mxu0
        %3409 = vmatprep.mubr.f32.mxu0 0.0
        %3410 = vmatmul.mubr.f32.gmra.mrb[0].mxu0 %v812
        %v3411 = vpop.f32.mrb[0].mxu0
        %v3412 = vadd.f32 0.0, %v3411
        %v3413 = vpop.f32.mrb[0].mxu0
        %3414 = vdwg.mxu0
        %3415 = vmatprep.subr.mxu0 0.0
        %3416 = vmatpush1.msra.mxu0 %v3182
        %3417 = vmatprep.subr.mxu0 0.0
        %3418 = vmatpush1.msra.mxu0 %v3187
        %3419 = vmatprep.subr.mxu0 0.0
        %3420 = vmatpush1.msra.mxu0 0.0
        %3421 = vmatprep.subr.mxu0 0.0
        %3422 = vmatpush1.msra.mxu0 0.0
        %3423 = vmatprep.subr.mxu0 0.0
        %3424 = vmatpush1.msra.mxu0 0.0
        %3425 = vmatprep.subr.mxu0 0.0
        %3426 = vmatpush1.msra.mxu0 0.0
        %3427 = vmatprep.subr.mxu0 0.0
        %3428 = vmatpush1.msra.mxu0 0.0
        %3429 = vmatprep.subr.mxu0 0.0
        %3430 = vmatpush1.msra.mxu0 0.0
        %3431 = vmatprep.subr.mxu0 0.0
        %3432 = vmatpush1.msra.mxu0 0.0
        %3433 = vmatprep.subr.mxu0 0.0
        %3434 = vmatpush1.msra.mxu0 0.0
        %3435 = vmatprep.subr.mxu0 0.0
        %3436 = vmatpush1.msra.mxu0 0.0
        %3437 = vmatprep.subr.mxu0 0.0
        %3438 = vmatpush1.msra.mxu0 0.0
        %3439 = vmatprep.subr.mxu0 0.0
        %3440 = vmatpush1.msra.mxu0 0.0
        %3441 = vmatprep.subr.mxu0 0.0
        %3442 = vmatpush1.msra.mxu0 0.0
        %3443 = vmatprep.subr.mxu0 0.0
        %3444 = vmatpush1.msra.mxu0 0.0
        %3445 = vmatprep.subr.mxu0 0.0
        %3446 = vmatpush1.msra.mxu0 0.0
        %3447 = vmatprep.subr.mxu0 0.0
        %3448 = vmatpush1.msra.mxu0 0.0
        %3449 = vmatprep.subr.mxu0 0.0
        %3450 = vmatpush1.msra.mxu0 0.0
        %3451 = vmatprep.subr.mxu0 0.0
        %3452 = vmatpush1.msra.mxu0 0.0
        %3453 = vmatprep.subr.mxu0 0.0
        %3454 = vmatpush1.msra.mxu0 0.0
        %3455 = vmatprep.subr.mxu0 0.0
        %3456 = vmatpush1.msra.mxu0 0.0
        %3457 = vmatprep.subr.mxu0 0.0
        %3458 = vmatpush1.msra.mxu0 0.0
        %3459 = vmatprep.subr.mxu0 0.0
        %3460 = vmatpush1.msra.mxu0 0.0
        %3461 = vmatprep.subr.mxu0 0.0
        %3462 = vmatpush1.msra.mxu0 0.0
        %3463 = vmatprep.subr.mxu0 0.0
        %3464 = vmatpush1.msra.mxu0 0.0
        %3465 = vmatprep.subr.mxu0 0.0
        %3466 = vmatpush1.msra.mxu0 0.0
        %3467 = vmatprep.subr.mxu0 0.0
        %3468 = vmatpush1.msra.mxu0 0.0
        %3469 = vmatprep.subr.mxu0 0.0
        %3470 = vmatpush1.msra.mxu0 0.0
        %3471 = vmatprep.subr.mxu0 0.0
        %3472 = vmatpush1.msra.mxu0 0.0
        %3473 = vmatprep.subr.mxu0 0.0
        %3474 = vmatpush1.msra.mxu0 0.0
        %3475 = vmatprep.subr.mxu0 0.0
        %3476 = vmatpush1.msra.mxu0 0.0
        %3477 = vmatprep.subr.mxu0 0.0
        %3478 = vmatpush1.msra.mxu0 0.0
        %3479 = vmatprep.mubr.f32.mxu0 0.0
        %3480 = vmatmul.mubr.f32.gmra.mrb[0].mxu0 %v890
        %v3481 = vpop.f32.mrb[0].mxu0
        %v3482 = vadd.f32 0.0, %v3481
        %v3483 = vpop.f32.mrb[0].mxu0
        %3484 = vmatprep.mubr.f32.mxu0 0.0
        %3485 = vmatmul.mubr.f32.gmra.mrb[0].mxu0 %v893
        %v3486 = vpop.f32.mrb[0].mxu0
        %v3487 = vadd.f32 0.0, %v3486
        %v3488 = vpop.f32.mrb[0].mxu0
        %3489 = vdwg.mxu0
        %v3490 = vmul.f32 %v719, %v719
        %v3491 = vmul.f32 %v724, %v724
        %v3492 = vmul.f32 %v800, %v800
        %v3493 = vmul.f32 %v805, %v805
        %v3494 = vmul.f32 %v881, %v881
        %v3495 = vmul.f32 %v886, %v886
        %v3496 = vmul.f32 %v962, %v962
        %v3497 = vmul.f32 %v967, %v967
        %v3498 = vmul.f32 %v1361, %v1361
        %v3499 = vmul.f32 %v1366, %v1366
        %v3500 = vmul.f32 %v1436, %v1436
        %v3501 = vmul.f32 %v1441, %v1441
        %v3502 = vmul.f32 %v1511, %v1511
        %v3503 = vmul.f32 %v1516, %v1516
        %v3504 = vmul.f32 %v1586, %v1586
        %v3505 = vmul.f32 %v1591, %v1591
        %v3506 = vmul.f32 %v719, %v1361
        %v3507 = vmul.f32 %v724, %v1366
        %v3508 = vmul.f32 %v800, %v1436
        %v3509 = vmul.f32 %v805, %v1441
        %v3510 = vmul.f32 %v881, %v1511
        %v3511 = vmul.f32 %v886, %v1516
        %v3512 = vmul.f32 %v962, %v1586
        %v3513 = vmul.f32 %v967, %v1591
        %v3514 = vsub.f32 %v1993, %v3490
        %v3515 = vsub.f32 %v1998, %v3491
        %v3516 = vsub.f32 %v2068, %v3492
        %v3517 = vsub.f32 %v2073, %v3493
        %v3518 = vsub.f32 %v2143, %v3494
        %v3519 = vsub.f32 %v2148, %v3495
        %v3520 = vsub.f32 %v2218, %v3496
        %v3521 = vsub.f32 %v2223, %v3497
        %v3522 = vsub.f32 %v2625, %v3498
        %v3523 = vsub.f32 %v2630, %v3499
        %v3524 = vsub.f32 %v2700, %v3500
        %v3525 = vsub.f32 %v2705, %v3501
        %v3526 = vsub.f32 %v2775, %v3502
        %v3527 = vsub.f32 %v2780, %v3503
        %v3528 = vsub.f32 %v2850, %v3504
        %v3529 = vsub.f32 %v2855, %v3505
        %v3530 = vsub.f32 %v3257, %v3506
        %v3531 = vsub.f32 %v3262, %v3507
        %v3532 = vsub.f32 %v3332, %v3508
        %v3533 = vsub.f32 %v3337, %v3509
        %v3534 = vsub.f32 %v3407, %v3510
        %v3535 = vsub.f32 %v3412, %v3511
        %v3536 = vsub.f32 %v3482, %v3512
        %v3537 = vsub.f32 %v3487, %v3513
        %v3538 = vmul.f32 %v3506, 2.0
        %v3539 = vmul.f32 %v3507, 2.0
        %v3540 = vmul.f32 %v3508, 2.0
        %v3541 = vmul.f32 %v3509, 2.0
        %v3542 = vmul.f32 %v3510, 2.0
        %v3543 = vmul.f32 %v3511, 2.0
        %v3544 = vmul.f32 %v3512, 2.0
        %v3545 = vmul.f32 %v3513, 2.0
        %v3546 = vadd.f32 %v3538, 0.0001
        %v3547 = vadd.f32 %v3539, 0.0001
        %v3548 = vadd.f32 %v3540, 0.0001
        %v3549 = vadd.f32 %v3541, 0.0001
        %v3550 = vadd.f32 %v3542, 0.0001
        %v3551 = vadd.f32 %v3543, 0.0001
        %v3552 = vadd.f32 %v3544, 0.0001
        %v3553 = vadd.f32 %v3545, 0.0001
        %v3554 = vmul.f32 %v3530, 2.0
        %v3555 = vmul.f32 %v3531, 2.0
        %v3556 = vmul.f32 %v3532, 2.0
        %v3557 = vmul.f32 %v3533, 2.0
        %v3558 = vmul.f32 %v3534, 2.0
        %v3559 = vmul.f32 %v3535, 2.0
        %v3560 = vmul.f32 %v3536, 2.0
        %v3561 = vmul.f32 %v3537, 2.0
        %v3562 = vadd.f32 %v3554, 0.0009
        %v3563 = vadd.f32 %v3555, 0.0009
        %v3564 = vadd.f32 %v3556, 0.0009
        %v3565 = vadd.f32 %v3557, 0.0009
        %v3566 = vadd.f32 %v3558, 0.0009
        %v3567 = vadd.f32 %v3559, 0.0009
        %v3568 = vadd.f32 %v3560, 0.0009
        %v3569 = vadd.f32 %v3561, 0.0009
        %v3570 = vmul.f32 %v3546, %v3562
        %v3571 = vmul.f32 %v3547, %v3563
        %v3572 = vmul.f32 %v3548, %v3564
        %v3573 = vmul.f32 %v3549, %v3565
        %v3574 = vmul.f32 %v3550, %v3566
        %v3575 = vmul.f32 %v3551, %v3567
        %v3576 = vmul.f32 %v3552, %v3568
        %v3577 = vmul.f32 %v3553, %v3569
        %v3578 = vadd.f32 %v3490, %v3498
        %v3579 = vadd.f32 %v3491, %v3499
        %v3580 = vadd.f32 %v3492, %v3500
        %v3581 = vadd.f32 %v3493, %v3501
        %v3582 = vadd.f32 %v3494, %v3502
        %v3583 = vadd.f32 %v3495, %v3503
        %v3584 = vadd.f32 %v3496, %v3504
        %v3585 = vadd.f32 %v3497, %v3505
        %v3586 = vadd.f32 %v3578, 0.0001
        %v3587 = vadd.f32 %v3579, 0.0001
        %v3588 = vadd.f32 %v3580, 0.0001
        %v3589 = vadd.f32 %v3581, 0.0001
        %v3590 = vadd.f32 %v3582, 0.0001
        %v3591 = vadd.f32 %v3583, 0.0001
        %v3592 = vadd.f32 %v3584, 0.0001
        %v3593 = vadd.f32 %v3585, 0.0001
        %v3594 = vadd.f32 %v3514, %v3522
        %v3595 = vadd.f32 %v3515, %v3523
        %v3596 = vadd.f32 %v3516, %v3524
        %v3597 = vadd.f32 %v3517, %v3525
        %v3598 = vadd.f32 %v3518, %v3526
        %v3599 = vadd.f32 %v3519, %v3527
        %v3600 = vadd.f32 %v3520, %v3528
        %v3601 = vadd.f32 %v3521, %v3529
        %v3602 = vadd.f32 %v3594, 0.0009
        %v3603 = vadd.f32 %v3595, 0.0009
        %v3604 = vadd.f32 %v3596, 0.0009
        %v3605 = vadd.f32 %v3597, 0.0009
        %v3606 = vadd.f32 %v3598, 0.0009
        %v3607 = vadd.f32 %v3599, 0.0009
        %v3608 = vadd.f32 %v3600, 0.0009
        %v3609 = vadd.f32 %v3601, 0.0009
        %v3610 = vmul.f32 %v3586, %v3602
        %v3611 = vmul.f32 %v3587, %v3603
        %v3612 = vmul.f32 %v3588, %v3604
        %v3613 = vmul.f32 %v3589, %v3605
        %v3614 = vmul.f32 %v3590, %v3606
        %v3615 = vmul.f32 %v3591, %v3607
        %v3616 = vmul.f32 %v3592, %v3608
        %v3617 = vmul.f32 %v3593, %v3609
        %v3618 = vrcp.pop %v3610
        %v3619 = vmul.f32 %v3570, %v3618
        %v3620 = vrcp.pop %v3611
        %v3621 = vmul.f32 %v3571, %v3620
        %v3622 = vrcp.pop %v3612
        %v3623 = vmul.f32 %v3572, %v3622
        %v3624 = vrcp.pop %v3613
        %v3625 = vmul.f32 %v3573, %v3624
        %v3626 = vrcp.pop %v3614
        %v3627 = vmul.f32 %v3574, %v3626
        %v3628 = vrcp.pop %v3615
        %v3629 = vmul.f32 %v3575, %v3628
        %v3630 = vrcp.pop %v3616
        %v3631 = vmul.f32 %v3576, %v3630
        %v3632 = vrcp.pop %v3617
        %v3633 = vmul.f32 %v3577, %v3632
        %v3634 = vsel %vm321, %v3619, 0.0
        %v3635 = vsel %vm321, %v3621, 0.0
        %v3636 = vadd.f32 %v3634, %v3635
        %v3637 = vrot.slane %v3636, 4
        %v3638 = vadd.f32 %v3636, %v3637
        %v3639 = vrot.slane %v3638, 2
        %v3640 = vadd.f32 %v3638, %v3639
        %v3641 = vrot.slane %v3640, 1
        %v3642 = vadd.f32 %v3640, %v3641
        %v3643 = vsel %vm321, %v3623, 0.0
        %v3644 = vsel %vm321, %v3625, 0.0
        %v3645 = vadd.f32 %v3643, %v3644
        %v3646 = vrot.slane %v3645, 4
        %v3647 = vadd.f32 %v3645, %v3646
        %v3648 = vrot.slane %v3647, 2
        %v3649 = vadd.f32 %v3647, %v3648
        %v3650 = vrot.slane %v3649, 1
        %v3651 = vadd.f32 %v3649, %v3650
        %v3652 = vsel %vm321, %v3627, 0.0
        %v3653 = vsel %vm321, %v3629, 0.0
        %v3654 = vadd.f32 %v3652, %v3653
        %v3655 = vrot.slane %v3654, 4
        %v3656 = vadd.f32 %v3654, %v3655
        %v3657 = vrot.slane %v3656, 2
        %v3658 = vadd.f32 %v3656, %v3657
        %v3659 = vrot.slane %v3658, 1
        %v3660 = vadd.f32 %v3658, %v3659
        %v3661 = vsel %vm321, %v3631, 0.0
        %v3662 = vsel %vm321, %v3633, 0.0
        %v3663 = vadd.f32 %v3661, %v3662
        %v3664 = vrot.slane %v3663, 4
        %v3665 = vadd.f32 %v3663, %v3664
        %v3666 = vrot.slane %v3665, 2
        %v3667 = vadd.f32 %v3665, %v3666
        %v3668 = vrot.slane %v3667, 1
        %v3669 = vadd.f32 %v3667, %v3668
        %vm3674 = vcmask 1041409
        %v3675 = vsel %vm3674, %v3651, %v3642
        %vm3676 = vcmask 1042434
        %v3677 = vsel %vm3676, %v3660, %v3675
        %vm3678 = vcmask 1043459
        %v3679 = vsel %vm3678, %v3669, %v3677
        %vm3681 = vcmask 125952
        %3682 = vst.msk [vmem:[%s286] sm:$0xf] %vm3681, %v3679
        %s3683 = sand.u32 %s127, 1
        %s3684 = scalar_lea.sflag [#allocation4], %s3683
        %s3685 = sand.u32 %s127, 1
        %s3686 = smul.addr %s3685, 4
        %s3687 = scalar_lea.vmem [#allocation10], %s3686
        // Predicated region
        $region53: #{tpu_custom_call.1} parent=35 // pred_check
          %p3688 = pneg %p137
        $region54: #{tpu_custom_call.1} parent=35 // pred_check_branch
          %3690 = sbr.rel (%p3688) target = $region56
        $region55: #{tpu_custom_call.1} parent=35 // pred_region
          %s3692 = ssub.s32 64, 64
          %3693 = vsyncadd %s3684, %s3692
          %s3694 = smul.addr %s25, 64
          %s3695 = scalar_lea.hbm %s4, %s3694
          %s3697 = sshll.u32 %s3687, 4
          %s3698 = int_to_ptr.vmem [resolvable:$true] %s3697
          %3700 = dma.vmem_to_hbm [thread:$0]  %s3698, 64, %s3695, %s3684
        $region56: #{tpu_custom_call.1} parent=35 // pred_fallthru
          _
      $region36: #{tpu_custom_call.1} parent=5 // pred_fallthru
        _
      %p3701 = scmp.le.s32.totalorder 2, %s20
      // Predicated region
      $region57: #{tpu_custom_call.1} parent=5 // pred_check
        %p3702 = pneg %p3701
      $region58: #{tpu_custom_call.1} parent=5 // pred_check_branch
        %3704 = sbr.rel (%p3702) target = $region60
      $region59: #{tpu_custom_call.1} parent=5 // pred_region
        %s3705 = ssub.s32 %s20, 2
        // Predicated region
        $region61: #{tpu_custom_call.1} parent=59 // pred_check
          %p3706 = pneg %p143
        $region62: #{tpu_custom_call.1} parent=59 // pred_check_branch
          %3708 = sbr.rel (%p3706) target = $region64
        $region63: #{tpu_custom_call.1} parent=59 // pred_region
          %s3709 = sand.u32 %s128, 1
          %s3710 = scalar_lea.sflag [#allocation4], %s3709
          %s3711 = sand.u32 %s128, 1
          %s3712 = smul.addr %s3711, 4
          %s3713 = scalar_lea.vmem [#allocation10], %s3712
          %3714 = dma.done %s3710, 64
        $region64: #{tpu_custom_call.1} parent=59 // pred_fallthru
          _
      $region60: #{tpu_custom_call.1} parent=5 // pred_fallthru
        _
    $region6: #{tpu_custom_call.1} parent=1 // loop_footer
      %s24 = sadd.s32 1, %s20
    $region7: #{tpu_custom_call.1} parent=1 // loop_footer_branch
      %19 = sbr.rel target = $region3
    $region8: #{tpu_custom_call.1} parent=1 // loop_exit
      _
    %3715 = vsyncpa [#allocation3], 1
    %s3716 = scalar_lea.sflag [#allocation3], 1
    %3717 = vsyncpa %s3716, 1
    %3718 = vsyncpa [#allocation6], 1
    %s3719 = scalar_lea.sflag [#allocation6], 1
    %3720 = vsyncpa %s3719, 1
    %3721 = vsyncpa [#allocation9], 1
    %3722 = vsyncpa [#allocation4], 1
    %s3723 = scalar_lea.sflag [#allocation4], 1
    %3724 = vsyncpa %s3723, 1

</llo_original>
